<compile_context>
chip_gen: v7x
topology: tpu7x:2x2x1
jax: 0.10.0
libtpu: 0.0.40
codegen_flags: <defaults>
</compile_context>

<pallas_src>
import functools

import jax
import jax.numpy as jnp
import numpy as np
from jax.experimental import pallas as pl
from jax.experimental.pallas import tpu as pltpu


# ----------------------------------------------------------------------------
# Pallas kernel: both pivot convs + bias + add for one correlation "image".
# ----------------------------------------------------------------------------
def _center_pivot_kernel(x_ref, m1_ref, m2_ref, b_ref, o_ref):
    # x_ref : (1, Cin, HWa, HWb)    one image, (hb,wb) flattened on the lane axis
    # m1_ref: (Cout, HWa, Cin*HWa)  conv1 as a matrix acting on the (ha,wa) axis
    # m2_ref: (Cout, Cin, HWb, HWb) conv2 as matrices acting on the (hb,wb) axis
    # b_ref : (Cout, 1, HWb)        b1 + b2, broadcast over rows
    # o_ref : (1, Cout, HWa, HWb)
    outch, hwa, _ = m1_ref.shape
    inch = m2_ref.shape[1]
    hwb = m2_ref.shape[2]

    X = x_ref[0]                            # (Cin, HWa, HWb)
    Xf = X.reshape(inch * hwa, hwb)         # free reshape (minor/lane dim kept)

    for co in range(outch):
        # branch 1: conv over (ha,wa)  ==  M1[co] @ X, one matmul with K=Cin*HWa.
        acc = jnp.dot(m1_ref[co], Xf, preferred_element_type=jnp.float32)
        acc = acc + b_ref[co]               # (1, HWb) row-broadcast of b1+b2
        # branch 2: conv over (hb,wb)  ==  sum_ci X[ci] @ M2[co,ci].
        for ci in range(inch):
            acc = acc + jnp.dot(X[ci], m2_ref[co, ci],
                                preferred_element_type=jnp.float32)
        o_ref[0, co] = acc.astype(o_ref.dtype)


# ----------------------------------------------------------------------------
# Dense matrix of a stride-1 "same"-size 2-D cross-correlation on an HxW grid.
# ----------------------------------------------------------------------------
def _conv_as_matrix(w, H, W, ph, pw):
    """w: (KH, KW, Cin, Cout) -> M: (Cout, H*W (dst), Cin, H*W (src)) with
    M[co, dst, ci, src] = w[dy, dx, ci, co] where dy = i_src - i_dst + ph,
    dx = j_src - j_dst + pw (zero outside the kernel support / padding)."""
    KH, KW, _, _ = w.shape
    dy = jnp.arange(H)[None, :] - jnp.arange(H)[:, None] + ph     # (dst, src)
    dx = jnp.arange(W)[None, :] - jnp.arange(W)[:, None] + pw
    vy = (dy >= 0) & (dy < KH)
    vx = (dx >= 0) & (dx < KW)
    dyc = jnp.clip(dy, 0, KH - 1)
    dxc = jnp.clip(dx, 0, KW - 1)
    # gather weights -> (Hd, Hs, Wd, Ws, Cin, Cout)
    wg = w[dyc[:, :, None, None], dxc[None, None, :, :]]
    mask = (vy[:, :, None, None] & vx[None, None, :, :])[..., None, None]
    m = jnp.where(mask, wg, 0.0)
    # -> (Cout, Hd, Wd, Cin, Hs, Ws) -> (Cout, H*W, Cin, H*W)
    m = jnp.transpose(m, (5, 0, 2, 4, 1, 3))
    return m.reshape(w.shape[3], H * W, w.shape[2], H * W)


# ----------------------------------------------------------------------------
# CenterPivotConv4d forward (stride=(1,1,1,1), 'same'-style padding).
# ----------------------------------------------------------------------------
@functools.partial(jax.jit, static_argnames=("padding",))
def center_pivot_conv4d(x, w1, b1, w2, b2, padding):
    # layout: x keeps the PyTorch layout (bsz, inch, ha, wa, hb, wb).
    # TODO(synk): stride34 > 1 prune() path and the padding==(0,0) sum/squeeze
    #             branch are not implemented (stride fixed to (1,1,1,1)).
    bsz, inch, ha, wa, hb, wb = x.shape
    kh1, kw1, _, outch = w1.shape
    kh2, kw2, _, _ = w2.shape
    p0, p1, p2, p3 = padding
    # 'same'-size config is required for the fused add (HSNet/MMN default).
    assert ha + 2 * p0 - kh1 + 1 == ha and wa + 2 * p1 - kw1 + 1 == wa
    assert hb + 2 * p2 - kh2 + 1 == hb and wb + 2 * p3 - kw2 + 1 == wb
    hwa, hwb = ha * wa, hb * wb

    # Weight-only preprocessing (tiny): conv1/conv2 as dense matrices.
    m1 = _conv_as_matrix(w1, ha, wa, p0, p1).reshape(outch, hwa, inch * hwa)
    m2 = jnp.transpose(_conv_as_matrix(w2, hb, wb, p2, p3),
                       (0, 2, 3, 1))                      # (Cout, Cin, src, dst)
    bias = jnp.broadcast_to((b1 + b2).astype(jnp.float32)[:, None, None],
                            (outch, 1, hwb))

    # Free reshape of the activation -- no transpose, no padding pass in HBM.
    xf = x.reshape(bsz, inch, hwa, hwb)

    out = pl.pallas_call(
        _center_pivot_kernel,
        out_shape=jax.ShapeDtypeStruct((bsz, outch, hwa, hwb), x.dtype),
        grid=(bsz,),
        in_specs=[
            pl.BlockSpec((1, inch, hwa, hwb), lambda b: (b, 0, 0, 0)),
            pl.BlockSpec((outch, hwa, inch * hwa), lambda b: (0, 0, 0)),
            pl.BlockSpec((outch, inch, hwb, hwb), lambda b: (0, 0, 0, 0)),
            pl.BlockSpec((outch, 1, hwb), lambda b: (0, 0, 0)),
        ],
        out_specs=pl.BlockSpec((1, outch, hwa, hwb), lambda b: (b, 0, 0, 0)),
        compiler_params=pltpu.CompilerParams(
            dimension_semantics=("parallel",)),
    )(xf, m1, m2, bias)

    return out.reshape(bsz, outch, ha, wa, hb, wb)


# ----------------------------------------------------------------------------
# Pure-JAX reference (lax.conv) for correctness checking.
# ----------------------------------------------------------------------------
def _ref_conv2d(x, w, b, padding):
    out = jax.lax.conv_general_dilated(
        x, w, window_strides=(1, 1),
        padding=[(padding[0], padding[0]), (padding[1], padding[1])],
        dimension_numbers=("NHWC", "HWIO", "NHWC"))
    return out + b.reshape(1, 1, 1, -1)


def ref_center_pivot_conv4d(x, w1, b1, w2, b2, padding):
    bsz, inch, ha, wa, hb, wb = x.shape
    x1 = jnp.transpose(x, (0, 4, 5, 2, 3, 1)).reshape(bsz * hb * wb, ha, wa, inch)
    o1 = _ref_conv2d(x1, w1, b1, padding[:2]).reshape(bsz, hb, wb, ha, wa, -1)
    o1 = jnp.transpose(o1, (0, 5, 3, 4, 1, 2))            # (bsz, outch, ha, wa, hb, wb)
    x2 = jnp.transpose(x, (0, 2, 3, 4, 5, 1)).reshape(bsz * ha * wa, hb, wb, inch)
    o2 = _ref_conv2d(x2, w2, b2, padding[2:]).reshape(bsz, ha, wa, hb, wb, -1)
    o2 = jnp.transpose(o2, (0, 5, 1, 2, 3, 4))            # (bsz, outch, ha, wa, hb, wb)
    return o1 + o2


# ----------------------------------------------------------------------------
if __name__ == "__main__":
    # Module config: CenterPivotConv4d(in=4, out=4, kernel=(3,3,3,3),
    #                                  padding=(1,1,1,1), stride=(1,1,1,1))
    bsz, inch, outch = 2, 4, 4
    ha = wa = hb = wb = 8
    kernel_size = (3, 3, 3, 3)
    padding = (1, 1, 1, 1)

    key = jax.random.PRNGKey(0)
    kx, kw1, kb1, kw2, kb2 = jax.random.split(key, 5)

    x = jax.random.normal(kx, (bsz, inch, ha, wa, hb, wb), dtype=jnp.float32)
    # Deterministic synthetic parameters (HWIO layout).
    w1 = jax.random.normal(kw1, (kernel_size[0], kernel_size[1], inch, outch),
                           dtype=jnp.float32) * 0.1
    b1 = jax.random.normal(kb1, (outch,), dtype=jnp.float32) * 0.1
    w2 = jax.random.normal(kw2, (kernel_size[2], kernel_size[3], inch, outch),
                           dtype=jnp.float32) * 0.1
    b2 = jax.random.normal(kb2, (outch,), dtype=jnp.float32) * 0.1

    y = jax.block_until_ready(center_pivot_conv4d(x, w1, b1, w2, b2, padding))
    y_ref = jax.block_until_ready(
        ref_center_pivot_conv4d(x, w1, b1, w2, b2, padding))

    assert y.shape == (bsz, outch, ha, wa, hb, wb), y.shape
    np.testing.assert_allclose(np.asarray(y), np.asarray(y_ref),
                               atol=1e-4, rtol=1e-4)
    print("KERNEL_OK")
</pallas_src>

<mosaic_0001>
module attributes {stable_mosaic.version = 11 : i64} {
  func.func @_center_pivot_kernel(%arg0: i32, %arg1: memref<1x4x64x64xf32, #tpu.memory_space<vmem>>, %arg2: memref<4x64x256xf32, #tpu.memory_space<vmem>>, %arg3: memref<4x4x64x64xf32, #tpu.memory_space<vmem>>, %arg4: memref<4x1x64xf32, #tpu.memory_space<vmem>>, %arg5: memref<1x4x64x64xf32, #tpu.memory_space<vmem>>) attributes {dimension_semantics = [#tpu.dimension_semantics<parallel>], iteration_bounds = array<i64: 2>, scalar_prefetch = 0 : i64, scratch_operands = 0 : i64, tpu.core_type = #tpu.core_type<tc>, window_params = [{transform_indices = @transform_0, window_bounds = array<i64: 1, 4, 64, 64>}, {pipeline_mode = #tpu.pipeline_mode<synchronous>, transform_indices = @transform_1, window_bounds = array<i64: 4, 64, 256>}, {pipeline_mode = #tpu.pipeline_mode<synchronous>, transform_indices = @transform_2, window_bounds = array<i64: 4, 4, 64, 64>}, {pipeline_mode = #tpu.pipeline_mode<synchronous>, transform_indices = @transform_3, window_bounds = array<i64: 4, 1, 64>}, {transform_indices = @transform_4, window_bounds = array<i64: 1, 4, 64, 64>}]} {
    %c0 = arith.constant 0 : index
    %c0_0 = arith.constant 0 : index
    %c0_1 = arith.constant 0 : index
    %c0_2 = arith.constant 0 : index
    %0 = vector.load %arg1[%c0, %c0_0, %c0_1, %c0_2] : memref<1x4x64x64xf32, #tpu.memory_space<vmem>>, vector<1x4x64x64xf32>
    %1 = vector.shape_cast %0 : vector<1x4x64x64xf32> to vector<4x64x64xf32>
    %2 = vector.shape_cast %1 : vector<4x64x64xf32> to vector<256x64xf32>
    %c0_3 = arith.constant 0 : index
    %c0_4 = arith.constant 0 : index
    %c0_5 = arith.constant 0 : index
    %3 = vector.load %arg2[%c0_3, %c0_4, %c0_5] : memref<4x64x256xf32, #tpu.memory_space<vmem>>, vector<1x64x256xf32>
    %4 = vector.shape_cast %3 : vector<1x64x256xf32> to vector<64x256xf32>
    %cst = arith.constant dense<0.000000e+00> : vector<64x64xf32>
    %5 = tpu.matmul %4, %2, %cst {dimension_numbers = #tpu.dot_dimension_numbers<[1], [0], [0], [1], [0, 0, 1, 1], [], []>} : vector<64x256xf32>, vector<256x64xf32>, vector<64x64xf32> -> vector<64x64xf32>
    %c0_6 = arith.constant 0 : index
    %c0_7 = arith.constant 0 : index
    %c0_8 = arith.constant 0 : index
    %6 = vector.load %arg4[%c0_6, %c0_7, %c0_8] : memref<4x1x64xf32, #tpu.memory_space<vmem>>, vector<1x1x64xf32>
    %7 = vector.shape_cast %6 : vector<1x1x64xf32> to vector<1x64xf32>
    %8 = vector.broadcast %7 : vector<1x64xf32> to vector<64x64xf32>
    %9 = arith.addf %5, %8 : vector<64x64xf32>
    %10 = vector.extract_strided_slice %1 {offsets = [0, 0, 0], sizes = [1, 64, 64], strides = [1, 1, 1]} : vector<4x64x64xf32> to vector<1x64x64xf32>
    %11 = vector.shape_cast %10 : vector<1x64x64xf32> to vector<64x64xf32>
    %c0_9 = arith.constant 0 : index
    %c0_10 = arith.constant 0 : index
    %c0_11 = arith.constant 0 : index
    %c0_12 = arith.constant 0 : index
    %12 = vector.load %arg3[%c0_9, %c0_10, %c0_11, %c0_12] : memref<4x4x64x64xf32, #tpu.memory_space<vmem>>, vector<1x1x64x64xf32>
    %13 = vector.shape_cast %12 : vector<1x1x64x64xf32> to vector<64x64xf32>
    %cst_13 = arith.constant dense<0.000000e+00> : vector<64x64xf32>
    %14 = tpu.matmul %11, %13, %cst_13 {dimension_numbers = #tpu.dot_dimension_numbers<[1], [0], [0], [1], [0, 0, 1, 1], [], []>} : vector<64x64xf32>, vector<64x64xf32>, vector<64x64xf32> -> vector<64x64xf32>
    %15 = arith.addf %9, %14 : vector<64x64xf32>
    %16 = vector.extract_strided_slice %1 {offsets = [1, 0, 0], sizes = [1, 64, 64], strides = [1, 1, 1]} : vector<4x64x64xf32> to vector<1x64x64xf32>
    %17 = vector.shape_cast %16 : vector<1x64x64xf32> to vector<64x64xf32>
    %c0_14 = arith.constant 0 : index
    %c1 = arith.constant 1 : index
    %c0_15 = arith.constant 0 : index
    %c0_16 = arith.constant 0 : index
    %18 = vector.load %arg3[%c0_14, %c1, %c0_15, %c0_16] : memref<4x4x64x64xf32, #tpu.memory_space<vmem>>, vector<1x1x64x64xf32>
    %19 = vector.shape_cast %18 : vector<1x1x64x64xf32> to vector<64x64xf32>
    %cst_17 = arith.constant dense<0.000000e+00> : vector<64x64xf32>
    %20 = tpu.matmul %17, %19, %cst_17 {dimension_numbers = #tpu.dot_dimension_numbers<[1], [0], [0], [1], [0, 0, 1, 1], [], []>} : vector<64x64xf32>, vector<64x64xf32>, vector<64x64xf32> -> vector<64x64xf32>
    %21 = arith.addf %15, %20 : vector<64x64xf32>
    %22 = vector.extract_strided_slice %1 {offsets = [2, 0, 0], sizes = [1, 64, 64], strides = [1, 1, 1]} : vector<4x64x64xf32> to vector<1x64x64xf32>
    %23 = vector.shape_cast %22 : vector<1x64x64xf32> to vector<64x64xf32>
    %c0_18 = arith.constant 0 : index
    %c2 = arith.constant 2 : index
    %c0_19 = arith.constant 0 : index
    %c0_20 = arith.constant 0 : index
    %24 = vector.load %arg3[%c0_18, %c2, %c0_19, %c0_20] : memref<4x4x64x64xf32, #tpu.memory_space<vmem>>, vector<1x1x64x64xf32>
    %25 = vector.shape_cast %24 : vector<1x1x64x64xf32> to vector<64x64xf32>
    %cst_21 = arith.constant dense<0.000000e+00> : vector<64x64xf32>
    %26 = tpu.matmul %23, %25, %cst_21 {dimension_numbers = #tpu.dot_dimension_numbers<[1], [0], [0], [1], [0, 0, 1, 1], [], []>} : vector<64x64xf32>, vector<64x64xf32>, vector<64x64xf32> -> vector<64x64xf32>
    %27 = arith.addf %21, %26 : vector<64x64xf32>
    %28 = vector.extract_strided_slice %1 {offsets = [3, 0, 0], sizes = [1, 64, 64], strides = [1, 1, 1]} : vector<4x64x64xf32> to vector<1x64x64xf32>
    %29 = vector.shape_cast %28 : vector<1x64x64xf32> to vector<64x64xf32>
    %c0_22 = arith.constant 0 : index
    %c3 = arith.constant 3 : index
    %c0_23 = arith.constant 0 : index
    %c0_24 = arith.constant 0 : index
    %30 = vector.load %arg3[%c0_22, %c3, %c0_23, %c0_24] : memref<4x4x64x64xf32, #tpu.memory_space<vmem>>, vector<1x1x64x64xf32>
    %31 = vector.shape_cast %30 : vector<1x1x64x64xf32> to vector<64x64xf32>
    %cst_25 = arith.constant dense<0.000000e+00> : vector<64x64xf32>
    %32 = tpu.matmul %29, %31, %cst_25 {dimension_numbers = #tpu.dot_dimension_numbers<[1], [0], [0], [1], [0, 0, 1, 1], [], []>} : vector<64x64xf32>, vector<64x64xf32>, vector<64x64xf32> -> vector<64x64xf32>
    %33 = arith.addf %27, %32 : vector<64x64xf32>
    %c0_26 = arith.constant 0 : index
    %c0_27 = arith.constant 0 : index
    %c0_28 = arith.constant 0 : index
    %c0_29 = arith.constant 0 : index
    %34 = vector.load %arg5[%c0_26, %c0_27, %c0_28, %c0_29] : memref<1x4x64x64xf32, #tpu.memory_space<vmem>>, vector<1x1x64x64xf32>
    %35 = vector.shape_cast %34 : vector<1x1x64x64xf32> to vector<64x64xf32>
    %36 = vector.shape_cast %33 : vector<64x64xf32> to vector<1x1x64x64xf32>
    tpu.vector_store %arg5[%c0_26, %c0_27, %c0_28, %c0_29], %36 {strides = array<i32>} : memref<1x4x64x64xf32, #tpu.memory_space<vmem>>, vector<1x1x64x64xf32>,
    %c1_30 = arith.constant 1 : index
    %c0_31 = arith.constant 0 : index
    %c0_32 = arith.constant 0 : index
    %37 = vector.load %arg2[%c1_30, %c0_31, %c0_32] : memref<4x64x256xf32, #tpu.memory_space<vmem>>, vector<1x64x256xf32>
    %38 = vector.shape_cast %37 : vector<1x64x256xf32> to vector<64x256xf32>
    %cst_33 = arith.constant dense<0.000000e+00> : vector<64x64xf32>
    %39 = tpu.matmul %38, %2, %cst_33 {dimension_numbers = #tpu.dot_dimension_numbers<[1], [0], [0], [1], [0, 0, 1, 1], [], []>} : vector<64x256xf32>, vector<256x64xf32>, vector<64x64xf32> -> vector<64x64xf32>
    %c1_34 = arith.constant 1 : index
    %c0_35 = arith.constant 0 : index
    %c0_36 = arith.constant 0 : index
    %40 = vector.load %arg4[%c1_34, %c0_35, %c0_36] : memref<4x1x64xf32, #tpu.memory_space<vmem>>, vector<1x1x64xf32>
    %41 = vector.shape_cast %40 : vector<1x1x64xf32> to vector<1x64xf32>
    %42 = vector.broadcast %41 : vector<1x64xf32> to vector<64x64xf32>
    %43 = arith.addf %39, %42 : vector<64x64xf32>
    %44 = vector.extract_strided_slice %1 {offsets = [0, 0, 0], sizes = [1, 64, 64], strides = [1, 1, 1]} : vector<4x64x64xf32> to vector<1x64x64xf32>
    %45 = vector.shape_cast %44 : vector<1x64x64xf32> to vector<64x64xf32>
    %c1_37 = arith.constant 1 : index
    %c0_38 = arith.constant 0 : index
    %c0_39 = arith.constant 0 : index
    %c0_40 = arith.constant 0 : index
    %46 = vector.load %arg3[%c1_37, %c0_38, %c0_39, %c0_40] : memref<4x4x64x64xf32, #tpu.memory_space<vmem>>, vector<1x1x64x64xf32>
    %47 = vector.shape_cast %46 : vector<1x1x64x64xf32> to vector<64x64xf32>
    %cst_41 = arith.constant dense<0.000000e+00> : vector<64x64xf32>
    %48 = tpu.matmul %45, %47, %cst_41 {dimension_numbers = #tpu.dot_dimension_numbers<[1], [0], [0], [1], [0, 0, 1, 1], [], []>} : vector<64x64xf32>, vector<64x64xf32>, vector<64x64xf32> -> vector<64x64xf32>
    %49 = arith.addf %43, %48 : vector<64x64xf32>
    %50 = vector.extract_strided_slice %1 {offsets = [1, 0, 0], sizes = [1, 64, 64], strides = [1, 1, 1]} : vector<4x64x64xf32> to vector<1x64x64xf32>
    %51 = vector.shape_cast %50 : vector<1x64x64xf32> to vector<64x64xf32>
    %c1_42 = arith.constant 1 : index
    %c1_43 = arith.constant 1 : index
    %c0_44 = arith.constant 0 : index
    %c0_45 = arith.constant 0 : index
    %52 = vector.load %arg3[%c1_42, %c1_43, %c0_44, %c0_45] : memref<4x4x64x64xf32, #tpu.memory_space<vmem>>, vector<1x1x64x64xf32>
    %53 = vector.shape_cast %52 : vector<1x1x64x64xf32> to vector<64x64xf32>
    %cst_46 = arith.constant dense<0.000000e+00> : vector<64x64xf32>
    %54 = tpu.matmul %51, %53, %cst_46 {dimension_numbers = #tpu.dot_dimension_numbers<[1], [0], [0], [1], [0, 0, 1, 1], [], []>} : vector<64x64xf32>, vector<64x64xf32>, vector<64x64xf32> -> vector<64x64xf32>
    %55 = arith.addf %49, %54 : vector<64x64xf32>
    %56 = vector.extract_strided_slice %1 {offsets = [2, 0, 0], sizes = [1, 64, 64], strides = [1, 1, 1]} : vector<4x64x64xf32> to vector<1x64x64xf32>
    %57 = vector.shape_cast %56 : vector<1x64x64xf32> to vector<64x64xf32>
    %c1_47 = arith.constant 1 : index
    %c2_48 = arith.constant 2 : index
    %c0_49 = arith.constant 0 : index
    %c0_50 = arith.constant 0 : index
    %58 = vector.load %arg3[%c1_47, %c2_48, %c0_49, %c0_50] : memref<4x4x64x64xf32, #tpu.memory_space<vmem>>, vector<1x1x64x64xf32>
    %59 = vector.shape_cast %58 : vector<1x1x64x64xf32> to vector<64x64xf32>
    %cst_51 = arith.constant dense<0.000000e+00> : vector<64x64xf32>
    %60 = tpu.matmul %57, %59, %cst_51 {dimension_numbers = #tpu.dot_dimension_numbers<[1], [0], [0], [1], [0, 0, 1, 1], [], []>} : vector<64x64xf32>, vector<64x64xf32>, vector<64x64xf32> -> vector<64x64xf32>
    %61 = arith.addf %55, %60 : vector<64x64xf32>
    %62 = vector.extract_strided_slice %1 {offsets = [3, 0, 0], sizes = [1, 64, 64], strides = [1, 1, 1]} : vector<4x64x64xf32> to vector<1x64x64xf32>
    %63 = vector.shape_cast %62 : vector<1x64x64xf32> to vector<64x64xf32>
    %c1_52 = arith.constant 1 : index
    %c3_53 = arith.constant 3 : index
    %c0_54 = arith.constant 0 : index
    %c0_55 = arith.constant 0 : index
    %64 = vector.load %arg3[%c1_52, %c3_53, %c0_54, %c0_55] : memref<4x4x64x64xf32, #tpu.memory_space<vmem>>, vector<1x1x64x64xf32>
    %65 = vector.shape_cast %64 : vector<1x1x64x64xf32> to vector<64x64xf32>
    %cst_56 = arith.constant dense<0.000000e+00> : vector<64x64xf32>
    %66 = tpu.matmul %63, %65, %cst_56 {dimension_numbers = #tpu.dot_dimension_numbers<[1], [0], [0], [1], [0, 0, 1, 1], [], []>} : vector<64x64xf32>, vector<64x64xf32>, vector<64x64xf32> -> vector<64x64xf32>
    %67 = arith.addf %61, %66 : vector<64x64xf32>
    %c0_57 = arith.constant 0 : index
    %c1_58 = arith.constant 1 : index
    %c0_59 = arith.constant 0 : index
    %c0_60 = arith.constant 0 : index
    %68 = vector.load %arg5[%c0_57, %c1_58, %c0_59, %c0_60] : memref<1x4x64x64xf32, #tpu.memory_space<vmem>>, vector<1x1x64x64xf32>
    %69 = vector.shape_cast %68 : vector<1x1x64x64xf32> to vector<64x64xf32>
    %70 = vector.shape_cast %67 : vector<64x64xf32> to vector<1x1x64x64xf32>
    tpu.vector_store %arg5[%c0_57, %c1_58, %c0_59, %c0_60], %70 {strides = array<i32>} : memref<1x4x64x64xf32, #tpu.memory_space<vmem>>, vector<1x1x64x64xf32>,
    %c2_61 = arith.constant 2 : index
    %c0_62 = arith.constant 0 : index
    %c0_63 = arith.constant 0 : index
    %71 = vector.load %arg2[%c2_61, %c0_62, %c0_63] : memref<4x64x256xf32, #tpu.memory_space<vmem>>, vector<1x64x256xf32>
    %72 = vector.shape_cast %71 : vector<1x64x256xf32> to vector<64x256xf32>
    %cst_64 = arith.constant dense<0.000000e+00> : vector<64x64xf32>
    %73 = tpu.matmul %72, %2, %cst_64 {dimension_numbers = #tpu.dot_dimension_numbers<[1], [0], [0], [1], [0, 0, 1, 1], [], []>} : vector<64x256xf32>, vector<256x64xf32>, vector<64x64xf32> -> vector<64x64xf32>
    %c2_65 = arith.constant 2 : index
    %c0_66 = arith.constant 0 : index
    %c0_67 = arith.constant 0 : index
    %74 = vector.load %arg4[%c2_65, %c0_66, %c0_67] : memref<4x1x64xf32, #tpu.memory_space<vmem>>, vector<1x1x64xf32>
    %75 = vector.shape_cast %74 : vector<1x1x64xf32> to vector<1x64xf32>
    %76 = vector.broadcast %75 : vector<1x64xf32> to vector<64x64xf32>
    %77 = arith.addf %73, %76 : vector<64x64xf32>
    %78 = vector.extract_strided_slice %1 {offsets = [0, 0, 0], sizes = [1, 64, 64], strides = [1, 1, 1]} : vector<4x64x64xf32> to vector<1x64x64xf32>
    %79 = vector.shape_cast %78 : vector<1x64x64xf32> to vector<64x64xf32>
    %c2_68 = arith.constant 2 : index
    %c0_69 = arith.constant 0 : index
    %c0_70 = arith.constant 0 : index
    %c0_71 = arith.constant 0 : index
    %80 = vector.load %arg3[%c2_68, %c0_69, %c0_70, %c0_71] : memref<4x4x64x64xf32, #tpu.memory_space<vmem>>, vector<1x1x64x64xf32>
    %81 = vector.shape_cast %80 : vector<1x1x64x64xf32> to vector<64x64xf32>
    %cst_72 = arith.constant dense<0.000000e+00> : vector<64x64xf32>
    %82 = tpu.matmul %79, %81, %cst_72 {dimension_numbers = #tpu.dot_dimension_numbers<[1], [0], [0], [1], [0, 0, 1, 1], [], []>} : vector<64x64xf32>, vector<64x64xf32>, vector<64x64xf32> -> vector<64x64xf32>
    %83 = arith.addf %77, %82 : vector<64x64xf32>
    %84 = vector.extract_strided_slice %1 {offsets = [1, 0, 0], sizes = [1, 64, 64], strides = [1, 1, 1]} : vector<4x64x64xf32> to vector<1x64x64xf32>
    %85 = vector.shape_cast %84 : vector<1x64x64xf32> to vector<64x64xf32>
    %c2_73 = arith.constant 2 : index
    %c1_74 = arith.constant 1 : index
    %c0_75 = arith.constant 0 : index
    %c0_76 = arith.constant 0 : index
    %86 = vector.load %arg3[%c2_73, %c1_74, %c0_75, %c0_76] : memref<4x4x64x64xf32, #tpu.memory_space<vmem>>, vector<1x1x64x64xf32>
    %87 = vector.shape_cast %86 : vector<1x1x64x64xf32> to vector<64x64xf32>
    %cst_77 = arith.constant dense<0.000000e+00> : vector<64x64xf32>
    %88 = tpu.matmul %85, %87, %cst_77 {dimension_numbers = #tpu.dot_dimension_numbers<[1], [0], [0], [1], [0, 0, 1, 1], [], []>} : vector<64x64xf32>, vector<64x64xf32>, vector<64x64xf32> -> vector<64x64xf32>
    %89 = arith.addf %83, %88 : vector<64x64xf32>
    %90 = vector.extract_strided_slice %1 {offsets = [2, 0, 0], sizes = [1, 64, 64], strides = [1, 1, 1]} : vector<4x64x64xf32> to vector<1x64x64xf32>
    %91 = vector.shape_cast %90 : vector<1x64x64xf32> to vector<64x64xf32>
    %c2_78 = arith.constant 2 : index
    %c2_79 = arith.constant 2 : index
    %c0_80 = arith.constant 0 : index
    %c0_81 = arith.constant 0 : index
    %92 = vector.load %arg3[%c2_78, %c2_79, %c0_80, %c0_81] : memref<4x4x64x64xf32, #tpu.memory_space<vmem>>, vector<1x1x64x64xf32>
    %93 = vector.shape_cast %92 : vector<1x1x64x64xf32> to vector<64x64xf32>
    %cst_82 = arith.constant dense<0.000000e+00> : vector<64x64xf32>
    %94 = tpu.matmul %91, %93, %cst_82 {dimension_numbers = #tpu.dot_dimension_numbers<[1], [0], [0], [1], [0, 0, 1, 1], [], []>} : vector<64x64xf32>, vector<64x64xf32>, vector<64x64xf32> -> vector<64x64xf32>
    %95 = arith.addf %89, %94 : vector<64x64xf32>
    %96 = vector.extract_strided_slice %1 {offsets = [3, 0, 0], sizes = [1, 64, 64], strides = [1, 1, 1]} : vector<4x64x64xf32> to vector<1x64x64xf32>
    %97 = vector.shape_cast %96 : vector<1x64x64xf32> to vector<64x64xf32>
    %c2_83 = arith.constant 2 : index
    %c3_84 = arith.constant 3 : index
    %c0_85 = arith.constant 0 : index
    %c0_86 = arith.constant 0 : index
    %98 = vector.load %arg3[%c2_83, %c3_84, %c0_85, %c0_86] : memref<4x4x64x64xf32, #tpu.memory_space<vmem>>, vector<1x1x64x64xf32>
    %99 = vector.shape_cast %98 : vector<1x1x64x64xf32> to vector<64x64xf32>
    %cst_87 = arith.constant dense<0.000000e+00> : vector<64x64xf32>
    %100 = tpu.matmul %97, %99, %cst_87 {dimension_numbers = #tpu.dot_dimension_numbers<[1], [0], [0], [1], [0, 0, 1, 1], [], []>} : vector<64x64xf32>, vector<64x64xf32>, vector<64x64xf32> -> vector<64x64xf32>
    %101 = arith.addf %95, %100 : vector<64x64xf32>
    %c0_88 = arith.constant 0 : index
    %c2_89 = arith.constant 2 : index
    %c0_90 = arith.constant 0 : index
    %c0_91 = arith.constant 0 : index
    %102 = vector.load %arg5[%c0_88, %c2_89, %c0_90, %c0_91] : memref<1x4x64x64xf32, #tpu.memory_space<vmem>>, vector<1x1x64x64xf32>
    %103 = vector.shape_cast %102 : vector<1x1x64x64xf32> to vector<64x64xf32>
    %104 = vector.shape_cast %101 : vector<64x64xf32> to vector<1x1x64x64xf32>
    tpu.vector_store %arg5[%c0_88, %c2_89, %c0_90, %c0_91], %104 {strides = array<i32>} : memref<1x4x64x64xf32, #tpu.memory_space<vmem>>, vector<1x1x64x64xf32>,
    %c3_92 = arith.constant 3 : index
    %c0_93 = arith.constant 0 : index
    %c0_94 = arith.constant 0 : index
    %105 = vector.load %arg2[%c3_92, %c0_93, %c0_94] : memref<4x64x256xf32, #tpu.memory_space<vmem>>, vector<1x64x256xf32>
    %106 = vector.shape_cast %105 : vector<1x64x256xf32> to vector<64x256xf32>
    %cst_95 = arith.constant dense<0.000000e+00> : vector<64x64xf32>
    %107 = tpu.matmul %106, %2, %cst_95 {dimension_numbers = #tpu.dot_dimension_numbers<[1], [0], [0], [1], [0, 0, 1, 1], [], []>} : vector<64x256xf32>, vector<256x64xf32>, vector<64x64xf32> -> vector<64x64xf32>
    %c3_96 = arith.constant 3 : index
    %c0_97 = arith.constant 0 : index
    %c0_98 = arith.constant 0 : index
    %108 = vector.load %arg4[%c3_96, %c0_97, %c0_98] : memref<4x1x64xf32, #tpu.memory_space<vmem>>, vector<1x1x64xf32>
    %109 = vector.shape_cast %108 : vector<1x1x64xf32> to vector<1x64xf32>
    %110 = vector.broadcast %109 : vector<1x64xf32> to vector<64x64xf32>
    %111 = arith.addf %107, %110 : vector<64x64xf32>
    %112 = vector.extract_strided_slice %1 {offsets = [0, 0, 0], sizes = [1, 64, 64], strides = [1, 1, 1]} : vector<4x64x64xf32> to vector<1x64x64xf32>
    %113 = vector.shape_cast %112 : vector<1x64x64xf32> to vector<64x64xf32>
    %c3_99 = arith.constant 3 : index
    %c0_100 = arith.constant 0 : index
    %c0_101 = arith.constant 0 : index
    %c0_102 = arith.constant 0 : index
    %114 = vector.load %arg3[%c3_99, %c0_100, %c0_101, %c0_102] : memref<4x4x64x64xf32, #tpu.memory_space<vmem>>, vector<1x1x64x64xf32>
    %115 = vector.shape_cast %114 : vector<1x1x64x64xf32> to vector<64x64xf32>
    %cst_103 = arith.constant dense<0.000000e+00> : vector<64x64xf32>
    %116 = tpu.matmul %113, %115, %cst_103 {dimension_numbers = #tpu.dot_dimension_numbers<[1], [0], [0], [1], [0, 0, 1, 1], [], []>} : vector<64x64xf32>, vector<64x64xf32>, vector<64x64xf32> -> vector<64x64xf32>
    %117 = arith.addf %111, %116 : vector<64x64xf32>
    %118 = vector.extract_strided_slice %1 {offsets = [1, 0, 0], sizes = [1, 64, 64], strides = [1, 1, 1]} : vector<4x64x64xf32> to vector<1x64x64xf32>
    %119 = vector.shape_cast %118 : vector<1x64x64xf32> to vector<64x64xf32>
    %c3_104 = arith.constant 3 : index
    %c1_105 = arith.constant 1 : index
    %c0_106 = arith.constant 0 : index
    %c0_107 = arith.constant 0 : index
    %120 = vector.load %arg3[%c3_104, %c1_105, %c0_106, %c0_107] : memref<4x4x64x64xf32, #tpu.memory_space<vmem>>, vector<1x1x64x64xf32>
    %121 = vector.shape_cast %120 : vector<1x1x64x64xf32> to vector<64x64xf32>
    %cst_108 = arith.constant dense<0.000000e+00> : vector<64x64xf32>
    %122 = tpu.matmul %119, %121, %cst_108 {dimension_numbers = #tpu.dot_dimension_numbers<[1], [0], [0], [1], [0, 0, 1, 1], [], []>} : vector<64x64xf32>, vector<64x64xf32>, vector<64x64xf32> -> vector<64x64xf32>
    %123 = arith.addf %117, %122 : vector<64x64xf32>
    %124 = vector.extract_strided_slice %1 {offsets = [2, 0, 0], sizes = [1, 64, 64], strides = [1, 1, 1]} : vector<4x64x64xf32> to vector<1x64x64xf32>
    %125 = vector.shape_cast %124 : vector<1x64x64xf32> to vector<64x64xf32>
    %c3_109 = arith.constant 3 : index
    %c2_110 = arith.constant 2 : index
    %c0_111 = arith.constant 0 : index
    %c0_112 = arith.constant 0 : index
    %126 = vector.load %arg3[%c3_109, %c2_110, %c0_111, %c0_112] : memref<4x4x64x64xf32, #tpu.memory_space<vmem>>, vector<1x1x64x64xf32>
    %127 = vector.shape_cast %126 : vector<1x1x64x64xf32> to vector<64x64xf32>
    %cst_113 = arith.constant dense<0.000000e+00> : vector<64x64xf32>
    %128 = tpu.matmul %125, %127, %cst_113 {dimension_numbers = #tpu.dot_dimension_numbers<[1], [0], [0], [1], [0, 0, 1, 1], [], []>} : vector<64x64xf32>, vector<64x64xf32>, vector<64x64xf32> -> vector<64x64xf32>
    %129 = arith.addf %123, %128 : vector<64x64xf32>
    %130 = vector.extract_strided_slice %1 {offsets = [3, 0, 0], sizes = [1, 64, 64], strides = [1, 1, 1]} : vector<4x64x64xf32> to vector<1x64x64xf32>
    %131 = vector.shape_cast %130 : vector<1x64x64xf32> to vector<64x64xf32>
    %c3_114 = arith.constant 3 : index
    %c3_115 = arith.constant 3 : index
    %c0_116 = arith.constant 0 : index
    %c0_117 = arith.constant 0 : index
    %132 = vector.load %arg3[%c3_114, %c3_115, %c0_116, %c0_117] : memref<4x4x64x64xf32, #tpu.memory_space<vmem>>, vector<1x1x64x64xf32>
    %133 = vector.shape_cast %132 : vector<1x1x64x64xf32> to vector<64x64xf32>
    %cst_118 = arith.constant dense<0.000000e+00> : vector<64x64xf32>
    %134 = tpu.matmul %131, %133, %cst_118 {dimension_numbers = #tpu.dot_dimension_numbers<[1], [0], [0], [1], [0, 0, 1, 1], [], []>} : vector<64x64xf32>, vector<64x64xf32>, vector<64x64xf32> -> vector<64x64xf32>
    %135 = arith.addf %129, %134 : vector<64x64xf32>
    %c0_119 = arith.constant 0 : index
    %c3_120 = arith.constant 3 : index
    %c0_121 = arith.constant 0 : index
    %c0_122 = arith.constant 0 : index
    %136 = vector.load %arg5[%c0_119, %c3_120, %c0_121, %c0_122] : memref<1x4x64x64xf32, #tpu.memory_space<vmem>>, vector<1x1x64x64xf32>
    %137 = vector.shape_cast %136 : vector<1x1x64x64xf32> to vector<64x64xf32>
    %138 = vector.shape_cast %135 : vector<64x64xf32> to vector<1x1x64x64xf32>
    tpu.vector_store %arg5[%c0_119, %c3_120, %c0_121, %c0_122], %138 {strides = array<i32>} : memref<1x4x64x64xf32, #tpu.memory_space<vmem>>, vector<1x1x64x64xf32>,
    return
  }
  func.func @transform_0(%arg0: i32) -> (i32, i32, i32, i32) {
    %c0_i32 = arith.constant 0 : i32
    %c0_i32_0 = arith.constant 0 : i32
    %c0_i32_1 = arith.constant 0 : i32
    %c0_i32_2 = arith.constant 0 : i32
    return %arg0, %c0_i32, %c0_i32_0, %c0_i32_1 : i32, i32, i32, i32
  }
  func.func @transform_1(%arg0: i32) -> (i32, i32, i32) {
    %c0_i32 = arith.constant 0 : i32
    %c0_i32_0 = arith.constant 0 : i32
    %c0_i32_1 = arith.constant 0 : i32
    %c0_i32_2 = arith.constant 0 : i32
    return %c0_i32, %c0_i32_0, %c0_i32_1 : i32, i32, i32
  }
  func.func @transform_2(%arg0: i32) -> (i32, i32, i32, i32) {
    %c0_i32 = arith.constant 0 : i32
    %c0_i32_0 = arith.constant 0 : i32
    %c0_i32_1 = arith.constant 0 : i32
    %c0_i32_2 = arith.constant 0 : i32
    %c0_i32_3 = arith.constant 0 : i32
    return %c0_i32, %c0_i32_0, %c0_i32_1, %c0_i32_2 : i32, i32, i32, i32
  }
  func.func @transform_3(%arg0: i32) -> (i32, i32, i32) {
    %c0_i32 = arith.constant 0 : i32
    %c0_i32_0 = arith.constant 0 : i32
    %c0_i32_1 = arith.constant 0 : i32
    %c0_i32_2 = arith.constant 0 : i32
    return %c0_i32, %c0_i32_0, %c0_i32_1 : i32, i32, i32
  }
  func.func @transform_4(%arg0: i32) -> (i32, i32, i32, i32) {
    %c0_i32 = arith.constant 0 : i32
    %c0_i32_0 = arith.constant 0 : i32
    %c0_i32_1 = arith.constant 0 : i32
    %c0_i32_2 = arith.constant 0 : i32
    return %arg0, %c0_i32, %c0_i32_0, %c0_i32_1 : i32, i32, i32, i32
  }
}

</mosaic_0001>

<llo_original>
// kernel: center_pivot_conv4d.1
$region0: #{center_pivot_conv4d.1}
  #allocation0 [shape = 'u32[]', space=smem, size = 0x4, offset = 0x4, fixed_abs, tag = 'smem constant byte address 0x4 - core index']
  #allocation1 [shape = 'u32[144,128]{1,0:T(1,128)}', space=vmem, size = 0x12000, scoped, tag = 'internal scratch']
  %s0 = inlined_call_operand.vmem [shape: f32[2,4,64,64], index: 0, kind: input, shape index: {}]
  %s1 = inlined_call_operand.vmem [shape: f32[4,64,256], index: 1, kind: input, shape index: {}]
  %s2 = inlined_call_operand.vmem [shape: f32[4,4,64,64], index: 2, kind: input, shape index: {}]
  %s3 = inlined_call_operand.vmem [shape: f32[4,1,64], index: 3, kind: input, shape index: {}]
  %s4 = inlined_call_operand.vmem [shape: f32[2,4,64,64], index: 4, kind: output, shape index: {}]
  %s5 = sld [smem:[#allocation0]]
  $region49: #{center_pivot_conv4d.1} parent=0
    _
  %s7 = ssub.s32 1, %s5
  %s8 = scalar_select 0, %s7, %s5
  loop: start=0, step=1, limit=4
  $region2: #{center_pivot_conv4d.1} parent=0 // loop_pre_header
    _
  $region3: #{center_pivot_conv4d.1} parent=0 // loop_header
    %s10 = sphi 0, %s14
    %p11 = scmp.ge.s32.totalorder %s10, 4
    %s20 = sphi 0, %s22
    %s23 = sphi 0, %s20
    %s24 = sphi 0, %s23
    %s40 = sphi 0, %s24
    %s44 = sphi 0, %s44
    %s46 = sphi 0, %s44
    %s47 = sphi 0, %s46
    %s61 = sphi 0, %s47
    %s65 = sphi 0, %s65
    %s67 = sphi 0, %s65
    %s68 = sphi 0, %s67
    %s82 = sphi 0, %s68
    %s86 = sphi 0, %s86
    %s88 = sphi 0, %s86
    %s89 = sphi 0, %s88
    %s103 = sphi 0, %s89
    %s109 = sphi 0, %s111
    %s112 = sphi 0, %s109
    %s113 = sphi 0, %s112
    %s129 = sphi 0, %s113
  $region4: #{center_pivot_conv4d.1} parent=0 // loop_header_branch
    %13 = sbr.rel (%p11) target = $region8
  $region5: #{center_pivot_conv4d.1} parent=0 // loop_body
    %s15 = ssub.s32 %s10, 1
    %s16 = ssub.s32 %s10, 2
    %s17 = sadd.s32 %s10, 1
    %s18 = ssub.s32 %s10, %s17
    %p19 = scmp.eq.s32.totalorder %s18, 0
    %s21 = sadd.s32 %s20, 1
    %s22 = scalar_select %p19, %s20, %s21
    %p25 = pneg %p19
    %p26 = scmp.eq.s32.totalorder %s10, 1
    %p27 = por %p25, %p26
    %p28 = scmp.ne.s32.totalorder %s20, %s23
    %p29 = scmp.eq.s32.totalorder %s10, 0
    %p30 = por %p28, %p29
    %p31 = scmp.ne.s32.totalorder %s20, %s23
    %p32 = scmp.eq.s32.totalorder %s15, 1
    %p33 = por %p31, %p32
    %p34 = scmp.ne.s32.totalorder %s23, %s24
    %p35 = scmp.eq.s32.totalorder %s15, 0
    %p36 = por %p34, %p35
    %p37 = scmp.ne.s32.totalorder %s23, %s24
    %p38 = scmp.eq.s32.totalorder %s16, 1
    %p39 = por %p37, %p38
    %p41 = scmp.ne.s32.totalorder %s24, %s40
    %p42 = scmp.eq.s32.totalorder %s16, 0
    %p43 = por %p41, %p42
    %s45 = sadd.s32 %s44, 1
    %p48 = scmp.eq.s32.totalorder %s10, 1
    %p49 = scmp.ne.s32.totalorder %s44, %s46
    %p50 = scmp.eq.s32.totalorder %s10, 0
    %p51 = por %p49, %p50
    %p52 = scmp.ne.s32.totalorder %s44, %s46
    %p53 = scmp.eq.s32.totalorder %s15, 1
    %p54 = por %p52, %p53
    %p55 = scmp.ne.s32.totalorder %s46, %s47
    %p56 = scmp.eq.s32.totalorder %s15, 0
    %p57 = por %p55, %p56
    %p58 = scmp.ne.s32.totalorder %s46, %s47
    %p59 = scmp.eq.s32.totalorder %s16, 1
    %p60 = por %p58, %p59
    %p62 = scmp.ne.s32.totalorder %s47, %s61
    %p63 = scmp.eq.s32.totalorder %s16, 0
    %p64 = por %p62, %p63
    %s66 = sadd.s32 %s65, 1
    %p69 = scmp.eq.s32.totalorder %s10, 1
    %p70 = scmp.ne.s32.totalorder %s65, %s67
    %p71 = scmp.eq.s32.totalorder %s10, 0
    %p72 = por %p70, %p71
    %p73 = scmp.ne.s32.totalorder %s65, %s67
    %p74 = scmp.eq.s32.totalorder %s15, 1
    %p75 = por %p73, %p74
    %p76 = scmp.ne.s32.totalorder %s67, %s68
    %p77 = scmp.eq.s32.totalorder %s15, 0
    %p78 = por %p76, %p77
    %p79 = scmp.ne.s32.totalorder %s67, %s68
    %p80 = scmp.eq.s32.totalorder %s16, 1
    %p81 = por %p79, %p80
    %p83 = scmp.ne.s32.totalorder %s68, %s82
    %p84 = scmp.eq.s32.totalorder %s16, 0
    %p85 = por %p83, %p84
    %s87 = sadd.s32 %s86, 1
    %p90 = scmp.eq.s32.totalorder %s10, 1
    %p91 = scmp.ne.s32.totalorder %s86, %s88
    %p92 = scmp.eq.s32.totalorder %s10, 0
    %p93 = por %p91, %p92
    %p94 = scmp.ne.s32.totalorder %s86, %s88
    %p95 = scmp.eq.s32.totalorder %s15, 1
    %p96 = por %p94, %p95
    %p97 = scmp.ne.s32.totalorder %s88, %s89
    %p98 = scmp.eq.s32.totalorder %s15, 0
    %p99 = por %p97, %p98
    %p100 = scmp.ne.s32.totalorder %s88, %s89
    %p101 = scmp.eq.s32.totalorder %s16, 1
    %p102 = por %p100, %p101
    %p104 = scmp.ne.s32.totalorder %s89, %s103
    %p105 = scmp.eq.s32.totalorder %s16, 0
    %p106 = por %p104, %p105
    %s107 = ssub.s32 %s10, %s17
    %p108 = scmp.eq.s32.totalorder %s107, 0
    %s110 = sadd.s32 %s109, 1
    %s111 = scalar_select %p108, %s109, %s110
    %p114 = pneg %p108
    %p115 = scmp.eq.s32.totalorder %s10, 1
    %p116 = por %p114, %p115
    %p117 = scmp.ne.s32.totalorder %s109, %s112
    %p118 = scmp.eq.s32.totalorder %s10, 0
    %p119 = por %p117, %p118
    %p120 = scmp.ne.s32.totalorder %s109, %s112
    %p121 = scmp.eq.s32.totalorder %s15, 1
    %p122 = por %p120, %p121
    %p123 = scmp.ne.s32.totalorder %s112, %s113
    %p124 = scmp.eq.s32.totalorder %s15, 0
    %p125 = por %p123, %p124
    %p126 = scmp.ne.s32.totalorder %s112, %s113
    %p127 = scmp.eq.s32.totalorder %s16, 1
    %p128 = por %p126, %p127
    %p130 = scmp.ne.s32.totalorder %s113, %s129
    %p131 = scmp.eq.s32.totalorder %s16, 0
    %p132 = por %p130, %p131
    %p133 = scmp.le.s32.totalorder 1, %s10
    %p134 = scmp.lt.s32.totalorder %s10, 3
    %p135 = pnand %p133, %p134
    %p136 = pneg %p135
    // Predicated region
    $region9: #{center_pivot_conv4d.1} parent=5 // pred_check
      _
    $region10: #{center_pivot_conv4d.1} parent=5 // pred_check_branch
      %138 = sbr.rel (%p135) target = $region12
    $region11: #{center_pivot_conv4d.1} parent=5 // pred_region
      %s139 = ssub.s32 %s10, 1
      // Predicated region
      $region13: #{center_pivot_conv4d.1} parent=11 // pred_check
        %p140 = pneg %p57
      $region14: #{center_pivot_conv4d.1} parent=11 // pred_check_branch
        %142 = sbr.rel (%p140) target = $region16
      $region15: #{center_pivot_conv4d.1} parent=11 // pred_region
        _
      $region16: #{center_pivot_conv4d.1} parent=11 // pred_fallthru
        _
      // Predicated region
      $region17: #{center_pivot_conv4d.1} parent=11 // pred_check
        %p143 = pneg %p78
      $region18: #{center_pivot_conv4d.1} parent=11 // pred_check_branch
        %145 = sbr.rel (%p143) target = $region20
      $region19: #{center_pivot_conv4d.1} parent=11 // pred_region
        _
      $region20: #{center_pivot_conv4d.1} parent=11 // pred_fallthru
        _
      // Predicated region
      $region21: #{center_pivot_conv4d.1} parent=11 // pred_check
        %p146 = pneg %p99
      $region22: #{center_pivot_conv4d.1} parent=11 // pred_check_branch
        %148 = sbr.rel (%p146) target = $region24
      $region23: #{center_pivot_conv4d.1} parent=11 // pred_region
        _
      $region24: #{center_pivot_conv4d.1} parent=11 // pred_fallthru
        _
    $region12: #{center_pivot_conv4d.1} parent=5 // pred_fallthru
      _
    %p149 = scmp.lt.s32.totalorder %s10, 2
    // Predicated region
    $region25: #{center_pivot_conv4d.1} parent=5 // pred_check
      %p150 = pneg %p149
    $region26: #{center_pivot_conv4d.1} parent=5 // pred_check_branch
      %152 = sbr.rel (%p150) target = $region28
    $region27: #{center_pivot_conv4d.1} parent=5 // pred_region
      // Predicated region
      $region29: #{center_pivot_conv4d.1} parent=27 // pred_check
        %p153 = pneg %p30
      $region30: #{center_pivot_conv4d.1} parent=27 // pred_check_branch
        %155 = sbr.rel (%p153) target = $region32
      $region31: #{center_pivot_conv4d.1} parent=27 // pred_region
        %p156 = scmp.lt.s32.totalorder %s10, 1
        %s157 = scalar_select %p156, %s10, 1
        %s158 = smul.addr %s157, 32
        %s159 = smul.addr %s158, 8
        %s160 = scalar_lea.vmem %s0, %s159
      $region32: #{center_pivot_conv4d.1} parent=27 // pred_fallthru
        _
    $region28: #{center_pivot_conv4d.1} parent=5 // pred_fallthru
      _
    %p161 = scmp.le.s32.totalorder 1, %s10
    %p162 = scmp.lt.s32.totalorder %s10, 3
    %p163 = pnand %p161, %p162
    %p164 = pneg %p163
    // Predicated region
    $region33: #{center_pivot_conv4d.1} parent=5 // pred_check
      _
    $region34: #{center_pivot_conv4d.1} parent=5 // pred_check_branch
      %166 = sbr.rel (%p163) target = $region36
    $region35: #{center_pivot_conv4d.1} parent=5 // pred_region
      %s167 = ssub.s32 %s10, 1
      %p168 = scmp.lt.s32.totalorder %s15, 1
      %s169 = scalar_select %p168, %s15, 1
      %s170 = smul.addr %s169, 32
      %s171 = smul.addr %s170, 8
      %s172 = scalar_lea.vmem %s0, %s171
      %p173 = pneg %p36
      %p174 = pneg %p33
      %p175 = pneg %p57
      %p176 = pneg %p54
      %p177 = pneg %p78
      %p178 = pneg %p75
      %p179 = pneg %p99
      %p180 = pneg %p96
      %p181 = pneg %p125
      %p182 = pneg %p122
      %p183 = scmp.lt.s32.totalorder %s15, 1
      %s184 = scalar_select %p183, %s15, 1
      %s185 = smul.addr %s184, 32
      %s186 = smul.addr %s185, 8
      %s187 = scalar_lea.vmem %s4, %s186
      %p188 = scmp.lt.s32.totalorder %s15, 1
      %s189 = scalar_select %p188, %s15, 1
      %s190 = smul.addr %s189, 32
      %s191 = smul.addr %s190, 8
      %s192 = scalar_lea.vmem %s0, %s191
      %p193 = scmp.lt.s32.totalorder %s15, 1
      %s194 = scalar_select %p193, %s15, 1
      %s195 = smul.addr %s194, 32
      %s196 = smul.addr %s195, 8
      %s197 = scalar_lea.vmem %s4, %s196
      %v198 = vld [vmem:[%s192] sm:$0xff]
      %v199 = vld [vmem:[%s192 + $0x8] sm:$0xff]
      %v200 = vld [vmem:[%s192 + $0x10] sm:$0xff]
      %v201 = vld [vmem:[%s192 + $0x18] sm:$0xff]
      %v202 = vld [vmem:[%s192 + $0x20] sm:$0xff]
      %v203 = vld [vmem:[%s192 + $0x28] sm:$0xff]
      %v204 = vld [vmem:[%s192 + $0x30] sm:$0xff]
      %v205 = vld [vmem:[%s192 + $0x38] sm:$0xff]
      %v206 = vld [vmem:[%s192 + $0x40] sm:$0xff]
      %v207 = vld [vmem:[%s192 + $0x48] sm:$0xff]
      %v208 = vld [vmem:[%s192 + $0x50] sm:$0xff]
      %v209 = vld [vmem:[%s192 + $0x58] sm:$0xff]
      %v210 = vld [vmem:[%s192 + $0x60] sm:$0xff]
      %v211 = vld [vmem:[%s192 + $0x68] sm:$0xff]
      %v212 = vld [vmem:[%s192 + $0x70] sm:$0xff]
      %v213 = vld [vmem:[%s192 + $0x78] sm:$0xff]
      %v214 = vld [vmem:[%s192 + $0x80] sm:$0xff]
      %v215 = vld [vmem:[%s192 + $0x88] sm:$0xff]
      %v216 = vld [vmem:[%s192 + $0x90] sm:$0xff]
      %v217 = vld [vmem:[%s192 + $0x98] sm:$0xff]
      %v218 = vld [vmem:[%s192 + $0xa0] sm:$0xff]
      %v219 = vld [vmem:[%s192 + $0xa8] sm:$0xff]
      %v220 = vld [vmem:[%s192 + $0xb0] sm:$0xff]
      %v221 = vld [vmem:[%s192 + $0xb8] sm:$0xff]
      %v222 = vld [vmem:[%s192 + $0xc0] sm:$0xff]
      %v223 = vld [vmem:[%s192 + $0xc8] sm:$0xff]
      %v224 = vld [vmem:[%s192 + $0xd0] sm:$0xff]
      %v225 = vld [vmem:[%s192 + $0xd8] sm:$0xff]
      %v226 = vld [vmem:[%s192 + $0xe0] sm:$0xff]
      %v227 = vld [vmem:[%s192 + $0xe8] sm:$0xff]
      %v228 = vld [vmem:[%s192 + $0xf0] sm:$0xff]
      %v229 = vld [vmem:[%s192 + $0xf8] sm:$0xff]
      %v230 = vld [vmem:[%s1] sm:$0xff]
      %v231 = vld [vmem:[%s1 + $0x8] sm:$0xff]
      %v232 = vld [vmem:[%s1 + $0x10] sm:$0xff]
      %v233 = vld [vmem:[%s1 + $0x18] sm:$0xff]
      %v234 = vld [vmem:[%s1 + $0x20] sm:$0xff]
      %v235 = vld [vmem:[%s1 + $0x28] sm:$0xff]
      %v236 = vld [vmem:[%s1 + $0x30] sm:$0xff]
      %v237 = vld [vmem:[%s1 + $0x38] sm:$0xff]
      %v238 = vld [vmem:[%s1 + $0x40] sm:$0xff]
      %v239 = vld [vmem:[%s1 + $0x48] sm:$0xff]
      %v240 = vld [vmem:[%s1 + $0x50] sm:$0xff]
      %v241 = vld [vmem:[%s1 + $0x58] sm:$0xff]
      %v242 = vld [vmem:[%s1 + $0x60] sm:$0xff]
      %v243 = vld [vmem:[%s1 + $0x68] sm:$0xff]
      %v244 = vld [vmem:[%s1 + $0x70] sm:$0xff]
      %v245 = vld [vmem:[%s1 + $0x78] sm:$0xff]
      %v246 = vld [vmem:[%s3] sm:$0x1]
      %v248 = vlaneseq
      %v249 = vshrl.u32 %v248, 7
      %v250 = vsub.s32 0, %v249
      %v251 = vrot.slane %v246, %v250
      %253 = vmatprep.subr.mxu0 0.0
      %254 = vmatpush1.msra.mxu0 %v198
      %255 = vmatprep.subr.mxu0 0.0
      %256 = vmatpush1.msra.mxu0 %v199
      %257 = vmatprep.subr.mxu0 0.0
      %258 = vmatpush1.msra.mxu0 %v200
      %259 = vmatprep.subr.mxu0 0.0
      %260 = vmatpush1.msra.mxu0 %v201
      %261 = vmatprep.subr.mxu0 0.0
      %262 = vmatpush1.msra.mxu0 %v202
      %263 = vmatprep.subr.mxu0 0.0
      %264 = vmatpush1.msra.mxu0 %v203
      %265 = vmatprep.subr.mxu0 0.0
      %266 = vmatpush1.msra.mxu0 %v204
      %267 = vmatprep.subr.mxu0 0.0
      %268 = vmatpush1.msra.mxu0 %v205
      %269 = vmatprep.subr.mxu0 0.0
      %270 = vmatpush1.msra.mxu0 %v206
      %271 = vmatprep.subr.mxu0 0.0
      %272 = vmatpush1.msra.mxu0 %v207
      %273 = vmatprep.subr.mxu0 0.0
      %274 = vmatpush1.msra.mxu0 %v208
      %275 = vmatprep.subr.mxu0 0.0
      %276 = vmatpush1.msra.mxu0 %v209
      %277 = vmatprep.subr.mxu0 0.0
      %278 = vmatpush1.msra.mxu0 %v210
      %279 = vmatprep.subr.mxu0 0.0
      %280 = vmatpush1.msra.mxu0 %v211
      %281 = vmatprep.subr.mxu0 0.0
      %282 = vmatpush1.msra.mxu0 %v212
      %283 = vmatprep.subr.mxu0 0.0
      %284 = vmatpush1.msra.mxu0 %v213
      %285 = vmatprep.subr.mxu0 0.0
      %286 = vmatpush1.msra.mxu0 %v214
      %287 = vmatprep.subr.mxu0 0.0
      %288 = vmatpush1.msra.mxu0 %v215
      %289 = vmatprep.subr.mxu0 0.0
      %290 = vmatpush1.msra.mxu0 %v216
      %291 = vmatprep.subr.mxu0 0.0
      %292 = vmatpush1.msra.mxu0 %v217
      %293 = vmatprep.subr.mxu0 0.0
      %294 = vmatpush1.msra.mxu0 %v218
      %295 = vmatprep.subr.mxu0 0.0
      %296 = vmatpush1.msra.mxu0 %v219
      %297 = vmatprep.subr.mxu0 0.0
      %298 = vmatpush1.msra.mxu0 %v220
      %299 = vmatprep.subr.mxu0 0.0
      %300 = vmatpush1.msra.mxu0 %v221
      %301 = vmatprep.subr.mxu0 0.0
      %302 = vmatpush1.msra.mxu0 %v222
      %303 = vmatprep.subr.mxu0 0.0
      %304 = vmatpush1.msra.mxu0 %v223
      %305 = vmatprep.subr.mxu0 0.0
      %306 = vmatpush1.msra.mxu0 %v224
      %307 = vmatprep.subr.mxu0 0.0
      %308 = vmatpush1.msra.mxu0 %v225
      %309 = vmatprep.subr.mxu0 0.0
      %310 = vmatpush1.msra.mxu0 %v226
      %311 = vmatprep.subr.mxu0 0.0
      %312 = vmatpush1.msra.mxu0 %v227
      %313 = vmatprep.subr.mxu0 0.0
      %314 = vmatpush1.msra.mxu0 %v228
      %315 = vmatprep.subr.mxu0 0.0
      %316 = vmatpush1.msra.mxu0 %v229
      %317 = vmatprep.mubr.f32.mxu0 %v231
      %318 = vmatmul.mubr.f32.gmra.mrb[0].mxu0 %v230
      %v319 = vpop.f32.mrb[0].mxu0
      %v320 = vadd.f32 %v251, %v319
      %v321 = vpop.f32.mrb[0].mxu0
      %322 = vmatprep.mubr.f32.mxu0 %v233
      %323 = vmatmul.mubr.f32.gmra.mrb[0].mxu0 %v232
      %v324 = vpop.f32.mrb[0].mxu0
      %v325 = vadd.f32 %v251, %v324
      %v326 = vpop.f32.mrb[0].mxu0
      %327 = vmatprep.mubr.f32.mxu0 %v235
      %328 = vmatmul.mubr.f32.gmra.mrb[0].mxu0 %v234
      %v329 = vpop.f32.mrb[0].mxu0
      %v330 = vadd.f32 %v251, %v329
      %v331 = vpop.f32.mrb[0].mxu0
      %332 = vmatprep.mubr.f32.mxu0 %v237
      %333 = vmatmul.mubr.f32.gmra.mrb[0].mxu0 %v236
      %v334 = vpop.f32.mrb[0].mxu0
      %v335 = vadd.f32 %v251, %v334
      %v336 = vpop.f32.mrb[0].mxu0
      %337 = vmatprep.mubr.f32.mxu0 %v239
      %338 = vmatmul.mubr.f32.gmra.mrb[0].mxu0 %v238
      %v339 = vpop.f32.mrb[0].mxu0
      %v340 = vadd.f32 %v251, %v339
      %v341 = vpop.f32.mrb[0].mxu0
      %342 = vmatprep.mubr.f32.mxu0 %v241
      %343 = vmatmul.mubr.f32.gmra.mrb[0].mxu0 %v240
      %v344 = vpop.f32.mrb[0].mxu0
      %v345 = vadd.f32 %v251, %v344
      %v346 = vpop.f32.mrb[0].mxu0
      %347 = vmatprep.mubr.f32.mxu0 %v243
      %348 = vmatmul.mubr.f32.gmra.mrb[0].mxu0 %v242
      %v349 = vpop.f32.mrb[0].mxu0
      %v350 = vadd.f32 %v251, %v349
      %v351 = vpop.f32.mrb[0].mxu0
      %352 = vmatprep.mubr.f32.mxu0 %v245
      %353 = vmatmul.mubr.f32.gmra.mrb[0].mxu0 %v244
      %v354 = vpop.f32.mrb[0].mxu0
      %v355 = vadd.f32 %v251, %v354
      %v356 = vpop.f32.mrb[0].mxu0
      %357 = vdwg.mxu0
      %v358 = vld [vmem:[%s2] sm:$0xff]
      %v359 = vld [vmem:[%s2 + $0x8] sm:$0xff]
      %v360 = vld [vmem:[%s2 + $0x10] sm:$0xff]
      %v361 = vld [vmem:[%s2 + $0x18] sm:$0xff]
      %v362 = vld [vmem:[%s2 + $0x20] sm:$0xff]
      %v363 = vld [vmem:[%s2 + $0x28] sm:$0xff]
      %v364 = vld [vmem:[%s2 + $0x30] sm:$0xff]
      %v365 = vld [vmem:[%s2 + $0x38] sm:$0xff]
      %vm366 = vcmask 523264
      %v368 = vsel %vm366, %v198, 0
      %v371 = vsel %vm366, %v199, 0
      %v374 = vsel %vm366, %v200, 0
      %v377 = vsel %vm366, %v201, 0
      %v380 = vsel %vm366, %v202, 0
      %v383 = vsel %vm366, %v203, 0
      %v386 = vsel %vm366, %v204, 0
      %v389 = vsel %vm366, %v205, 0
      %391 = vmatprep.subr.mxu0 0.0
      %392 = vmatpush1.msra.mxu0 %v358
      %393 = vmatprep.subr.mxu0 0.0
      %394 = vmatpush1.msra.mxu0 %v359
      %395 = vmatprep.subr.mxu0 0.0
      %396 = vmatpush1.msra.mxu0 %v360
      %397 = vmatprep.subr.mxu0 0.0
      %398 = vmatpush1.msra.mxu0 %v361
      %399 = vmatprep.subr.mxu0 0.0
      %400 = vmatpush1.msra.mxu0 %v362
      %401 = vmatprep.subr.mxu0 0.0
      %402 = vmatpush1.msra.mxu0 %v363
      %403 = vmatprep.subr.mxu0 0.0
      %404 = vmatpush1.msra.mxu0 %v364
      %405 = vmatprep.subr.mxu0 0.0
      %406 = vmatpush1.msra.mxu0 %v365
      %407 = vmatprep.subr.mxu0 0.0
      %408 = vmatpush1.msra.mxu0 0.0
      %409 = vmatprep.subr.mxu0 0.0
      %410 = vmatpush1.msra.mxu0 0.0
      %411 = vmatprep.subr.mxu0 0.0
      %412 = vmatpush1.msra.mxu0 0.0
      %413 = vmatprep.subr.mxu0 0.0
      %414 = vmatpush1.msra.mxu0 0.0
      %415 = vmatprep.subr.mxu0 0.0
      %416 = vmatpush1.msra.mxu0 0.0
      %417 = vmatprep.subr.mxu0 0.0
      %418 = vmatpush1.msra.mxu0 0.0
      %419 = vmatprep.subr.mxu0 0.0
      %420 = vmatpush1.msra.mxu0 0.0
      %421 = vmatprep.subr.mxu0 0.0
      %422 = vmatpush1.msra.mxu0 0.0
      %423 = vmatprep.subr.mxu0 0.0
      %424 = vmatpush1.msra.mxu0 0.0
      %425 = vmatprep.subr.mxu0 0.0
      %426 = vmatpush1.msra.mxu0 0.0
      %427 = vmatprep.subr.mxu0 0.0
      %428 = vmatpush1.msra.mxu0 0.0
      %429 = vmatprep.subr.mxu0 0.0
      %430 = vmatpush1.msra.mxu0 0.0
      %431 = vmatprep.subr.mxu0 0.0
      %432 = vmatpush1.msra.mxu0 0.0
      %433 = vmatprep.subr.mxu0 0.0
      %434 = vmatpush1.msra.mxu0 0.0
      %435 = vmatprep.subr.mxu0 0.0
      %436 = vmatpush1.msra.mxu0 0.0
      %437 = vmatprep.subr.mxu0 0.0
      %438 = vmatpush1.msra.mxu0 0.0
      %439 = vmatprep.subr.mxu0 0.0
      %440 = vmatpush1.msra.mxu0 0.0
      %441 = vmatprep.subr.mxu0 0.0
      %442 = vmatpush1.msra.mxu0 0.0
      %443 = vmatprep.subr.mxu0 0.0
      %444 = vmatpush1.msra.mxu0 0.0
      %445 = vmatprep.subr.mxu0 0.0
      %446 = vmatpush1.msra.mxu0 0.0
      %447 = vmatprep.subr.mxu0 0.0
      %448 = vmatpush1.msra.mxu0 0.0
      %449 = vmatprep.subr.mxu0 0.0
      %450 = vmatpush1.msra.mxu0 0.0
      %451 = vmatprep.subr.mxu0 0.0
      %452 = vmatpush1.msra.mxu0 0.0
      %453 = vmatprep.subr.mxu0 0.0
      %454 = vmatpush1.msra.mxu0 0.0
      %455 = vmatprep.mubr.f32.mxu0 0.0
      %456 = vmatmul.mubr.f32.gmra.mrb[0].mxu0 %v368
      %v457 = vpop.f32.mrb[0].mxu0
      %v458 = vadd.f32 0.0, %v457
      %v459 = vpop.f32.mrb[0].mxu0
      %460 = vmatprep.mubr.f32.mxu0 0.0
      %461 = vmatmul.mubr.f32.gmra.mrb[0].mxu0 %v371
      %v462 = vpop.f32.mrb[0].mxu0
      %v463 = vadd.f32 0.0, %v462
      %v464 = vpop.f32.mrb[0].mxu0
      %465 = vmatprep.mubr.f32.mxu0 0.0
      %466 = vmatmul.mubr.f32.gmra.mrb[0].mxu0 %v374
      %v467 = vpop.f32.mrb[0].mxu0
      %v468 = vadd.f32 0.0, %v467
      %v469 = vpop.f32.mrb[0].mxu0
      %470 = vmatprep.mubr.f32.mxu0 0.0
      %471 = vmatmul.mubr.f32.gmra.mrb[0].mxu0 %v377
      %v472 = vpop.f32.mrb[0].mxu0
      %v473 = vadd.f32 0.0, %v472
      %v474 = vpop.f32.mrb[0].mxu0
      %475 = vmatprep.mubr.f32.mxu0 0.0
      %476 = vmatmul.mubr.f32.gmra.mrb[0].mxu0 %v380
      %v477 = vpop.f32.mrb[0].mxu0
      %v478 = vadd.f32 0.0, %v477
      %v479 = vpop.f32.mrb[0].mxu0
      %480 = vmatprep.mubr.f32.mxu0 0.0
      %481 = vmatmul.mubr.f32.gmra.mrb[0].mxu0 %v383
      %v482 = vpop.f32.mrb[0].mxu0
      %v483 = vadd.f32 0.0, %v482
      %v484 = vpop.f32.mrb[0].mxu0
      %485 = vmatprep.mubr.f32.mxu0 0.0
      %486 = vmatmul.mubr.f32.gmra.mrb[0].mxu0 %v386
      %v487 = vpop.f32.mrb[0].mxu0
      %v488 = vadd.f32 0.0, %v487
      %v489 = vpop.f32.mrb[0].mxu0
      %490 = vmatprep.mubr.f32.mxu0 0.0
      %491 = vmatmul.mubr.f32.gmra.mrb[0].mxu0 %v389
      %v492 = vpop.f32.mrb[0].mxu0
      %v493 = vadd.f32 0.0, %v492
      %v494 = vpop.f32.mrb[0].mxu0
      %495 = vdwg.mxu0
      %v496 = vadd.f32 %v320, %v458
      %v497 = vadd.f32 %v325, %v463
      %v498 = vadd.f32 %v330, %v468
      %v499 = vadd.f32 %v335, %v473
      %v500 = vadd.f32 %v340, %v478
      %v501 = vadd.f32 %v345, %v483
      %v502 = vadd.f32 %v350, %v488
      %v503 = vadd.f32 %v355, %v493
      %s504 = scalar_lea.vmem %s2, 64
      %v505 = vld [vmem:[%s504] sm:$0xff]
      %v506 = vld [vmem:[%s504 + $0x8] sm:$0xff]
      %v507 = vld [vmem:[%s504 + $0x10] sm:$0xff]
      %v508 = vld [vmem:[%s504 + $0x18] sm:$0xff]
      %v509 = vld [vmem:[%s504 + $0x20] sm:$0xff]
      %v510 = vld [vmem:[%s504 + $0x28] sm:$0xff]
      %v511 = vld [vmem:[%s504 + $0x30] sm:$0xff]
      %v512 = vld [vmem:[%s504 + $0x38] sm:$0xff]
      %v514 = vsel %vm366, %v206, 0
      %v517 = vsel %vm366, %v207, 0
      %v520 = vsel %vm366, %v208, 0
      %v523 = vsel %vm366, %v209, 0
      %v526 = vsel %vm366, %v210, 0
      %v529 = vsel %vm366, %v211, 0
      %v532 = vsel %vm366, %v212, 0
      %v535 = vsel %vm366, %v213, 0
      %537 = vmatprep.subr.mxu0 0.0
      %538 = vmatpush1.msra.mxu0 %v505
      %539 = vmatprep.subr.mxu0 0.0
      %540 = vmatpush1.msra.mxu0 %v506
      %541 = vmatprep.subr.mxu0 0.0
      %542 = vmatpush1.msra.mxu0 %v507
      %543 = vmatprep.subr.mxu0 0.0
      %544 = vmatpush1.msra.mxu0 %v508
      %545 = vmatprep.subr.mxu0 0.0
      %546 = vmatpush1.msra.mxu0 %v509
      %547 = vmatprep.subr.mxu0 0.0
      %548 = vmatpush1.msra.mxu0 %v510
      %549 = vmatprep.subr.mxu0 0.0
      %550 = vmatpush1.msra.mxu0 %v511
      %551 = vmatprep.subr.mxu0 0.0
      %552 = vmatpush1.msra.mxu0 %v512
      %553 = vmatprep.subr.mxu0 0.0
      %554 = vmatpush1.msra.mxu0 0.0
      %555 = vmatprep.subr.mxu0 0.0
      %556 = vmatpush1.msra.mxu0 0.0
      %557 = vmatprep.subr.mxu0 0.0
      %558 = vmatpush1.msra.mxu0 0.0
      %559 = vmatprep.subr.mxu0 0.0
      %560 = vmatpush1.msra.mxu0 0.0
      %561 = vmatprep.subr.mxu0 0.0
      %562 = vmatpush1.msra.mxu0 0.0
      %563 = vmatprep.subr.mxu0 0.0
      %564 = vmatpush1.msra.mxu0 0.0
      %565 = vmatprep.subr.mxu0 0.0
      %566 = vmatpush1.msra.mxu0 0.0
      %567 = vmatprep.subr.mxu0 0.0
      %568 = vmatpush1.msra.mxu0 0.0
      %569 = vmatprep.subr.mxu0 0.0
      %570 = vmatpush1.msra.mxu0 0.0
      %571 = vmatprep.subr.mxu0 0.0
      %572 = vmatpush1.msra.mxu0 0.0
      %573 = vmatprep.subr.mxu0 0.0
      %574 = vmatpush1.msra.mxu0 0.0
      %575 = vmatprep.subr.mxu0 0.0
      %576 = vmatpush1.msra.mxu0 0.0
      %577 = vmatprep.subr.mxu0 0.0
      %578 = vmatpush1.msra.mxu0 0.0
      %579 = vmatprep.subr.mxu0 0.0
      %580 = vmatpush1.msra.mxu0 0.0
      %581 = vmatprep.subr.mxu0 0.0
      %582 = vmatpush1.msra.mxu0 0.0
      %583 = vmatprep.subr.mxu0 0.0
      %584 = vmatpush1.msra.mxu0 0.0
      %585 = vmatprep.subr.mxu0 0.0
      %586 = vmatpush1.msra.mxu0 0.0
      %587 = vmatprep.subr.mxu0 0.0
      %588 = vmatpush1.msra.mxu0 0.0
      %589 = vmatprep.subr.mxu0 0.0
      %590 = vmatpush1.msra.mxu0 0.0
      %591 = vmatprep.subr.mxu0 0.0
      %592 = vmatpush1.msra.mxu0 0.0
      %593 = vmatprep.subr.mxu0 0.0
      %594 = vmatpush1.msra.mxu0 0.0
      %595 = vmatprep.subr.mxu0 0.0
      %596 = vmatpush1.msra.mxu0 0.0
      %597 = vmatprep.subr.mxu0 0.0
      %598 = vmatpush1.msra.mxu0 0.0
      %599 = vmatprep.subr.mxu0 0.0
      %600 = vmatpush1.msra.mxu0 0.0
      %601 = vmatprep.mubr.f32.mxu0 0.0
      %602 = vmatmul.mubr.f32.gmra.mrb[0].mxu0 %v514
      %v603 = vpop.f32.mrb[0].mxu0
      %v604 = vadd.f32 0.0, %v603
      %v605 = vpop.f32.mrb[0].mxu0
      %606 = vmatprep.mubr.f32.mxu0 0.0
      %607 = vmatmul.mubr.f32.gmra.mrb[0].mxu0 %v517
      %v608 = vpop.f32.mrb[0].mxu0
      %v609 = vadd.f32 0.0, %v608
      %v610 = vpop.f32.mrb[0].mxu0
      %611 = vmatprep.mubr.f32.mxu0 0.0
      %612 = vmatmul.mubr.f32.gmra.mrb[0].mxu0 %v520
      %v613 = vpop.f32.mrb[0].mxu0
      %v614 = vadd.f32 0.0, %v613
      %v615 = vpop.f32.mrb[0].mxu0
      %616 = vmatprep.mubr.f32.mxu0 0.0
      %617 = vmatmul.mubr.f32.gmra.mrb[0].mxu0 %v523
      %v618 = vpop.f32.mrb[0].mxu0
      %v619 = vadd.f32 0.0, %v618
      %v620 = vpop.f32.mrb[0].mxu0
      %621 = vmatprep.mubr.f32.mxu0 0.0
      %622 = vmatmul.mubr.f32.gmra.mrb[0].mxu0 %v526
      %v623 = vpop.f32.mrb[0].mxu0
      %v624 = vadd.f32 0.0, %v623
      %v625 = vpop.f32.mrb[0].mxu0
      %626 = vmatprep.mubr.f32.mxu0 0.0
      %627 = vmatmul.mubr.f32.gmra.mrb[0].mxu0 %v529
      %v628 = vpop.f32.mrb[0].mxu0
      %v629 = vadd.f32 0.0, %v628
      %v630 = vpop.f32.mrb[0].mxu0
      %631 = vmatprep.mubr.f32.mxu0 0.0
      %632 = vmatmul.mubr.f32.gmra.mrb[0].mxu0 %v532
      %v633 = vpop.f32.mrb[0].mxu0
      %v634 = vadd.f32 0.0, %v633
      %v635 = vpop.f32.mrb[0].mxu0
      %636 = vmatprep.mubr.f32.mxu0 0.0
      %637 = vmatmul.mubr.f32.gmra.mrb[0].mxu0 %v535
      %v638 = vpop.f32.mrb[0].mxu0
      %v639 = vadd.f32 0.0, %v638
      %v640 = vpop.f32.mrb[0].mxu0
      %641 = vdwg.mxu0
      %v642 = vadd.f32 %v496, %v604
      %v643 = vadd.f32 %v497, %v609
      %v644 = vadd.f32 %v498, %v614
      %v645 = vadd.f32 %v499, %v619
      %v646 = vadd.f32 %v500, %v624
      %v647 = vadd.f32 %v501, %v629
      %v648 = vadd.f32 %v502, %v634
      %v649 = vadd.f32 %v503, %v639
      %s650 = scalar_lea.vmem %s2, 128
      %v651 = vld [vmem:[%s650] sm:$0xff]
      %v652 = vld [vmem:[%s650 + $0x8] sm:$0xff]
      %v653 = vld [vmem:[%s650 + $0x10] sm:$0xff]
      %v654 = vld [vmem:[%s650 + $0x18] sm:$0xff]
      %v655 = vld [vmem:[%s650 + $0x20] sm:$0xff]
      %v656 = vld [vmem:[%s650 + $0x28] sm:$0xff]
      %v657 = vld [vmem:[%s650 + $0x30] sm:$0xff]
      %v658 = vld [vmem:[%s650 + $0x38] sm:$0xff]
      %v660 = vsel %vm366, %v214, 0
      %v663 = vsel %vm366, %v215, 0
      %v666 = vsel %vm366, %v216, 0
      %v669 = vsel %vm366, %v217, 0
      %v672 = vsel %vm366, %v218, 0
      %v675 = vsel %vm366, %v219, 0
      %v678 = vsel %vm366, %v220, 0
      %v681 = vsel %vm366, %v221, 0
      %683 = vmatprep.subr.mxu0 0.0
      %684 = vmatpush1.msra.mxu0 %v651
      %685 = vmatprep.subr.mxu0 0.0
      %686 = vmatpush1.msra.mxu0 %v652
      %687 = vmatprep.subr.mxu0 0.0
      %688 = vmatpush1.msra.mxu0 %v653
      %689 = vmatprep.subr.mxu0 0.0
      %690 = vmatpush1.msra.mxu0 %v654
      %691 = vmatprep.subr.mxu0 0.0
      %692 = vmatpush1.msra.mxu0 %v655
      %693 = vmatprep.subr.mxu0 0.0
      %694 = vmatpush1.msra.mxu0 %v656
      %695 = vmatprep.subr.mxu0 0.0
      %696 = vmatpush1.msra.mxu0 %v657
      %697 = vmatprep.subr.mxu0 0.0
      %698 = vmatpush1.msra.mxu0 %v658
      %699 = vmatprep.subr.mxu0 0.0
      %700 = vmatpush1.msra.mxu0 0.0
      %701 = vmatprep.subr.mxu0 0.0
      %702 = vmatpush1.msra.mxu0 0.0
      %703 = vmatprep.subr.mxu0 0.0
      %704 = vmatpush1.msra.mxu0 0.0
      %705 = vmatprep.subr.mxu0 0.0
      %706 = vmatpush1.msra.mxu0 0.0
      %707 = vmatprep.subr.mxu0 0.0
      %708 = vmatpush1.msra.mxu0 0.0
      %709 = vmatprep.subr.mxu0 0.0
      %710 = vmatpush1.msra.mxu0 0.0
      %711 = vmatprep.subr.mxu0 0.0
      %712 = vmatpush1.msra.mxu0 0.0
      %713 = vmatprep.subr.mxu0 0.0
      %714 = vmatpush1.msra.mxu0 0.0
      %715 = vmatprep.subr.mxu0 0.0
      %716 = vmatpush1.msra.mxu0 0.0
      %717 = vmatprep.subr.mxu0 0.0
      %718 = vmatpush1.msra.mxu0 0.0
      %719 = vmatprep.subr.mxu0 0.0
      %720 = vmatpush1.msra.mxu0 0.0
      %721 = vmatprep.subr.mxu0 0.0
      %722 = vmatpush1.msra.mxu0 0.0
      %723 = vmatprep.subr.mxu0 0.0
      %724 = vmatpush1.msra.mxu0 0.0
      %725 = vmatprep.subr.mxu0 0.0
      %726 = vmatpush1.msra.mxu0 0.0
      %727 = vmatprep.subr.mxu0 0.0
      %728 = vmatpush1.msra.mxu0 0.0
      %729 = vmatprep.subr.mxu0 0.0
      %730 = vmatpush1.msra.mxu0 0.0
      %731 = vmatprep.subr.mxu0 0.0
      %732 = vmatpush1.msra.mxu0 0.0
      %733 = vmatprep.subr.mxu0 0.0
      %734 = vmatpush1.msra.mxu0 0.0
      %735 = vmatprep.subr.mxu0 0.0
      %736 = vmatpush1.msra.mxu0 0.0
      %737 = vmatprep.subr.mxu0 0.0
      %738 = vmatpush1.msra.mxu0 0.0
      %739 = vmatprep.subr.mxu0 0.0
      %740 = vmatpush1.msra.mxu0 0.0
      %741 = vmatprep.subr.mxu0 0.0
      %742 = vmatpush1.msra.mxu0 0.0
      %743 = vmatprep.subr.mxu0 0.0
      %744 = vmatpush1.msra.mxu0 0.0
      %745 = vmatprep.subr.mxu0 0.0
      %746 = vmatpush1.msra.mxu0 0.0
      %747 = vmatprep.mubr.f32.mxu0 0.0
      %748 = vmatmul.mubr.f32.gmra.mrb[0].mxu0 %v660
      %v749 = vpop.f32.mrb[0].mxu0
      %v750 = vadd.f32 0.0, %v749
      %v751 = vpop.f32.mrb[0].mxu0
      %752 = vmatprep.mubr.f32.mxu0 0.0
      %753 = vmatmul.mubr.f32.gmra.mrb[0].mxu0 %v663
      %v754 = vpop.f32.mrb[0].mxu0
      %v755 = vadd.f32 0.0, %v754
      %v756 = vpop.f32.mrb[0].mxu0
      %757 = vmatprep.mubr.f32.mxu0 0.0
      %758 = vmatmul.mubr.f32.gmra.mrb[0].mxu0 %v666
      %v759 = vpop.f32.mrb[0].mxu0
      %v760 = vadd.f32 0.0, %v759
      %v761 = vpop.f32.mrb[0].mxu0
      %762 = vmatprep.mubr.f32.mxu0 0.0
      %763 = vmatmul.mubr.f32.gmra.mrb[0].mxu0 %v669
      %v764 = vpop.f32.mrb[0].mxu0
      %v765 = vadd.f32 0.0, %v764
      %v766 = vpop.f32.mrb[0].mxu0
      %767 = vmatprep.mubr.f32.mxu0 0.0
      %768 = vmatmul.mubr.f32.gmra.mrb[0].mxu0 %v672
      %v769 = vpop.f32.mrb[0].mxu0
      %v770 = vadd.f32 0.0, %v769
      %v771 = vpop.f32.mrb[0].mxu0
      %772 = vmatprep.mubr.f32.mxu0 0.0
      %773 = vmatmul.mubr.f32.gmra.mrb[0].mxu0 %v675
      %v774 = vpop.f32.mrb[0].mxu0
      %v775 = vadd.f32 0.0, %v774
      %v776 = vpop.f32.mrb[0].mxu0
      %777 = vmatprep.mubr.f32.mxu0 0.0
      %778 = vmatmul.mubr.f32.gmra.mrb[0].mxu0 %v678
      %v779 = vpop.f32.mrb[0].mxu0
      %v780 = vadd.f32 0.0, %v779
      %v781 = vpop.f32.mrb[0].mxu0
      %782 = vmatprep.mubr.f32.mxu0 0.0
      %783 = vmatmul.mubr.f32.gmra.mrb[0].mxu0 %v681
      %v784 = vpop.f32.mrb[0].mxu0
      %v785 = vadd.f32 0.0, %v784
      %v786 = vpop.f32.mrb[0].mxu0
      %787 = vdwg.mxu0
      %v788 = vadd.f32 %v642, %v750
      %v789 = vadd.f32 %v643, %v755
      %v790 = vadd.f32 %v644, %v760
      %v791 = vadd.f32 %v645, %v765
      %v792 = vadd.f32 %v646, %v770
      %v793 = vadd.f32 %v647, %v775
      %v794 = vadd.f32 %v648, %v780
      %v795 = vadd.f32 %v649, %v785
      %s796 = scalar_lea.vmem %s2, 192
      %v797 = vld [vmem:[%s796] sm:$0xff]
      %v798 = vld [vmem:[%s796 + $0x8] sm:$0xff]
      %v799 = vld [vmem:[%s796 + $0x10] sm:$0xff]
      %v800 = vld [vmem:[%s796 + $0x18] sm:$0xff]
      %v801 = vld [vmem:[%s796 + $0x20] sm:$0xff]
      %v802 = vld [vmem:[%s796 + $0x28] sm:$0xff]
      %v803 = vld [vmem:[%s796 + $0x30] sm:$0xff]
      %v804 = vld [vmem:[%s796 + $0x38] sm:$0xff]
      %v806 = vsel %vm366, %v222, 0
      %v809 = vsel %vm366, %v223, 0
      %v812 = vsel %vm366, %v224, 0
      %v815 = vsel %vm366, %v225, 0
      %v818 = vsel %vm366, %v226, 0
      %v821 = vsel %vm366, %v227, 0
      %v824 = vsel %vm366, %v228, 0
      %v827 = vsel %vm366, %v229, 0
      %829 = vmatprep.subr.mxu0 0.0
      %830 = vmatpush1.msra.mxu0 %v797
      %831 = vmatprep.subr.mxu0 0.0
      %832 = vmatpush1.msra.mxu0 %v798
      %833 = vmatprep.subr.mxu0 0.0
      %834 = vmatpush1.msra.mxu0 %v799
      %835 = vmatprep.subr.mxu0 0.0
      %836 = vmatpush1.msra.mxu0 %v800
      %837 = vmatprep.subr.mxu0 0.0
      %838 = vmatpush1.msra.mxu0 %v801
      %839 = vmatprep.subr.mxu0 0.0
      %840 = vmatpush1.msra.mxu0 %v802
      %841 = vmatprep.subr.mxu0 0.0
      %842 = vmatpush1.msra.mxu0 %v803
      %843 = vmatprep.subr.mxu0 0.0
      %844 = vmatpush1.msra.mxu0 %v804
      %845 = vmatprep.subr.mxu0 0.0
      %846 = vmatpush1.msra.mxu0 0.0
      %847 = vmatprep.subr.mxu0 0.0
      %848 = vmatpush1.msra.mxu0 0.0
      %849 = vmatprep.subr.mxu0 0.0
      %850 = vmatpush1.msra.mxu0 0.0
      %851 = vmatprep.subr.mxu0 0.0
      %852 = vmatpush1.msra.mxu0 0.0
      %853 = vmatprep.subr.mxu0 0.0
      %854 = vmatpush1.msra.mxu0 0.0
      %855 = vmatprep.subr.mxu0 0.0
      %856 = vmatpush1.msra.mxu0 0.0
      %857 = vmatprep.subr.mxu0 0.0
      %858 = vmatpush1.msra.mxu0 0.0
      %859 = vmatprep.subr.mxu0 0.0
      %860 = vmatpush1.msra.mxu0 0.0
      %861 = vmatprep.subr.mxu0 0.0
      %862 = vmatpush1.msra.mxu0 0.0
      %863 = vmatprep.subr.mxu0 0.0
      %864 = vmatpush1.msra.mxu0 0.0
      %865 = vmatprep.subr.mxu0 0.0
      %866 = vmatpush1.msra.mxu0 0.0
      %867 = vmatprep.subr.mxu0 0.0
      %868 = vmatpush1.msra.mxu0 0.0
      %869 = vmatprep.subr.mxu0 0.0
      %870 = vmatpush1.msra.mxu0 0.0
      %871 = vmatprep.subr.mxu0 0.0
      %872 = vmatpush1.msra.mxu0 0.0
      %873 = vmatprep.subr.mxu0 0.0
      %874 = vmatpush1.msra.mxu0 0.0
      %875 = vmatprep.subr.mxu0 0.0
      %876 = vmatpush1.msra.mxu0 0.0
      %877 = vmatprep.subr.mxu0 0.0
      %878 = vmatpush1.msra.mxu0 0.0
      %879 = vmatprep.subr.mxu0 0.0
      %880 = vmatpush1.msra.mxu0 0.0
      %881 = vmatprep.subr.mxu0 0.0
      %882 = vmatpush1.msra.mxu0 0.0
      %883 = vmatprep.subr.mxu0 0.0
      %884 = vmatpush1.msra.mxu0 0.0
      %885 = vmatprep.subr.mxu0 0.0
      %886 = vmatpush1.msra.mxu0 0.0
      %887 = vmatprep.subr.mxu0 0.0
      %888 = vmatpush1.msra.mxu0 0.0
      %889 = vmatprep.subr.mxu0 0.0
      %890 = vmatpush1.msra.mxu0 0.0
      %891 = vmatprep.subr.mxu0 0.0
      %892 = vmatpush1.msra.mxu0 0.0
      %893 = vmatprep.mubr.f32.mxu0 0.0
      %894 = vmatmul.mubr.f32.gmra.mrb[0].mxu0 %v806
      %v895 = vpop.f32.mrb[0].mxu0
      %v896 = vadd.f32 0.0, %v895
      %v897 = vpop.f32.mrb[0].mxu0
      %898 = vmatprep.mubr.f32.mxu0 0.0
      %899 = vmatmul.mubr.f32.gmra.mrb[0].mxu0 %v809
      %v900 = vpop.f32.mrb[0].mxu0
      %v901 = vadd.f32 0.0, %v900
      %v902 = vpop.f32.mrb[0].mxu0
      %903 = vmatprep.mubr.f32.mxu0 0.0
      %904 = vmatmul.mubr.f32.gmra.mrb[0].mxu0 %v812
      %v905 = vpop.f32.mrb[0].mxu0
      %v906 = vadd.f32 0.0, %v905
      %v907 = vpop.f32.mrb[0].mxu0
      %908 = vmatprep.mubr.f32.mxu0 0.0
      %909 = vmatmul.mubr.f32.gmra.mrb[0].mxu0 %v815
      %v910 = vpop.f32.mrb[0].mxu0
      %v911 = vadd.f32 0.0, %v910
      %v912 = vpop.f32.mrb[0].mxu0
      %913 = vmatprep.mubr.f32.mxu0 0.0
      %914 = vmatmul.mubr.f32.gmra.mrb[0].mxu0 %v818
      %v915 = vpop.f32.mrb[0].mxu0
      %v916 = vadd.f32 0.0, %v915
      %v917 = vpop.f32.mrb[0].mxu0
      %918 = vmatprep.mubr.f32.mxu0 0.0
      %919 = vmatmul.mubr.f32.gmra.mrb[0].mxu0 %v821
      %v920 = vpop.f32.mrb[0].mxu0
      %v921 = vadd.f32 0.0, %v920
      %v922 = vpop.f32.mrb[0].mxu0
      %923 = vmatprep.mubr.f32.mxu0 0.0
      %924 = vmatmul.mubr.f32.gmra.mrb[0].mxu0 %v824
      %v925 = vpop.f32.mrb[0].mxu0
      %v926 = vadd.f32 0.0, %v925
      %v927 = vpop.f32.mrb[0].mxu0
      %928 = vmatprep.mubr.f32.mxu0 0.0
      %929 = vmatmul.mubr.f32.gmra.mrb[0].mxu0 %v827
      %v930 = vpop.f32.mrb[0].mxu0
      %v931 = vadd.f32 0.0, %v930
      %v932 = vpop.f32.mrb[0].mxu0
      %933 = vdwg.mxu0
      %v934 = vadd.f32 %v788, %v896
      %v935 = vadd.f32 %v789, %v901
      %v936 = vadd.f32 %v790, %v906
      %v937 = vadd.f32 %v791, %v911
      %v938 = vadd.f32 %v792, %v916
      %v939 = vadd.f32 %v793, %v921
      %v940 = vadd.f32 %v794, %v926
      %v941 = vadd.f32 %v795, %v931
      %942 = vst.msk [vmem:[%s197] sm:$0xff] %vm366, %v934
      %943 = vst.msk [vmem:[%s197 + $0x8] sm:$0xff] %vm366, %v935
      %944 = vst.msk [vmem:[%s197 + $0x10] sm:$0xff] %vm366, %v936
      %945 = vst.msk [vmem:[%s197 + $0x18] sm:$0xff] %vm366, %v937
      %946 = vst.msk [vmem:[%s197 + $0x20] sm:$0xff] %vm366, %v938
      %947 = vst.msk [vmem:[%s197 + $0x28] sm:$0xff] %vm366, %v939
      %948 = vst.msk [vmem:[%s197 + $0x30] sm:$0xff] %vm366, %v940
      %949 = vst.msk [vmem:[%s197 + $0x38] sm:$0xff] %vm366, %v941
      %s950 = scalar_lea.vmem %s1, 128
      %v951 = vld [vmem:[%s950] sm:$0xff]
      %v952 = vld [vmem:[%s950 + $0x8] sm:$0xff]
      %v953 = vld [vmem:[%s950 + $0x10] sm:$0xff]
      %v954 = vld [vmem:[%s950 + $0x18] sm:$0xff]
      %v955 = vld [vmem:[%s950 + $0x20] sm:$0xff]
      %v956 = vld [vmem:[%s950 + $0x28] sm:$0xff]
      %v957 = vld [vmem:[%s950 + $0x30] sm:$0xff]
      %v958 = vld [vmem:[%s950 + $0x38] sm:$0xff]
      %v959 = vld [vmem:[%s950 + $0x40] sm:$0xff]
      %v960 = vld [vmem:[%s950 + $0x48] sm:$0xff]
      %v961 = vld [vmem:[%s950 + $0x50] sm:$0xff]
      %v962 = vld [vmem:[%s950 + $0x58] sm:$0xff]
      %v963 = vld [vmem:[%s950 + $0x60] sm:$0xff]
      %v964 = vld [vmem:[%s950 + $0x68] sm:$0xff]
      %v965 = vld [vmem:[%s950 + $0x70] sm:$0xff]
      %v966 = vld [vmem:[%s950 + $0x78] sm:$0xff]
      %s967 = scalar_lea.vmem %s3, 1
      %v968 = vld [vmem:[%s967] sm:$0x1]
      %v970 = vlaneseq
      %v971 = vshrl.u32 %v970, 7
      %v972 = vsub.s32 0, %v971
      %v973 = vrot.slane %v968, %v972
      %975 = vmatprep.subr.mxu0 0.0
      %976 = vmatpush1.msra.mxu0 %v198
      %977 = vmatprep.subr.mxu0 0.0
      %978 = vmatpush1.msra.mxu0 %v199
      %979 = vmatprep.subr.mxu0 0.0
      %980 = vmatpush1.msra.mxu0 %v200
      %981 = vmatprep.subr.mxu0 0.0
      %982 = vmatpush1.msra.mxu0 %v201
      %983 = vmatprep.subr.mxu0 0.0
      %984 = vmatpush1.msra.mxu0 %v202
      %985 = vmatprep.subr.mxu0 0.0
      %986 = vmatpush1.msra.mxu0 %v203
      %987 = vmatprep.subr.mxu0 0.0
      %988 = vmatpush1.msra.mxu0 %v204
      %989 = vmatprep.subr.mxu0 0.0
      %990 = vmatpush1.msra.mxu0 %v205
      %991 = vmatprep.subr.mxu0 0.0
      %992 = vmatpush1.msra.mxu0 %v206
      %993 = vmatprep.subr.mxu0 0.0
      %994 = vmatpush1.msra.mxu0 %v207
      %995 = vmatprep.subr.mxu0 0.0
      %996 = vmatpush1.msra.mxu0 %v208
      %997 = vmatprep.subr.mxu0 0.0
      %998 = vmatpush1.msra.mxu0 %v209
      %999 = vmatprep.subr.mxu0 0.0
      %1000 = vmatpush1.msra.mxu0 %v210
      %1001 = vmatprep.subr.mxu0 0.0
      %1002 = vmatpush1.msra.mxu0 %v211
      %1003 = vmatprep.subr.mxu0 0.0
      %1004 = vmatpush1.msra.mxu0 %v212
      %1005 = vmatprep.subr.mxu0 0.0
      %1006 = vmatpush1.msra.mxu0 %v213
      %1007 = vmatprep.subr.mxu0 0.0
      %1008 = vmatpush1.msra.mxu0 %v214
      %1009 = vmatprep.subr.mxu0 0.0
      %1010 = vmatpush1.msra.mxu0 %v215
      %1011 = vmatprep.subr.mxu0 0.0
      %1012 = vmatpush1.msra.mxu0 %v216
      %1013 = vmatprep.subr.mxu0 0.0
      %1014 = vmatpush1.msra.mxu0 %v217
      %1015 = vmatprep.subr.mxu0 0.0
      %1016 = vmatpush1.msra.mxu0 %v218
      %1017 = vmatprep.subr.mxu0 0.0
      %1018 = vmatpush1.msra.mxu0 %v219
      %1019 = vmatprep.subr.mxu0 0.0
      %1020 = vmatpush1.msra.mxu0 %v220
      %1021 = vmatprep.subr.mxu0 0.0
      %1022 = vmatpush1.msra.mxu0 %v221
      %1023 = vmatprep.subr.mxu0 0.0
      %1024 = vmatpush1.msra.mxu0 %v222
      %1025 = vmatprep.subr.mxu0 0.0
      %1026 = vmatpush1.msra.mxu0 %v223
      %1027 = vmatprep.subr.mxu0 0.0
      %1028 = vmatpush1.msra.mxu0 %v224
      %1029 = vmatprep.subr.mxu0 0.0
      %1030 = vmatpush1.msra.mxu0 %v225
      %1031 = vmatprep.subr.mxu0 0.0
      %1032 = vmatpush1.msra.mxu0 %v226
      %1033 = vmatprep.subr.mxu0 0.0
      %1034 = vmatpush1.msra.mxu0 %v227
      %1035 = vmatprep.subr.mxu0 0.0
      %1036 = vmatpush1.msra.mxu0 %v228
      %1037 = vmatprep.subr.mxu0 0.0
      %1038 = vmatpush1.msra.mxu0 %v229
      %1039 = vmatprep.mubr.f32.mxu0 %v952
      %1040 = vmatmul.mubr.f32.gmra.mrb[0].mxu0 %v951
      %v1041 = vpop.f32.mrb[0].mxu0
      %v1042 = vadd.f32 %v973, %v1041
      %v1043 = vpop.f32.mrb[0].mxu0
      %1044 = vmatprep.mubr.f32.mxu0 %v954
      %1045 = vmatmul.mubr.f32.gmra.mrb[0].mxu0 %v953
      %v1046 = vpop.f32.mrb[0].mxu0
      %v1047 = vadd.f32 %v973, %v1046
      %v1048 = vpop.f32.mrb[0].mxu0
      %1049 = vmatprep.mubr.f32.mxu0 %v956
      %1050 = vmatmul.mubr.f32.gmra.mrb[0].mxu0 %v955
      %v1051 = vpop.f32.mrb[0].mxu0
      %v1052 = vadd.f32 %v973, %v1051
      %v1053 = vpop.f32.mrb[0].mxu0
      %1054 = vmatprep.mubr.f32.mxu0 %v958
      %1055 = vmatmul.mubr.f32.gmra.mrb[0].mxu0 %v957
      %v1056 = vpop.f32.mrb[0].mxu0
      %v1057 = vadd.f32 %v973, %v1056
      %v1058 = vpop.f32.mrb[0].mxu0
      %1059 = vmatprep.mubr.f32.mxu0 %v960
      %1060 = vmatmul.mubr.f32.gmra.mrb[0].mxu0 %v959
      %v1061 = vpop.f32.mrb[0].mxu0
      %v1062 = vadd.f32 %v973, %v1061
      %v1063 = vpop.f32.mrb[0].mxu0
      %1064 = vmatprep.mubr.f32.mxu0 %v962
      %1065 = vmatmul.mubr.f32.gmra.mrb[0].mxu0 %v961
      %v1066 = vpop.f32.mrb[0].mxu0
      %v1067 = vadd.f32 %v973, %v1066
      %v1068 = vpop.f32.mrb[0].mxu0
      %1069 = vmatprep.mubr.f32.mxu0 %v964
      %1070 = vmatmul.mubr.f32.gmra.mrb[0].mxu0 %v963
      %v1071 = vpop.f32.mrb[0].mxu0
      %v1072 = vadd.f32 %v973, %v1071
      %v1073 = vpop.f32.mrb[0].mxu0
      %1074 = vmatprep.mubr.f32.mxu0 %v966
      %1075 = vmatmul.mubr.f32.gmra.mrb[0].mxu0 %v965
      %v1076 = vpop.f32.mrb[0].mxu0
      %v1077 = vadd.f32 %v973, %v1076
      %v1078 = vpop.f32.mrb[0].mxu0
      %1079 = vdwg.mxu0
      %s1080 = scalar_lea.vmem %s2, 256
      %v1081 = vld [vmem:[%s1080] sm:$0xff]
      %v1082 = vld [vmem:[%s1080 + $0x8] sm:$0xff]
      %v1083 = vld [vmem:[%s1080 + $0x10] sm:$0xff]
      %v1084 = vld [vmem:[%s1080 + $0x18] sm:$0xff]
      %v1085 = vld [vmem:[%s1080 + $0x20] sm:$0xff]
      %v1086 = vld [vmem:[%s1080 + $0x28] sm:$0xff]
      %v1087 = vld [vmem:[%s1080 + $0x30] sm:$0xff]
      %v1088 = vld [vmem:[%s1080 + $0x38] sm:$0xff]
      %1089 = vmatprep.subr.mxu0 0.0
      %1090 = vmatpush1.msra.mxu0 %v1081
      %1091 = vmatprep.subr.mxu0 0.0
      %1092 = vmatpush1.msra.mxu0 %v1082
      %1093 = vmatprep.subr.mxu0 0.0
      %1094 = vmatpush1.msra.mxu0 %v1083
      %1095 = vmatprep.subr.mxu0 0.0
      %1096 = vmatpush1.msra.mxu0 %v1084
      %1097 = vmatprep.subr.mxu0 0.0
      %1098 = vmatpush1.msra.mxu0 %v1085
      %1099 = vmatprep.subr.mxu0 0.0
      %1100 = vmatpush1.msra.mxu0 %v1086
      %1101 = vmatprep.subr.mxu0 0.0
      %1102 = vmatpush1.msra.mxu0 %v1087
      %1103 = vmatprep.subr.mxu0 0.0
      %1104 = vmatpush1.msra.mxu0 %v1088
      %1105 = vmatprep.subr.mxu0 0.0
      %1106 = vmatpush1.msra.mxu0 0.0
      %1107 = vmatprep.subr.mxu0 0.0
      %1108 = vmatpush1.msra.mxu0 0.0
      %1109 = vmatprep.subr.mxu0 0.0
      %1110 = vmatpush1.msra.mxu0 0.0
      %1111 = vmatprep.subr.mxu0 0.0
      %1112 = vmatpush1.msra.mxu0 0.0
      %1113 = vmatprep.subr.mxu0 0.0
      %1114 = vmatpush1.msra.mxu0 0.0
      %1115 = vmatprep.subr.mxu0 0.0
      %1116 = vmatpush1.msra.mxu0 0.0
      %1117 = vmatprep.subr.mxu0 0.0
      %1118 = vmatpush1.msra.mxu0 0.0
      %1119 = vmatprep.subr.mxu0 0.0
      %1120 = vmatpush1.msra.mxu0 0.0
      %1121 = vmatprep.subr.mxu0 0.0
      %1122 = vmatpush1.msra.mxu0 0.0
      %1123 = vmatprep.subr.mxu0 0.0
      %1124 = vmatpush1.msra.mxu0 0.0
      %1125 = vmatprep.subr.mxu0 0.0
      %1126 = vmatpush1.msra.mxu0 0.0
      %1127 = vmatprep.subr.mxu0 0.0
      %1128 = vmatpush1.msra.mxu0 0.0
      %1129 = vmatprep.subr.mxu0 0.0
      %1130 = vmatpush1.msra.mxu0 0.0
      %1131 = vmatprep.subr.mxu0 0.0
      %1132 = vmatpush1.msra.mxu0 0.0
      %1133 = vmatprep.subr.mxu0 0.0
      %1134 = vmatpush1.msra.mxu0 0.0
      %1135 = vmatprep.subr.mxu0 0.0
      %1136 = vmatpush1.msra.mxu0 0.0
      %1137 = vmatprep.subr.mxu0 0.0
      %1138 = vmatpush1.msra.mxu0 0.0
      %1139 = vmatprep.subr.mxu0 0.0
      %1140 = vmatpush1.msra.mxu0 0.0
      %1141 = vmatprep.subr.mxu0 0.0
      %1142 = vmatpush1.msra.mxu0 0.0
      %1143 = vmatprep.subr.mxu0 0.0
      %1144 = vmatpush1.msra.mxu0 0.0
      %1145 = vmatprep.subr.mxu0 0.0
      %1146 = vmatpush1.msra.mxu0 0.0
      %1147 = vmatprep.subr.mxu0 0.0
      %1148 = vmatpush1.msra.mxu0 0.0
      %1149 = vmatprep.subr.mxu0 0.0
      %1150 = vmatpush1.msra.mxu0 0.0
      %1151 = vmatprep.subr.mxu0 0.0
      %1152 = vmatpush1.msra.mxu0 0.0
      %1153 = vmatprep.mubr.f32.mxu0 0.0
      %1154 = vmatmul.mubr.f32.gmra.mrb[0].mxu0 %v368
      %v1155 = vpop.f32.mrb[0].mxu0
      %v1156 = vadd.f32 0.0, %v1155
      %v1157 = vpop.f32.mrb[0].mxu0
      %1158 = vmatprep.mubr.f32.mxu0 0.0
      %1159 = vmatmul.mubr.f32.gmra.mrb[0].mxu0 %v371
      %v1160 = vpop.f32.mrb[0].mxu0
      %v1161 = vadd.f32 0.0, %v1160
      %v1162 = vpop.f32.mrb[0].mxu0
      %1163 = vmatprep.mubr.f32.mxu0 0.0
      %1164 = vmatmul.mubr.f32.gmra.mrb[0].mxu0 %v374
      %v1165 = vpop.f32.mrb[0].mxu0
      %v1166 = vadd.f32 0.0, %v1165
      %v1167 = vpop.f32.mrb[0].mxu0
      %1168 = vmatprep.mubr.f32.mxu0 0.0
      %1169 = vmatmul.mubr.f32.gmra.mrb[0].mxu0 %v377
      %v1170 = vpop.f32.mrb[0].mxu0
      %v1171 = vadd.f32 0.0, %v1170
      %v1172 = vpop.f32.mrb[0].mxu0
      %1173 = vmatprep.mubr.f32.mxu0 0.0
      %1174 = vmatmul.mubr.f32.gmra.mrb[0].mxu0 %v380
      %v1175 = vpop.f32.mrb[0].mxu0
      %v1176 = vadd.f32 0.0, %v1175
      %v1177 = vpop.f32.mrb[0].mxu0
      %1178 = vmatprep.mubr.f32.mxu0 0.0
      %1179 = vmatmul.mubr.f32.gmra.mrb[0].mxu0 %v383
      %v1180 = vpop.f32.mrb[0].mxu0
      %v1181 = vadd.f32 0.0, %v1180
      %v1182 = vpop.f32.mrb[0].mxu0
      %1183 = vmatprep.mubr.f32.mxu0 0.0
      %1184 = vmatmul.mubr.f32.gmra.mrb[0].mxu0 %v386
      %v1185 = vpop.f32.mrb[0].mxu0
      %v1186 = vadd.f32 0.0, %v1185
      %v1187 = vpop.f32.mrb[0].mxu0
      %1188 = vmatprep.mubr.f32.mxu0 0.0
      %1189 = vmatmul.mubr.f32.gmra.mrb[0].mxu0 %v389
      %v1190 = vpop.f32.mrb[0].mxu0
      %v1191 = vadd.f32 0.0, %v1190
      %v1192 = vpop.f32.mrb[0].mxu0
      %1193 = vdwg.mxu0
      %v1194 = vadd.f32 %v1042, %v1156
      %v1195 = vadd.f32 %v1047, %v1161
      %v1196 = vadd.f32 %v1052, %v1166
      %v1197 = vadd.f32 %v1057, %v1171
      %v1198 = vadd.f32 %v1062, %v1176
      %v1199 = vadd.f32 %v1067, %v1181
      %v1200 = vadd.f32 %v1072, %v1186
      %v1201 = vadd.f32 %v1077, %v1191
      %s1202 = scalar_lea.vmem %s2, 320
      %v1203 = vld [vmem:[%s1202] sm:$0xff]
      %v1204 = vld [vmem:[%s1202 + $0x8] sm:$0xff]
      %v1205 = vld [vmem:[%s1202 + $0x10] sm:$0xff]
      %v1206 = vld [vmem:[%s1202 + $0x18] sm:$0xff]
      %v1207 = vld [vmem:[%s1202 + $0x20] sm:$0xff]
      %v1208 = vld [vmem:[%s1202 + $0x28] sm:$0xff]
      %v1209 = vld [vmem:[%s1202 + $0x30] sm:$0xff]
      %v1210 = vld [vmem:[%s1202 + $0x38] sm:$0xff]
      %1211 = vmatprep.subr.mxu0 0.0
      %1212 = vmatpush1.msra.mxu0 %v1203
      %1213 = vmatprep.subr.mxu0 0.0
      %1214 = vmatpush1.msra.mxu0 %v1204
      %1215 = vmatprep.subr.mxu0 0.0
      %1216 = vmatpush1.msra.mxu0 %v1205
      %1217 = vmatprep.subr.mxu0 0.0
      %1218 = vmatpush1.msra.mxu0 %v1206
      %1219 = vmatprep.subr.mxu0 0.0
      %1220 = vmatpush1.msra.mxu0 %v1207
      %1221 = vmatprep.subr.mxu0 0.0
      %1222 = vmatpush1.msra.mxu0 %v1208
      %1223 = vmatprep.subr.mxu0 0.0
      %1224 = vmatpush1.msra.mxu0 %v1209
      %1225 = vmatprep.subr.mxu0 0.0
      %1226 = vmatpush1.msra.mxu0 %v1210
      %1227 = vmatprep.subr.mxu0 0.0
      %1228 = vmatpush1.msra.mxu0 0.0
      %1229 = vmatprep.subr.mxu0 0.0
      %1230 = vmatpush1.msra.mxu0 0.0
      %1231 = vmatprep.subr.mxu0 0.0
      %1232 = vmatpush1.msra.mxu0 0.0
      %1233 = vmatprep.subr.mxu0 0.0
      %1234 = vmatpush1.msra.mxu0 0.0
      %1235 = vmatprep.subr.mxu0 0.0
      %1236 = vmatpush1.msra.mxu0 0.0
      %1237 = vmatprep.subr.mxu0 0.0
      %1238 = vmatpush1.msra.mxu0 0.0
      %1239 = vmatprep.subr.mxu0 0.0
      %1240 = vmatpush1.msra.mxu0 0.0
      %1241 = vmatprep.subr.mxu0 0.0
      %1242 = vmatpush1.msra.mxu0 0.0
      %1243 = vmatprep.subr.mxu0 0.0
      %1244 = vmatpush1.msra.mxu0 0.0
      %1245 = vmatprep.subr.mxu0 0.0
      %1246 = vmatpush1.msra.mxu0 0.0
      %1247 = vmatprep.subr.mxu0 0.0
      %1248 = vmatpush1.msra.mxu0 0.0
      %1249 = vmatprep.subr.mxu0 0.0
      %1250 = vmatpush1.msra.mxu0 0.0
      %1251 = vmatprep.subr.mxu0 0.0
      %1252 = vmatpush1.msra.mxu0 0.0
      %1253 = vmatprep.subr.mxu0 0.0
      %1254 = vmatpush1.msra.mxu0 0.0
      %1255 = vmatprep.subr.mxu0 0.0
      %1256 = vmatpush1.msra.mxu0 0.0
      %1257 = vmatprep.subr.mxu0 0.0
      %1258 = vmatpush1.msra.mxu0 0.0
      %1259 = vmatprep.subr.mxu0 0.0
      %1260 = vmatpush1.msra.mxu0 0.0
      %1261 = vmatprep.subr.mxu0 0.0
      %1262 = vmatpush1.msra.mxu0 0.0
      %1263 = vmatprep.subr.mxu0 0.0
      %1264 = vmatpush1.msra.mxu0 0.0
      %1265 = vmatprep.subr.mxu0 0.0
      %1266 = vmatpush1.msra.mxu0 0.0
      %1267 = vmatprep.subr.mxu0 0.0
      %1268 = vmatpush1.msra.mxu0 0.0
      %1269 = vmatprep.subr.mxu0 0.0
      %1270 = vmatpush1.msra.mxu0 0.0
      %1271 = vmatprep.subr.mxu0 0.0
      %1272 = vmatpush1.msra.mxu0 0.0
      %1273 = vmatprep.subr.mxu0 0.0
      %1274 = vmatpush1.msra.mxu0 0.0
      %1275 = vmatprep.mubr.f32.mxu0 0.0
      %1276 = vmatmul.mubr.f32.gmra.mrb[0].mxu0 %v514
      %v1277 = vpop.f32.mrb[0].mxu0
      %v1278 = vadd.f32 0.0, %v1277
      %v1279 = vpop.f32.mrb[0].mxu0
      %1280 = vmatprep.mubr.f32.mxu0 0.0
      %1281 = vmatmul.mubr.f32.gmra.mrb[0].mxu0 %v517
      %v1282 = vpop.f32.mrb[0].mxu0
      %v1283 = vadd.f32 0.0, %v1282
      %v1284 = vpop.f32.mrb[0].mxu0
      %1285 = vmatprep.mubr.f32.mxu0 0.0
      %1286 = vmatmul.mubr.f32.gmra.mrb[0].mxu0 %v520
      %v1287 = vpop.f32.mrb[0].mxu0
      %v1288 = vadd.f32 0.0, %v1287
      %v1289 = vpop.f32.mrb[0].mxu0
      %1290 = vmatprep.mubr.f32.mxu0 0.0
      %1291 = vmatmul.mubr.f32.gmra.mrb[0].mxu0 %v523
      %v1292 = vpop.f32.mrb[0].mxu0
      %v1293 = vadd.f32 0.0, %v1292
      %v1294 = vpop.f32.mrb[0].mxu0
      %1295 = vmatprep.mubr.f32.mxu0 0.0
      %1296 = vmatmul.mubr.f32.gmra.mrb[0].mxu0 %v526
      %v1297 = vpop.f32.mrb[0].mxu0
      %v1298 = vadd.f32 0.0, %v1297
      %v1299 = vpop.f32.mrb[0].mxu0
      %1300 = vmatprep.mubr.f32.mxu0 0.0
      %1301 = vmatmul.mubr.f32.gmra.mrb[0].mxu0 %v529
      %v1302 = vpop.f32.mrb[0].mxu0
      %v1303 = vadd.f32 0.0, %v1302
      %v1304 = vpop.f32.mrb[0].mxu0
      %1305 = vmatprep.mubr.f32.mxu0 0.0
      %1306 = vmatmul.mubr.f32.gmra.mrb[0].mxu0 %v532
      %v1307 = vpop.f32.mrb[0].mxu0
      %v1308 = vadd.f32 0.0, %v1307
      %v1309 = vpop.f32.mrb[0].mxu0
      %1310 = vmatprep.mubr.f32.mxu0 0.0
      %1311 = vmatmul.mubr.f32.gmra.mrb[0].mxu0 %v535
      %v1312 = vpop.f32.mrb[0].mxu0
      %v1313 = vadd.f32 0.0, %v1312
      %v1314 = vpop.f32.mrb[0].mxu0
      %1315 = vdwg.mxu0
      %v1316 = vadd.f32 %v1194, %v1278
      %v1317 = vadd.f32 %v1195, %v1283
      %v1318 = vadd.f32 %v1196, %v1288
      %v1319 = vadd.f32 %v1197, %v1293
      %v1320 = vadd.f32 %v1198, %v1298
      %v1321 = vadd.f32 %v1199, %v1303
      %v1322 = vadd.f32 %v1200, %v1308
      %v1323 = vadd.f32 %v1201, %v1313
      %s1324 = scalar_lea.vmem %s2, 384
      %v1325 = vld [vmem:[%s1324] sm:$0xff]
      %v1326 = vld [vmem:[%s1324 + $0x8] sm:$0xff]
      %v1327 = vld [vmem:[%s1324 + $0x10] sm:$0xff]
      %v1328 = vld [vmem:[%s1324 + $0x18] sm:$0xff]
      %v1329 = vld [vmem:[%s1324 + $0x20] sm:$0xff]
      %v1330 = vld [vmem:[%s1324 + $0x28] sm:$0xff]
      %v1331 = vld [vmem:[%s1324 + $0x30] sm:$0xff]
      %v1332 = vld [vmem:[%s1324 + $0x38] sm:$0xff]
      %1333 = vmatprep.subr.mxu0 0.0
      %1334 = vmatpush1.msra.mxu0 %v1325
      %1335 = vmatprep.subr.mxu0 0.0
      %1336 = vmatpush1.msra.mxu0 %v1326
      %1337 = vmatprep.subr.mxu0 0.0
      %1338 = vmatpush1.msra.mxu0 %v1327
      %1339 = vmatprep.subr.mxu0 0.0
      %1340 = vmatpush1.msra.mxu0 %v1328
      %1341 = vmatprep.subr.mxu0 0.0
      %1342 = vmatpush1.msra.mxu0 %v1329
      %1343 = vmatprep.subr.mxu0 0.0
      %1344 = vmatpush1.msra.mxu0 %v1330
      %1345 = vmatprep.subr.mxu0 0.0
      %1346 = vmatpush1.msra.mxu0 %v1331
      %1347 = vmatprep.subr.mxu0 0.0
      %1348 = vmatpush1.msra.mxu0 %v1332
      %1349 = vmatprep.subr.mxu0 0.0
      %1350 = vmatpush1.msra.mxu0 0.0
      %1351 = vmatprep.subr.mxu0 0.0
      %1352 = vmatpush1.msra.mxu0 0.0
      %1353 = vmatprep.subr.mxu0 0.0
      %1354 = vmatpush1.msra.mxu0 0.0
      %1355 = vmatprep.subr.mxu0 0.0
      %1356 = vmatpush1.msra.mxu0 0.0
      %1357 = vmatprep.subr.mxu0 0.0
      %1358 = vmatpush1.msra.mxu0 0.0
      %1359 = vmatprep.subr.mxu0 0.0
      %1360 = vmatpush1.msra.mxu0 0.0
      %1361 = vmatprep.subr.mxu0 0.0
      %1362 = vmatpush1.msra.mxu0 0.0
      %1363 = vmatprep.subr.mxu0 0.0
      %1364 = vmatpush1.msra.mxu0 0.0
      %1365 = vmatprep.subr.mxu0 0.0
      %1366 = vmatpush1.msra.mxu0 0.0
      %1367 = vmatprep.subr.mxu0 0.0
      %1368 = vmatpush1.msra.mxu0 0.0
      %1369 = vmatprep.subr.mxu0 0.0
      %1370 = vmatpush1.msra.mxu0 0.0
      %1371 = vmatprep.subr.mxu0 0.0
      %1372 = vmatpush1.msra.mxu0 0.0
      %1373 = vmatprep.subr.mxu0 0.0
      %1374 = vmatpush1.msra.mxu0 0.0
      %1375 = vmatprep.subr.mxu0 0.0
      %1376 = vmatpush1.msra.mxu0 0.0
      %1377 = vmatprep.subr.mxu0 0.0
      %1378 = vmatpush1.msra.mxu0 0.0
      %1379 = vmatprep.subr.mxu0 0.0
      %1380 = vmatpush1.msra.mxu0 0.0
      %1381 = vmatprep.subr.mxu0 0.0
      %1382 = vmatpush1.msra.mxu0 0.0
      %1383 = vmatprep.subr.mxu0 0.0
      %1384 = vmatpush1.msra.mxu0 0.0
      %1385 = vmatprep.subr.mxu0 0.0
      %1386 = vmatpush1.msra.mxu0 0.0
      %1387 = vmatprep.subr.mxu0 0.0
      %1388 = vmatpush1.msra.mxu0 0.0
      %1389 = vmatprep.subr.mxu0 0.0
      %1390 = vmatpush1.msra.mxu0 0.0
      %1391 = vmatprep.subr.mxu0 0.0
      %1392 = vmatpush1.msra.mxu0 0.0
      %1393 = vmatprep.subr.mxu0 0.0
      %1394 = vmatpush1.msra.mxu0 0.0
      %1395 = vmatprep.subr.mxu0 0.0
      %1396 = vmatpush1.msra.mxu0 0.0
      %1397 = vmatprep.mubr.f32.mxu0 0.0
      %1398 = vmatmul.mubr.f32.gmra.mrb[0].mxu0 %v660
      %v1399 = vpop.f32.mrb[0].mxu0
      %v1400 = vadd.f32 0.0, %v1399
      %v1401 = vpop.f32.mrb[0].mxu0
      %1402 = vmatprep.mubr.f32.mxu0 0.0
      %1403 = vmatmul.mubr.f32.gmra.mrb[0].mxu0 %v663
      %v1404 = vpop.f32.mrb[0].mxu0
      %v1405 = vadd.f32 0.0, %v1404
      %v1406 = vpop.f32.mrb[0].mxu0
      %1407 = vmatprep.mubr.f32.mxu0 0.0
      %1408 = vmatmul.mubr.f32.gmra.mrb[0].mxu0 %v666
      %v1409 = vpop.f32.mrb[0].mxu0
      %v1410 = vadd.f32 0.0, %v1409
      %v1411 = vpop.f32.mrb[0].mxu0
      %1412 = vmatprep.mubr.f32.mxu0 0.0
      %1413 = vmatmul.mubr.f32.gmra.mrb[0].mxu0 %v669
      %v1414 = vpop.f32.mrb[0].mxu0
      %v1415 = vadd.f32 0.0, %v1414
      %v1416 = vpop.f32.mrb[0].mxu0
      %1417 = vmatprep.mubr.f32.mxu0 0.0
      %1418 = vmatmul.mubr.f32.gmra.mrb[0].mxu0 %v672
      %v1419 = vpop.f32.mrb[0].mxu0
      %v1420 = vadd.f32 0.0, %v1419
      %v1421 = vpop.f32.mrb[0].mxu0
      %1422 = vmatprep.mubr.f32.mxu0 0.0
      %1423 = vmatmul.mubr.f32.gmra.mrb[0].mxu0 %v675
      %v1424 = vpop.f32.mrb[0].mxu0
      %v1425 = vadd.f32 0.0, %v1424
      %v1426 = vpop.f32.mrb[0].mxu0
      %1427 = vmatprep.mubr.f32.mxu0 0.0
      %1428 = vmatmul.mubr.f32.gmra.mrb[0].mxu0 %v678
      %v1429 = vpop.f32.mrb[0].mxu0
      %v1430 = vadd.f32 0.0, %v1429
      %v1431 = vpop.f32.mrb[0].mxu0
      %1432 = vmatprep.mubr.f32.mxu0 0.0
      %1433 = vmatmul.mubr.f32.gmra.mrb[0].mxu0 %v681
      %v1434 = vpop.f32.mrb[0].mxu0
      %v1435 = vadd.f32 0.0, %v1434
      %v1436 = vpop.f32.mrb[0].mxu0
      %1437 = vdwg.mxu0
      %v1438 = vadd.f32 %v1316, %v1400
      %v1439 = vadd.f32 %v1317, %v1405
      %v1440 = vadd.f32 %v1318, %v1410
      %v1441 = vadd.f32 %v1319, %v1415
      %v1442 = vadd.f32 %v1320, %v1420
      %v1443 = vadd.f32 %v1321, %v1425
      %v1444 = vadd.f32 %v1322, %v1430
      %v1445 = vadd.f32 %v1323, %v1435
      %s1446 = scalar_lea.vmem %s2, 448
      %v1447 = vld [vmem:[%s1446] sm:$0xff]
      %v1448 = vld [vmem:[%s1446 + $0x8] sm:$0xff]
      %v1449 = vld [vmem:[%s1446 + $0x10] sm:$0xff]
      %v1450 = vld [vmem:[%s1446 + $0x18] sm:$0xff]
      %v1451 = vld [vmem:[%s1446 + $0x20] sm:$0xff]
      %v1452 = vld [vmem:[%s1446 + $0x28] sm:$0xff]
      %v1453 = vld [vmem:[%s1446 + $0x30] sm:$0xff]
      %v1454 = vld [vmem:[%s1446 + $0x38] sm:$0xff]
      %1455 = vmatprep.subr.mxu0 0.0
      %1456 = vmatpush1.msra.mxu0 %v1447
      %1457 = vmatprep.subr.mxu0 0.0
      %1458 = vmatpush1.msra.mxu0 %v1448
      %1459 = vmatprep.subr.mxu0 0.0
      %1460 = vmatpush1.msra.mxu0 %v1449
      %1461 = vmatprep.subr.mxu0 0.0
      %1462 = vmatpush1.msra.mxu0 %v1450
      %1463 = vmatprep.subr.mxu0 0.0
      %1464 = vmatpush1.msra.mxu0 %v1451
      %1465 = vmatprep.subr.mxu0 0.0
      %1466 = vmatpush1.msra.mxu0 %v1452
      %1467 = vmatprep.subr.mxu0 0.0
      %1468 = vmatpush1.msra.mxu0 %v1453
      %1469 = vmatprep.subr.mxu0 0.0
      %1470 = vmatpush1.msra.mxu0 %v1454
      %1471 = vmatprep.subr.mxu0 0.0
      %1472 = vmatpush1.msra.mxu0 0.0
      %1473 = vmatprep.subr.mxu0 0.0
      %1474 = vmatpush1.msra.mxu0 0.0
      %1475 = vmatprep.subr.mxu0 0.0
      %1476 = vmatpush1.msra.mxu0 0.0
      %1477 = vmatprep.subr.mxu0 0.0
      %1478 = vmatpush1.msra.mxu0 0.0
      %1479 = vmatprep.subr.mxu0 0.0
      %1480 = vmatpush1.msra.mxu0 0.0
      %1481 = vmatprep.subr.mxu0 0.0
      %1482 = vmatpush1.msra.mxu0 0.0
      %1483 = vmatprep.subr.mxu0 0.0
      %1484 = vmatpush1.msra.mxu0 0.0
      %1485 = vmatprep.subr.mxu0 0.0
      %1486 = vmatpush1.msra.mxu0 0.0
      %1487 = vmatprep.subr.mxu0 0.0
      %1488 = vmatpush1.msra.mxu0 0.0
      %1489 = vmatprep.subr.mxu0 0.0
      %1490 = vmatpush1.msra.mxu0 0.0
      %1491 = vmatprep.subr.mxu0 0.0
      %1492 = vmatpush1.msra.mxu0 0.0
      %1493 = vmatprep.subr.mxu0 0.0
      %1494 = vmatpush1.msra.mxu0 0.0
      %1495 = vmatprep.subr.mxu0 0.0
      %1496 = vmatpush1.msra.mxu0 0.0
      %1497 = vmatprep.subr.mxu0 0.0
      %1498 = vmatpush1.msra.mxu0 0.0
      %1499 = vmatprep.subr.mxu0 0.0
      %1500 = vmatpush1.msra.mxu0 0.0
      %1501 = vmatprep.subr.mxu0 0.0
      %1502 = vmatpush1.msra.mxu0 0.0
      %1503 = vmatprep.subr.mxu0 0.0
      %1504 = vmatpush1.msra.mxu0 0.0
      %1505 = vmatprep.subr.mxu0 0.0
      %1506 = vmatpush1.msra.mxu0 0.0
      %1507 = vmatprep.subr.mxu0 0.0
      %1508 = vmatpush1.msra.mxu0 0.0
      %1509 = vmatprep.subr.mxu0 0.0
      %1510 = vmatpush1.msra.mxu0 0.0
      %1511 = vmatprep.subr.mxu0 0.0
      %1512 = vmatpush1.msra.mxu0 0.0
      %1513 = vmatprep.subr.mxu0 0.0
      %1514 = vmatpush1.msra.mxu0 0.0
      %1515 = vmatprep.subr.mxu0 0.0
      %1516 = vmatpush1.msra.mxu0 0.0
      %1517 = vmatprep.subr.mxu0 0.0
      %1518 = vmatpush1.msra.mxu0 0.0
      %1519 = vmatprep.mubr.f32.mxu0 0.0
      %1520 = vmatmul.mubr.f32.gmra.mrb[0].mxu0 %v806
      %v1521 = vpop.f32.mrb[0].mxu0
      %v1522 = vadd.f32 0.0, %v1521
      %v1523 = vpop.f32.mrb[0].mxu0
      %1524 = vmatprep.mubr.f32.mxu0 0.0
      %1525 = vmatmul.mubr.f32.gmra.mrb[0].mxu0 %v809
      %v1526 = vpop.f32.mrb[0].mxu0
      %v1527 = vadd.f32 0.0, %v1526
      %v1528 = vpop.f32.mrb[0].mxu0
      %1529 = vmatprep.mubr.f32.mxu0 0.0
      %1530 = vmatmul.mubr.f32.gmra.mrb[0].mxu0 %v812
      %v1531 = vpop.f32.mrb[0].mxu0
      %v1532 = vadd.f32 0.0, %v1531
      %v1533 = vpop.f32.mrb[0].mxu0
      %1534 = vmatprep.mubr.f32.mxu0 0.0
      %1535 = vmatmul.mubr.f32.gmra.mrb[0].mxu0 %v815
      %v1536 = vpop.f32.mrb[0].mxu0
      %v1537 = vadd.f32 0.0, %v1536
      %v1538 = vpop.f32.mrb[0].mxu0
      %1539 = vmatprep.mubr.f32.mxu0 0.0
      %1540 = vmatmul.mubr.f32.gmra.mrb[0].mxu0 %v818
      %v1541 = vpop.f32.mrb[0].mxu0
      %v1542 = vadd.f32 0.0, %v1541
      %v1543 = vpop.f32.mrb[0].mxu0
      %1544 = vmatprep.mubr.f32.mxu0 0.0
      %1545 = vmatmul.mubr.f32.gmra.mrb[0].mxu0 %v821
      %v1546 = vpop.f32.mrb[0].mxu0
      %v1547 = vadd.f32 0.0, %v1546
      %v1548 = vpop.f32.mrb[0].mxu0
      %1549 = vmatprep.mubr.f32.mxu0 0.0
      %1550 = vmatmul.mubr.f32.gmra.mrb[0].mxu0 %v824
      %v1551 = vpop.f32.mrb[0].mxu0
      %v1552 = vadd.f32 0.0, %v1551
      %v1553 = vpop.f32.mrb[0].mxu0
      %1554 = vmatprep.mubr.f32.mxu0 0.0
      %1555 = vmatmul.mubr.f32.gmra.mrb[0].mxu0 %v827
      %v1556 = vpop.f32.mrb[0].mxu0
      %v1557 = vadd.f32 0.0, %v1556
      %v1558 = vpop.f32.mrb[0].mxu0
      %1559 = vdwg.mxu0
      %v1560 = vadd.f32 %v1438, %v1522
      %v1561 = vadd.f32 %v1439, %v1527
      %v1562 = vadd.f32 %v1440, %v1532
      %v1563 = vadd.f32 %v1441, %v1537
      %v1564 = vadd.f32 %v1442, %v1542
      %v1565 = vadd.f32 %v1443, %v1547
      %v1566 = vadd.f32 %v1444, %v1552
      %v1567 = vadd.f32 %v1445, %v1557
      %s1568 = scalar_lea.vmem %s197, 64
      %1569 = vst.msk [vmem:[%s1568] sm:$0xff] %vm366, %v1560
      %1570 = vst.msk [vmem:[%s1568 + $0x8] sm:$0xff] %vm366, %v1561
      %1571 = vst.msk [vmem:[%s1568 + $0x10] sm:$0xff] %vm366, %v1562
      %1572 = vst.msk [vmem:[%s1568 + $0x18] sm:$0xff] %vm366, %v1563
      %1573 = vst.msk [vmem:[%s1568 + $0x20] sm:$0xff] %vm366, %v1564
      %1574 = vst.msk [vmem:[%s1568 + $0x28] sm:$0xff] %vm366, %v1565
      %1575 = vst.msk [vmem:[%s1568 + $0x30] sm:$0xff] %vm366, %v1566
      %1576 = vst.msk [vmem:[%s1568 + $0x38] sm:$0xff] %vm366, %v1567
      %s1577 = scalar_lea.vmem %s1, 256
      %v1578 = vld [vmem:[%s1577] sm:$0xff]
      %v1579 = vld [vmem:[%s1577 + $0x8] sm:$0xff]
      %v1580 = vld [vmem:[%s1577 + $0x10] sm:$0xff]
      %v1581 = vld [vmem:[%s1577 + $0x18] sm:$0xff]
      %v1582 = vld [vmem:[%s1577 + $0x20] sm:$0xff]
      %v1583 = vld [vmem:[%s1577 + $0x28] sm:$0xff]
      %v1584 = vld [vmem:[%s1577 + $0x30] sm:$0xff]
      %v1585 = vld [vmem:[%s1577 + $0x38] sm:$0xff]
      %v1586 = vld [vmem:[%s1577 + $0x40] sm:$0xff]
      %v1587 = vld [vmem:[%s1577 + $0x48] sm:$0xff]
      %v1588 = vld [vmem:[%s1577 + $0x50] sm:$0xff]
      %v1589 = vld [vmem:[%s1577 + $0x58] sm:$0xff]
      %v1590 = vld [vmem:[%s1577 + $0x60] sm:$0xff]
      %v1591 = vld [vmem:[%s1577 + $0x68] sm:$0xff]
      %v1592 = vld [vmem:[%s1577 + $0x70] sm:$0xff]
      %v1593 = vld [vmem:[%s1577 + $0x78] sm:$0xff]
      %s1594 = scalar_lea.vmem %s3, 2
      %v1595 = vld [vmem:[%s1594] sm:$0x1]
      %v1597 = vlaneseq
      %v1598 = vshrl.u32 %v1597, 7
      %v1599 = vsub.s32 0, %v1598
      %v1600 = vrot.slane %v1595, %v1599
      %1602 = vmatprep.subr.mxu0 0.0
      %1603 = vmatpush1.msra.mxu0 %v198
      %1604 = vmatprep.subr.mxu0 0.0
      %1605 = vmatpush1.msra.mxu0 %v199
      %1606 = vmatprep.subr.mxu0 0.0
      %1607 = vmatpush1.msra.mxu0 %v200
      %1608 = vmatprep.subr.mxu0 0.0
      %1609 = vmatpush1.msra.mxu0 %v201
      %1610 = vmatprep.subr.mxu0 0.0
      %1611 = vmatpush1.msra.mxu0 %v202
      %1612 = vmatprep.subr.mxu0 0.0
      %1613 = vmatpush1.msra.mxu0 %v203
      %1614 = vmatprep.subr.mxu0 0.0
      %1615 = vmatpush1.msra.mxu0 %v204
      %1616 = vmatprep.subr.mxu0 0.0
      %1617 = vmatpush1.msra.mxu0 %v205
      %1618 = vmatprep.subr.mxu0 0.0
      %1619 = vmatpush1.msra.mxu0 %v206
      %1620 = vmatprep.subr.mxu0 0.0
      %1621 = vmatpush1.msra.mxu0 %v207
      %1622 = vmatprep.subr.mxu0 0.0
      %1623 = vmatpush1.msra.mxu0 %v208
      %1624 = vmatprep.subr.mxu0 0.0
      %1625 = vmatpush1.msra.mxu0 %v209
      %1626 = vmatprep.subr.mxu0 0.0
      %1627 = vmatpush1.msra.mxu0 %v210
      %1628 = vmatprep.subr.mxu0 0.0
      %1629 = vmatpush1.msra.mxu0 %v211
      %1630 = vmatprep.subr.mxu0 0.0
      %1631 = vmatpush1.msra.mxu0 %v212
      %1632 = vmatprep.subr.mxu0 0.0
      %1633 = vmatpush1.msra.mxu0 %v213
      %1634 = vmatprep.subr.mxu0 0.0
      %1635 = vmatpush1.msra.mxu0 %v214
      %1636 = vmatprep.subr.mxu0 0.0
      %1637 = vmatpush1.msra.mxu0 %v215
      %1638 = vmatprep.subr.mxu0 0.0
      %1639 = vmatpush1.msra.mxu0 %v216
      %1640 = vmatprep.subr.mxu0 0.0
      %1641 = vmatpush1.msra.mxu0 %v217
      %1642 = vmatprep.subr.mxu0 0.0
      %1643 = vmatpush1.msra.mxu0 %v218
      %1644 = vmatprep.subr.mxu0 0.0
      %1645 = vmatpush1.msra.mxu0 %v219
      %1646 = vmatprep.subr.mxu0 0.0
      %1647 = vmatpush1.msra.mxu0 %v220
      %1648 = vmatprep.subr.mxu0 0.0
      %1649 = vmatpush1.msra.mxu0 %v221
      %1650 = vmatprep.subr.mxu0 0.0
      %1651 = vmatpush1.msra.mxu0 %v222
      %1652 = vmatprep.subr.mxu0 0.0
      %1653 = vmatpush1.msra.mxu0 %v223
      %1654 = vmatprep.subr.mxu0 0.0
      %1655 = vmatpush1.msra.mxu0 %v224
      %1656 = vmatprep.subr.mxu0 0.0
      %1657 = vmatpush1.msra.mxu0 %v225
      %1658 = vmatprep.subr.mxu0 0.0
      %1659 = vmatpush1.msra.mxu0 %v226
      %1660 = vmatprep.subr.mxu0 0.0
      %1661 = vmatpush1.msra.mxu0 %v227
      %1662 = vmatprep.subr.mxu0 0.0
      %1663 = vmatpush1.msra.mxu0 %v228
      %1664 = vmatprep.subr.mxu0 0.0
      %1665 = vmatpush1.msra.mxu0 %v229
      %1666 = vmatprep.mubr.f32.mxu0 %v1579
      %1667 = vmatmul.mubr.f32.gmra.mrb[0].mxu0 %v1578
      %v1668 = vpop.f32.mrb[0].mxu0
      %v1669 = vadd.f32 %v1600, %v1668
      %v1670 = vpop.f32.mrb[0].mxu0
      %1671 = vmatprep.mubr.f32.mxu0 %v1581
      %1672 = vmatmul.mubr.f32.gmra.mrb[0].mxu0 %v1580
      %v1673 = vpop.f32.mrb[0].mxu0
      %v1674 = vadd.f32 %v1600, %v1673
      %v1675 = vpop.f32.mrb[0].mxu0
      %1676 = vmatprep.mubr.f32.mxu0 %v1583
      %1677 = vmatmul.mubr.f32.gmra.mrb[0].mxu0 %v1582
      %v1678 = vpop.f32.mrb[0].mxu0
      %v1679 = vadd.f32 %v1600, %v1678
      %v1680 = vpop.f32.mrb[0].mxu0
      %1681 = vmatprep.mubr.f32.mxu0 %v1585
      %1682 = vmatmul.mubr.f32.gmra.mrb[0].mxu0 %v1584
      %v1683 = vpop.f32.mrb[0].mxu0
      %v1684 = vadd.f32 %v1600, %v1683
      %v1685 = vpop.f32.mrb[0].mxu0
      %1686 = vmatprep.mubr.f32.mxu0 %v1587
      %1687 = vmatmul.mubr.f32.gmra.mrb[0].mxu0 %v1586
      %v1688 = vpop.f32.mrb[0].mxu0
      %v1689 = vadd.f32 %v1600, %v1688
      %v1690 = vpop.f32.mrb[0].mxu0
      %1691 = vmatprep.mubr.f32.mxu0 %v1589
      %1692 = vmatmul.mubr.f32.gmra.mrb[0].mxu0 %v1588
      %v1693 = vpop.f32.mrb[0].mxu0
      %v1694 = vadd.f32 %v1600, %v1693
      %v1695 = vpop.f32.mrb[0].mxu0
      %1696 = vmatprep.mubr.f32.mxu0 %v1591
      %1697 = vmatmul.mubr.f32.gmra.mrb[0].mxu0 %v1590
      %v1698 = vpop.f32.mrb[0].mxu0
      %v1699 = vadd.f32 %v1600, %v1698
      %v1700 = vpop.f32.mrb[0].mxu0
      %1701 = vmatprep.mubr.f32.mxu0 %v1593
      %1702 = vmatmul.mubr.f32.gmra.mrb[0].mxu0 %v1592
      %v1703 = vpop.f32.mrb[0].mxu0
      %v1704 = vadd.f32 %v1600, %v1703
      %v1705 = vpop.f32.mrb[0].mxu0
      %1706 = vdwg.mxu0
      %s1707 = scalar_lea.vmem %s2, 512
      %v1708 = vld [vmem:[%s1707] sm:$0xff]
      %v1709 = vld [vmem:[%s1707 + $0x8] sm:$0xff]
      %v1710 = vld [vmem:[%s1707 + $0x10] sm:$0xff]
      %v1711 = vld [vmem:[%s1707 + $0x18] sm:$0xff]
      %v1712 = vld [vmem:[%s1707 + $0x20] sm:$0xff]
      %v1713 = vld [vmem:[%s1707 + $0x28] sm:$0xff]
      %v1714 = vld [vmem:[%s1707 + $0x30] sm:$0xff]
      %v1715 = vld [vmem:[%s1707 + $0x38] sm:$0xff]
      %1716 = vmatprep.subr.mxu0 0.0
      %1717 = vmatpush1.msra.mxu0 %v1708
      %1718 = vmatprep.subr.mxu0 0.0
      %1719 = vmatpush1.msra.mxu0 %v1709
      %1720 = vmatprep.subr.mxu0 0.0
      %1721 = vmatpush1.msra.mxu0 %v1710
      %1722 = vmatprep.subr.mxu0 0.0
      %1723 = vmatpush1.msra.mxu0 %v1711
      %1724 = vmatprep.subr.mxu0 0.0
      %1725 = vmatpush1.msra.mxu0 %v1712
      %1726 = vmatprep.subr.mxu0 0.0
      %1727 = vmatpush1.msra.mxu0 %v1713
      %1728 = vmatprep.subr.mxu0 0.0
      %1729 = vmatpush1.msra.mxu0 %v1714
      %1730 = vmatprep.subr.mxu0 0.0
      %1731 = vmatpush1.msra.mxu0 %v1715
      %1732 = vmatprep.subr.mxu0 0.0
      %1733 = vmatpush1.msra.mxu0 0.0
      %1734 = vmatprep.subr.mxu0 0.0
      %1735 = vmatpush1.msra.mxu0 0.0
      %1736 = vmatprep.subr.mxu0 0.0
      %1737 = vmatpush1.msra.mxu0 0.0
      %1738 = vmatprep.subr.mxu0 0.0
      %1739 = vmatpush1.msra.mxu0 0.0
      %1740 = vmatprep.subr.mxu0 0.0
      %1741 = vmatpush1.msra.mxu0 0.0
      %1742 = vmatprep.subr.mxu0 0.0
      %1743 = vmatpush1.msra.mxu0 0.0
      %1744 = vmatprep.subr.mxu0 0.0
      %1745 = vmatpush1.msra.mxu0 0.0
      %1746 = vmatprep.subr.mxu0 0.0
      %1747 = vmatpush1.msra.mxu0 0.0
      %1748 = vmatprep.subr.mxu0 0.0
      %1749 = vmatpush1.msra.mxu0 0.0
      %1750 = vmatprep.subr.mxu0 0.0
      %1751 = vmatpush1.msra.mxu0 0.0
      %1752 = vmatprep.subr.mxu0 0.0
      %1753 = vmatpush1.msra.mxu0 0.0
      %1754 = vmatprep.subr.mxu0 0.0
      %1755 = vmatpush1.msra.mxu0 0.0
      %1756 = vmatprep.subr.mxu0 0.0
      %1757 = vmatpush1.msra.mxu0 0.0
      %1758 = vmatprep.subr.mxu0 0.0
      %1759 = vmatpush1.msra.mxu0 0.0
      %1760 = vmatprep.subr.mxu0 0.0
      %1761 = vmatpush1.msra.mxu0 0.0
      %1762 = vmatprep.subr.mxu0 0.0
      %1763 = vmatpush1.msra.mxu0 0.0
      %1764 = vmatprep.subr.mxu0 0.0
      %1765 = vmatpush1.msra.mxu0 0.0
      %1766 = vmatprep.subr.mxu0 0.0
      %1767 = vmatpush1.msra.mxu0 0.0
      %1768 = vmatprep.subr.mxu0 0.0
      %1769 = vmatpush1.msra.mxu0 0.0
      %1770 = vmatprep.subr.mxu0 0.0
      %1771 = vmatpush1.msra.mxu0 0.0
      %1772 = vmatprep.subr.mxu0 0.0
      %1773 = vmatpush1.msra.mxu0 0.0
      %1774 = vmatprep.subr.mxu0 0.0
      %1775 = vmatpush1.msra.mxu0 0.0
      %1776 = vmatprep.subr.mxu0 0.0
      %1777 = vmatpush1.msra.mxu0 0.0
      %1778 = vmatprep.subr.mxu0 0.0
      %1779 = vmatpush1.msra.mxu0 0.0
      %1780 = vmatprep.mubr.f32.mxu0 0.0
      %1781 = vmatmul.mubr.f32.gmra.mrb[0].mxu0 %v368
      %v1782 = vpop.f32.mrb[0].mxu0
      %v1783 = vadd.f32 0.0, %v1782
      %v1784 = vpop.f32.mrb[0].mxu0
      %1785 = vmatprep.mubr.f32.mxu0 0.0
      %1786 = vmatmul.mubr.f32.gmra.mrb[0].mxu0 %v371
      %v1787 = vpop.f32.mrb[0].mxu0
      %v1788 = vadd.f32 0.0, %v1787
      %v1789 = vpop.f32.mrb[0].mxu0
      %1790 = vmatprep.mubr.f32.mxu0 0.0
      %1791 = vmatmul.mubr.f32.gmra.mrb[0].mxu0 %v374
      %v1792 = vpop.f32.mrb[0].mxu0
      %v1793 = vadd.f32 0.0, %v1792
      %v1794 = vpop.f32.mrb[0].mxu0
      %1795 = vmatprep.mubr.f32.mxu0 0.0
      %1796 = vmatmul.mubr.f32.gmra.mrb[0].mxu0 %v377
      %v1797 = vpop.f32.mrb[0].mxu0
      %v1798 = vadd.f32 0.0, %v1797
      %v1799 = vpop.f32.mrb[0].mxu0
      %1800 = vmatprep.mubr.f32.mxu0 0.0
      %1801 = vmatmul.mubr.f32.gmra.mrb[0].mxu0 %v380
      %v1802 = vpop.f32.mrb[0].mxu0
      %v1803 = vadd.f32 0.0, %v1802
      %v1804 = vpop.f32.mrb[0].mxu0
      %1805 = vmatprep.mubr.f32.mxu0 0.0
      %1806 = vmatmul.mubr.f32.gmra.mrb[0].mxu0 %v383
      %v1807 = vpop.f32.mrb[0].mxu0
      %v1808 = vadd.f32 0.0, %v1807
      %v1809 = vpop.f32.mrb[0].mxu0
      %1810 = vmatprep.mubr.f32.mxu0 0.0
      %1811 = vmatmul.mubr.f32.gmra.mrb[0].mxu0 %v386
      %v1812 = vpop.f32.mrb[0].mxu0
      %v1813 = vadd.f32 0.0, %v1812
      %v1814 = vpop.f32.mrb[0].mxu0
      %1815 = vmatprep.mubr.f32.mxu0 0.0
      %1816 = vmatmul.mubr.f32.gmra.mrb[0].mxu0 %v389
      %v1817 = vpop.f32.mrb[0].mxu0
      %v1818 = vadd.f32 0.0, %v1817
      %v1819 = vpop.f32.mrb[0].mxu0
      %1820 = vdwg.mxu0
      %v1821 = vadd.f32 %v1669, %v1783
      %v1822 = vadd.f32 %v1674, %v1788
      %v1823 = vadd.f32 %v1679, %v1793
      %v1824 = vadd.f32 %v1684, %v1798
      %v1825 = vadd.f32 %v1689, %v1803
      %v1826 = vadd.f32 %v1694, %v1808
      %v1827 = vadd.f32 %v1699, %v1813
      %v1828 = vadd.f32 %v1704, %v1818
      %s1829 = scalar_lea.vmem %s2, 576
      %v1830 = vld [vmem:[%s1829] sm:$0xff]
      %v1831 = vld [vmem:[%s1829 + $0x8] sm:$0xff]
      %v1832 = vld [vmem:[%s1829 + $0x10] sm:$0xff]
      %v1833 = vld [vmem:[%s1829 + $0x18] sm:$0xff]
      %v1834 = vld [vmem:[%s1829 + $0x20] sm:$0xff]
      %v1835 = vld [vmem:[%s1829 + $0x28] sm:$0xff]
      %v1836 = vld [vmem:[%s1829 + $0x30] sm:$0xff]
      %v1837 = vld [vmem:[%s1829 + $0x38] sm:$0xff]
      %1838 = vmatprep.subr.mxu0 0.0
      %1839 = vmatpush1.msra.mxu0 %v1830
      %1840 = vmatprep.subr.mxu0 0.0
      %1841 = vmatpush1.msra.mxu0 %v1831
      %1842 = vmatprep.subr.mxu0 0.0
      %1843 = vmatpush1.msra.mxu0 %v1832
      %1844 = vmatprep.subr.mxu0 0.0
      %1845 = vmatpush1.msra.mxu0 %v1833
      %1846 = vmatprep.subr.mxu0 0.0
      %1847 = vmatpush1.msra.mxu0 %v1834
      %1848 = vmatprep.subr.mxu0 0.0
      %1849 = vmatpush1.msra.mxu0 %v1835
      %1850 = vmatprep.subr.mxu0 0.0
      %1851 = vmatpush1.msra.mxu0 %v1836
      %1852 = vmatprep.subr.mxu0 0.0
      %1853 = vmatpush1.msra.mxu0 %v1837
      %1854 = vmatprep.subr.mxu0 0.0
      %1855 = vmatpush1.msra.mxu0 0.0
      %1856 = vmatprep.subr.mxu0 0.0
      %1857 = vmatpush1.msra.mxu0 0.0
      %1858 = vmatprep.subr.mxu0 0.0
      %1859 = vmatpush1.msra.mxu0 0.0
      %1860 = vmatprep.subr.mxu0 0.0
      %1861 = vmatpush1.msra.mxu0 0.0
      %1862 = vmatprep.subr.mxu0 0.0
      %1863 = vmatpush1.msra.mxu0 0.0
      %1864 = vmatprep.subr.mxu0 0.0
      %1865 = vmatpush1.msra.mxu0 0.0
      %1866 = vmatprep.subr.mxu0 0.0
      %1867 = vmatpush1.msra.mxu0 0.0
      %1868 = vmatprep.subr.mxu0 0.0
      %1869 = vmatpush1.msra.mxu0 0.0
      %1870 = vmatprep.subr.mxu0 0.0
      %1871 = vmatpush1.msra.mxu0 0.0
      %1872 = vmatprep.subr.mxu0 0.0
      %1873 = vmatpush1.msra.mxu0 0.0
      %1874 = vmatprep.subr.mxu0 0.0
      %1875 = vmatpush1.msra.mxu0 0.0
      %1876 = vmatprep.subr.mxu0 0.0
      %1877 = vmatpush1.msra.mxu0 0.0
      %1878 = vmatprep.subr.mxu0 0.0
      %1879 = vmatpush1.msra.mxu0 0.0
      %1880 = vmatprep.subr.mxu0 0.0
      %1881 = vmatpush1.msra.mxu0 0.0
      %1882 = vmatprep.subr.mxu0 0.0
      %1883 = vmatpush1.msra.mxu0 0.0
      %1884 = vmatprep.subr.mxu0 0.0
      %1885 = vmatpush1.msra.mxu0 0.0
      %1886 = vmatprep.subr.mxu0 0.0
      %1887 = vmatpush1.msra.mxu0 0.0
      %1888 = vmatprep.subr.mxu0 0.0
      %1889 = vmatpush1.msra.mxu0 0.0
      %1890 = vmatprep.subr.mxu0 0.0
      %1891 = vmatpush1.msra.mxu0 0.0
      %1892 = vmatprep.subr.mxu0 0.0
      %1893 = vmatpush1.msra.mxu0 0.0
      %1894 = vmatprep.subr.mxu0 0.0
      %1895 = vmatpush1.msra.mxu0 0.0
      %1896 = vmatprep.subr.mxu0 0.0
      %1897 = vmatpush1.msra.mxu0 0.0
      %1898 = vmatprep.subr.mxu0 0.0
      %1899 = vmatpush1.msra.mxu0 0.0
      %1900 = vmatprep.subr.mxu0 0.0
      %1901 = vmatpush1.msra.mxu0 0.0
      %1902 = vmatprep.mubr.f32.mxu0 0.0
      %1903 = vmatmul.mubr.f32.gmra.mrb[0].mxu0 %v514
      %v1904 = vpop.f32.mrb[0].mxu0
      %v1905 = vadd.f32 0.0, %v1904
      %v1906 = vpop.f32.mrb[0].mxu0
      %1907 = vmatprep.mubr.f32.mxu0 0.0
      %1908 = vmatmul.mubr.f32.gmra.mrb[0].mxu0 %v517
      %v1909 = vpop.f32.mrb[0].mxu0
      %v1910 = vadd.f32 0.0, %v1909
      %v1911 = vpop.f32.mrb[0].mxu0
      %1912 = vmatprep.mubr.f32.mxu0 0.0
      %1913 = vmatmul.mubr.f32.gmra.mrb[0].mxu0 %v520
      %v1914 = vpop.f32.mrb[0].mxu0
      %v1915 = vadd.f32 0.0, %v1914
      %v1916 = vpop.f32.mrb[0].mxu0
      %1917 = vmatprep.mubr.f32.mxu0 0.0
      %1918 = vmatmul.mubr.f32.gmra.mrb[0].mxu0 %v523
      %v1919 = vpop.f32.mrb[0].mxu0
      %v1920 = vadd.f32 0.0, %v1919
      %v1921 = vpop.f32.mrb[0].mxu0
      %1922 = vmatprep.mubr.f32.mxu0 0.0
      %1923 = vmatmul.mubr.f32.gmra.mrb[0].mxu0 %v526
      %v1924 = vpop.f32.mrb[0].mxu0
      %v1925 = vadd.f32 0.0, %v1924
      %v1926 = vpop.f32.mrb[0].mxu0
      %1927 = vmatprep.mubr.f32.mxu0 0.0
      %1928 = vmatmul.mubr.f32.gmra.mrb[0].mxu0 %v529
      %v1929 = vpop.f32.mrb[0].mxu0
      %v1930 = vadd.f32 0.0, %v1929
      %v1931 = vpop.f32.mrb[0].mxu0
      %1932 = vmatprep.mubr.f32.mxu0 0.0
      %1933 = vmatmul.mubr.f32.gmra.mrb[0].mxu0 %v532
      %v1934 = vpop.f32.mrb[0].mxu0
      %v1935 = vadd.f32 0.0, %v1934
      %v1936 = vpop.f32.mrb[0].mxu0
      %1937 = vmatprep.mubr.f32.mxu0 0.0
      %1938 = vmatmul.mubr.f32.gmra.mrb[0].mxu0 %v535
      %v1939 = vpop.f32.mrb[0].mxu0
      %v1940 = vadd.f32 0.0, %v1939
      %v1941 = vpop.f32.mrb[0].mxu0
      %1942 = vdwg.mxu0
      %v1943 = vadd.f32 %v1821, %v1905
      %v1944 = vadd.f32 %v1822, %v1910
      %v1945 = vadd.f32 %v1823, %v1915
      %v1946 = vadd.f32 %v1824, %v1920
      %v1947 = vadd.f32 %v1825, %v1925
      %v1948 = vadd.f32 %v1826, %v1930
      %v1949 = vadd.f32 %v1827, %v1935
      %v1950 = vadd.f32 %v1828, %v1940
      %s1951 = scalar_lea.vmem %s2, 640
      %v1952 = vld [vmem:[%s1951] sm:$0xff]
      %v1953 = vld [vmem:[%s1951 + $0x8] sm:$0xff]
      %v1954 = vld [vmem:[%s1951 + $0x10] sm:$0xff]
      %v1955 = vld [vmem:[%s1951 + $0x18] sm:$0xff]
      %v1956 = vld [vmem:[%s1951 + $0x20] sm:$0xff]
      %v1957 = vld [vmem:[%s1951 + $0x28] sm:$0xff]
      %v1958 = vld [vmem:[%s1951 + $0x30] sm:$0xff]
      %v1959 = vld [vmem:[%s1951 + $0x38] sm:$0xff]
      %1960 = vmatprep.subr.mxu0 0.0
      %1961 = vmatpush1.msra.mxu0 %v1952
      %1962 = vmatprep.subr.mxu0 0.0
      %1963 = vmatpush1.msra.mxu0 %v1953
      %1964 = vmatprep.subr.mxu0 0.0
      %1965 = vmatpush1.msra.mxu0 %v1954
      %1966 = vmatprep.subr.mxu0 0.0
      %1967 = vmatpush1.msra.mxu0 %v1955
      %1968 = vmatprep.subr.mxu0 0.0
      %1969 = vmatpush1.msra.mxu0 %v1956
      %1970 = vmatprep.subr.mxu0 0.0
      %1971 = vmatpush1.msra.mxu0 %v1957
      %1972 = vmatprep.subr.mxu0 0.0
      %1973 = vmatpush1.msra.mxu0 %v1958
      %1974 = vmatprep.subr.mxu0 0.0
      %1975 = vmatpush1.msra.mxu0 %v1959
      %1976 = vmatprep.subr.mxu0 0.0
      %1977 = vmatpush1.msra.mxu0 0.0
      %1978 = vmatprep.subr.mxu0 0.0
      %1979 = vmatpush1.msra.mxu0 0.0
      %1980 = vmatprep.subr.mxu0 0.0
      %1981 = vmatpush1.msra.mxu0 0.0
      %1982 = vmatprep.subr.mxu0 0.0
      %1983 = vmatpush1.msra.mxu0 0.0
      %1984 = vmatprep.subr.mxu0 0.0
      %1985 = vmatpush1.msra.mxu0 0.0
      %1986 = vmatprep.subr.mxu0 0.0
      %1987 = vmatpush1.msra.mxu0 0.0
      %1988 = vmatprep.subr.mxu0 0.0
      %1989 = vmatpush1.msra.mxu0 0.0
      %1990 = vmatprep.subr.mxu0 0.0
      %1991 = vmatpush1.msra.mxu0 0.0
      %1992 = vmatprep.subr.mxu0 0.0
      %1993 = vmatpush1.msra.mxu0 0.0
      %1994 = vmatprep.subr.mxu0 0.0
      %1995 = vmatpush1.msra.mxu0 0.0
      %1996 = vmatprep.subr.mxu0 0.0
      %1997 = vmatpush1.msra.mxu0 0.0
      %1998 = vmatprep.subr.mxu0 0.0
      %1999 = vmatpush1.msra.mxu0 0.0
      %2000 = vmatprep.subr.mxu0 0.0
      %2001 = vmatpush1.msra.mxu0 0.0
      %2002 = vmatprep.subr.mxu0 0.0
      %2003 = vmatpush1.msra.mxu0 0.0
      %2004 = vmatprep.subr.mxu0 0.0
      %2005 = vmatpush1.msra.mxu0 0.0
      %2006 = vmatprep.subr.mxu0 0.0
      %2007 = vmatpush1.msra.mxu0 0.0
      %2008 = vmatprep.subr.mxu0 0.0
      %2009 = vmatpush1.msra.mxu0 0.0
      %2010 = vmatprep.subr.mxu0 0.0
      %2011 = vmatpush1.msra.mxu0 0.0
      %2012 = vmatprep.subr.mxu0 0.0
      %2013 = vmatpush1.msra.mxu0 0.0
      %2014 = vmatprep.subr.mxu0 0.0
      %2015 = vmatpush1.msra.mxu0 0.0
      %2016 = vmatprep.subr.mxu0 0.0
      %2017 = vmatpush1.msra.mxu0 0.0
      %2018 = vmatprep.subr.mxu0 0.0
      %2019 = vmatpush1.msra.mxu0 0.0
      %2020 = vmatprep.subr.mxu0 0.0
      %2021 = vmatpush1.msra.mxu0 0.0
      %2022 = vmatprep.subr.mxu0 0.0
      %2023 = vmatpush1.msra.mxu0 0.0
      %2024 = vmatprep.mubr.f32.mxu0 0.0
      %2025 = vmatmul.mubr.f32.gmra.mrb[0].mxu0 %v660
      %v2026 = vpop.f32.mrb[0].mxu0
      %v2027 = vadd.f32 0.0, %v2026
      %v2028 = vpop.f32.mrb[0].mxu0
      %2029 = vmatprep.mubr.f32.mxu0 0.0
      %2030 = vmatmul.mubr.f32.gmra.mrb[0].mxu0 %v663
      %v2031 = vpop.f32.mrb[0].mxu0
      %v2032 = vadd.f32 0.0, %v2031
      %v2033 = vpop.f32.mrb[0].mxu0
      %2034 = vmatprep.mubr.f32.mxu0 0.0
      %2035 = vmatmul.mubr.f32.gmra.mrb[0].mxu0 %v666
      %v2036 = vpop.f32.mrb[0].mxu0
      %v2037 = vadd.f32 0.0, %v2036
      %v2038 = vpop.f32.mrb[0].mxu0
      %2039 = vmatprep.mubr.f32.mxu0 0.0
      %2040 = vmatmul.mubr.f32.gmra.mrb[0].mxu0 %v669
      %v2041 = vpop.f32.mrb[0].mxu0
      %v2042 = vadd.f32 0.0, %v2041
      %v2043 = vpop.f32.mrb[0].mxu0
      %2044 = vmatprep.mubr.f32.mxu0 0.0
      %2045 = vmatmul.mubr.f32.gmra.mrb[0].mxu0 %v672
      %v2046 = vpop.f32.mrb[0].mxu0
      %v2047 = vadd.f32 0.0, %v2046
      %v2048 = vpop.f32.mrb[0].mxu0
      %2049 = vmatprep.mubr.f32.mxu0 0.0
      %2050 = vmatmul.mubr.f32.gmra.mrb[0].mxu0 %v675
      %v2051 = vpop.f32.mrb[0].mxu0
      %v2052 = vadd.f32 0.0, %v2051
      %v2053 = vpop.f32.mrb[0].mxu0
      %2054 = vmatprep.mubr.f32.mxu0 0.0
      %2055 = vmatmul.mubr.f32.gmra.mrb[0].mxu0 %v678
      %v2056 = vpop.f32.mrb[0].mxu0
      %v2057 = vadd.f32 0.0, %v2056
      %v2058 = vpop.f32.mrb[0].mxu0
      %2059 = vmatprep.mubr.f32.mxu0 0.0
      %2060 = vmatmul.mubr.f32.gmra.mrb[0].mxu0 %v681
      %v2061 = vpop.f32.mrb[0].mxu0
      %v2062 = vadd.f32 0.0, %v2061
      %v2063 = vpop.f32.mrb[0].mxu0
      %2064 = vdwg.mxu0
      %v2065 = vadd.f32 %v1943, %v2027
      %v2066 = vadd.f32 %v1944, %v2032
      %v2067 = vadd.f32 %v1945, %v2037
      %v2068 = vadd.f32 %v1946, %v2042
      %v2069 = vadd.f32 %v1947, %v2047
      %v2070 = vadd.f32 %v1948, %v2052
      %v2071 = vadd.f32 %v1949, %v2057
      %v2072 = vadd.f32 %v1950, %v2062
      %s2073 = scalar_lea.vmem %s2, 704
      %v2074 = vld [vmem:[%s2073] sm:$0xff]
      %v2075 = vld [vmem:[%s2073 + $0x8] sm:$0xff]
      %v2076 = vld [vmem:[%s2073 + $0x10] sm:$0xff]
      %v2077 = vld [vmem:[%s2073 + $0x18] sm:$0xff]
      %v2078 = vld [vmem:[%s2073 + $0x20] sm:$0xff]
      %v2079 = vld [vmem:[%s2073 + $0x28] sm:$0xff]
      %v2080 = vld [vmem:[%s2073 + $0x30] sm:$0xff]
      %v2081 = vld [vmem:[%s2073 + $0x38] sm:$0xff]
      %2082 = vmatprep.subr.mxu0 0.0
      %2083 = vmatpush1.msra.mxu0 %v2074
      %2084 = vmatprep.subr.mxu0 0.0
      %2085 = vmatpush1.msra.mxu0 %v2075
      %2086 = vmatprep.subr.mxu0 0.0
      %2087 = vmatpush1.msra.mxu0 %v2076
      %2088 = vmatprep.subr.mxu0 0.0
      %2089 = vmatpush1.msra.mxu0 %v2077
      %2090 = vmatprep.subr.mxu0 0.0
      %2091 = vmatpush1.msra.mxu0 %v2078
      %2092 = vmatprep.subr.mxu0 0.0
      %2093 = vmatpush1.msra.mxu0 %v2079
      %2094 = vmatprep.subr.mxu0 0.0
      %2095 = vmatpush1.msra.mxu0 %v2080
      %2096 = vmatprep.subr.mxu0 0.0
      %2097 = vmatpush1.msra.mxu0 %v2081
      %2098 = vmatprep.subr.mxu0 0.0
      %2099 = vmatpush1.msra.mxu0 0.0
      %2100 = vmatprep.subr.mxu0 0.0
      %2101 = vmatpush1.msra.mxu0 0.0
      %2102 = vmatprep.subr.mxu0 0.0
      %2103 = vmatpush1.msra.mxu0 0.0
      %2104 = vmatprep.subr.mxu0 0.0
      %2105 = vmatpush1.msra.mxu0 0.0
      %2106 = vmatprep.subr.mxu0 0.0
      %2107 = vmatpush1.msra.mxu0 0.0
      %2108 = vmatprep.subr.mxu0 0.0
      %2109 = vmatpush1.msra.mxu0 0.0
      %2110 = vmatprep.subr.mxu0 0.0
      %2111 = vmatpush1.msra.mxu0 0.0
      %2112 = vmatprep.subr.mxu0 0.0
      %2113 = vmatpush1.msra.mxu0 0.0
      %2114 = vmatprep.subr.mxu0 0.0
      %2115 = vmatpush1.msra.mxu0 0.0
      %2116 = vmatprep.subr.mxu0 0.0
      %2117 = vmatpush1.msra.mxu0 0.0
      %2118 = vmatprep.subr.mxu0 0.0
      %2119 = vmatpush1.msra.mxu0 0.0
      %2120 = vmatprep.subr.mxu0 0.0
      %2121 = vmatpush1.msra.mxu0 0.0
      %2122 = vmatprep.subr.mxu0 0.0
      %2123 = vmatpush1.msra.mxu0 0.0
      %2124 = vmatprep.subr.mxu0 0.0
      %2125 = vmatpush1.msra.mxu0 0.0
      %2126 = vmatprep.subr.mxu0 0.0
      %2127 = vmatpush1.msra.mxu0 0.0
      %2128 = vmatprep.subr.mxu0 0.0
      %2129 = vmatpush1.msra.mxu0 0.0
      %2130 = vmatprep.subr.mxu0 0.0
      %2131 = vmatpush1.msra.mxu0 0.0
      %2132 = vmatprep.subr.mxu0 0.0
      %2133 = vmatpush1.msra.mxu0 0.0
      %2134 = vmatprep.subr.mxu0 0.0
      %2135 = vmatpush1.msra.mxu0 0.0
      %2136 = vmatprep.subr.mxu0 0.0
      %2137 = vmatpush1.msra.mxu0 0.0
      %2138 = vmatprep.subr.mxu0 0.0
      %2139 = vmatpush1.msra.mxu0 0.0
      %2140 = vmatprep.subr.mxu0 0.0
      %2141 = vmatpush1.msra.mxu0 0.0
      %2142 = vmatprep.subr.mxu0 0.0
      %2143 = vmatpush1.msra.mxu0 0.0
      %2144 = vmatprep.subr.mxu0 0.0
      %2145 = vmatpush1.msra.mxu0 0.0
      %2146 = vmatprep.mubr.f32.mxu0 0.0
      %2147 = vmatmul.mubr.f32.gmra.mrb[0].mxu0 %v806
      %v2148 = vpop.f32.mrb[0].mxu0
      %v2149 = vadd.f32 0.0, %v2148
      %v2150 = vpop.f32.mrb[0].mxu0
      %2151 = vmatprep.mubr.f32.mxu0 0.0
      %2152 = vmatmul.mubr.f32.gmra.mrb[0].mxu0 %v809
      %v2153 = vpop.f32.mrb[0].mxu0
      %v2154 = vadd.f32 0.0, %v2153
      %v2155 = vpop.f32.mrb[0].mxu0
      %2156 = vmatprep.mubr.f32.mxu0 0.0
      %2157 = vmatmul.mubr.f32.gmra.mrb[0].mxu0 %v812
      %v2158 = vpop.f32.mrb[0].mxu0
      %v2159 = vadd.f32 0.0, %v2158
      %v2160 = vpop.f32.mrb[0].mxu0
      %2161 = vmatprep.mubr.f32.mxu0 0.0
      %2162 = vmatmul.mubr.f32.gmra.mrb[0].mxu0 %v815
      %v2163 = vpop.f32.mrb[0].mxu0
      %v2164 = vadd.f32 0.0, %v2163
      %v2165 = vpop.f32.mrb[0].mxu0
      %2166 = vmatprep.mubr.f32.mxu0 0.0
      %2167 = vmatmul.mubr.f32.gmra.mrb[0].mxu0 %v818
      %v2168 = vpop.f32.mrb[0].mxu0
      %v2169 = vadd.f32 0.0, %v2168
      %v2170 = vpop.f32.mrb[0].mxu0
      %2171 = vmatprep.mubr.f32.mxu0 0.0
      %2172 = vmatmul.mubr.f32.gmra.mrb[0].mxu0 %v821
      %v2173 = vpop.f32.mrb[0].mxu0
      %v2174 = vadd.f32 0.0, %v2173
      %v2175 = vpop.f32.mrb[0].mxu0
      %2176 = vmatprep.mubr.f32.mxu0 0.0
      %2177 = vmatmul.mubr.f32.gmra.mrb[0].mxu0 %v824
      %v2178 = vpop.f32.mrb[0].mxu0
      %v2179 = vadd.f32 0.0, %v2178
      %v2180 = vpop.f32.mrb[0].mxu0
      %2181 = vmatprep.mubr.f32.mxu0 0.0
      %2182 = vmatmul.mubr.f32.gmra.mrb[0].mxu0 %v827
      %v2183 = vpop.f32.mrb[0].mxu0
      %v2184 = vadd.f32 0.0, %v2183
      %v2185 = vpop.f32.mrb[0].mxu0
      %2186 = vdwg.mxu0
      %v2187 = vadd.f32 %v2065, %v2149
      %v2188 = vadd.f32 %v2066, %v2154
      %v2189 = vadd.f32 %v2067, %v2159
      %v2190 = vadd.f32 %v2068, %v2164
      %v2191 = vadd.f32 %v2069, %v2169
      %v2192 = vadd.f32 %v2070, %v2174
      %v2193 = vadd.f32 %v2071, %v2179
      %v2194 = vadd.f32 %v2072, %v2184
      %s2195 = scalar_lea.vmem %s197, 128
      %2196 = vst.msk [vmem:[%s2195] sm:$0xff] %vm366, %v2187
      %2197 = vst.msk [vmem:[%s2195 + $0x8] sm:$0xff] %vm366, %v2188
      %2198 = vst.msk [vmem:[%s2195 + $0x10] sm:$0xff] %vm366, %v2189
      %2199 = vst.msk [vmem:[%s2195 + $0x18] sm:$0xff] %vm366, %v2190
      %2200 = vst.msk [vmem:[%s2195 + $0x20] sm:$0xff] %vm366, %v2191
      %2201 = vst.msk [vmem:[%s2195 + $0x28] sm:$0xff] %vm366, %v2192
      %2202 = vst.msk [vmem:[%s2195 + $0x30] sm:$0xff] %vm366, %v2193
      %2203 = vst.msk [vmem:[%s2195 + $0x38] sm:$0xff] %vm366, %v2194
      %s2204 = scalar_lea.vmem %s1, 384
      %v2205 = vld [vmem:[%s2204] sm:$0xff]
      %v2206 = vld [vmem:[%s2204 + $0x8] sm:$0xff]
      %v2207 = vld [vmem:[%s2204 + $0x10] sm:$0xff]
      %v2208 = vld [vmem:[%s2204 + $0x18] sm:$0xff]
      %v2209 = vld [vmem:[%s2204 + $0x20] sm:$0xff]
      %v2210 = vld [vmem:[%s2204 + $0x28] sm:$0xff]
      %v2211 = vld [vmem:[%s2204 + $0x30] sm:$0xff]
      %v2212 = vld [vmem:[%s2204 + $0x38] sm:$0xff]
      %v2213 = vld [vmem:[%s2204 + $0x40] sm:$0xff]
      %v2214 = vld [vmem:[%s2204 + $0x48] sm:$0xff]
      %v2215 = vld [vmem:[%s2204 + $0x50] sm:$0xff]
      %v2216 = vld [vmem:[%s2204 + $0x58] sm:$0xff]
      %v2217 = vld [vmem:[%s2204 + $0x60] sm:$0xff]
      %v2218 = vld [vmem:[%s2204 + $0x68] sm:$0xff]
      %v2219 = vld [vmem:[%s2204 + $0x70] sm:$0xff]
      %v2220 = vld [vmem:[%s2204 + $0x78] sm:$0xff]
      %s2221 = scalar_lea.vmem %s3, 3
      %v2222 = vld [vmem:[%s2221] sm:$0x1]
      %v2224 = vlaneseq
      %v2225 = vshrl.u32 %v2224, 7
      %v2226 = vsub.s32 0, %v2225
      %v2227 = vrot.slane %v2222, %v2226
      %2229 = vmatprep.subr.mxu0 0.0
      %2230 = vmatpush1.msra.mxu0 %v198
      %2231 = vmatprep.subr.mxu0 0.0
      %2232 = vmatpush1.msra.mxu0 %v199
      %2233 = vmatprep.subr.mxu0 0.0
      %2234 = vmatpush1.msra.mxu0 %v200
      %2235 = vmatprep.subr.mxu0 0.0
      %2236 = vmatpush1.msra.mxu0 %v201
      %2237 = vmatprep.subr.mxu0 0.0
      %2238 = vmatpush1.msra.mxu0 %v202
      %2239 = vmatprep.subr.mxu0 0.0
      %2240 = vmatpush1.msra.mxu0 %v203
      %2241 = vmatprep.subr.mxu0 0.0
      %2242 = vmatpush1.msra.mxu0 %v204
      %2243 = vmatprep.subr.mxu0 0.0
      %2244 = vmatpush1.msra.mxu0 %v205
      %2245 = vmatprep.subr.mxu0 0.0
      %2246 = vmatpush1.msra.mxu0 %v206
      %2247 = vmatprep.subr.mxu0 0.0
      %2248 = vmatpush1.msra.mxu0 %v207
      %2249 = vmatprep.subr.mxu0 0.0
      %2250 = vmatpush1.msra.mxu0 %v208
      %2251 = vmatprep.subr.mxu0 0.0
      %2252 = vmatpush1.msra.mxu0 %v209
      %2253 = vmatprep.subr.mxu0 0.0
      %2254 = vmatpush1.msra.mxu0 %v210
      %2255 = vmatprep.subr.mxu0 0.0
      %2256 = vmatpush1.msra.mxu0 %v211
      %2257 = vmatprep.subr.mxu0 0.0
      %2258 = vmatpush1.msra.mxu0 %v212
      %2259 = vmatprep.subr.mxu0 0.0
      %2260 = vmatpush1.msra.mxu0 %v213
      %2261 = vmatprep.subr.mxu0 0.0
      %2262 = vmatpush1.msra.mxu0 %v214
      %2263 = vmatprep.subr.mxu0 0.0
      %2264 = vmatpush1.msra.mxu0 %v215
      %2265 = vmatprep.subr.mxu0 0.0
      %2266 = vmatpush1.msra.mxu0 %v216
      %2267 = vmatprep.subr.mxu0 0.0
      %2268 = vmatpush1.msra.mxu0 %v217
      %2269 = vmatprep.subr.mxu0 0.0
      %2270 = vmatpush1.msra.mxu0 %v218
      %2271 = vmatprep.subr.mxu0 0.0
      %2272 = vmatpush1.msra.mxu0 %v219
      %2273 = vmatprep.subr.mxu0 0.0
      %2274 = vmatpush1.msra.mxu0 %v220
      %2275 = vmatprep.subr.mxu0 0.0
      %2276 = vmatpush1.msra.mxu0 %v221
      %2277 = vmatprep.subr.mxu0 0.0
      %2278 = vmatpush1.msra.mxu0 %v222
      %2279 = vmatprep.subr.mxu0 0.0
      %2280 = vmatpush1.msra.mxu0 %v223
      %2281 = vmatprep.subr.mxu0 0.0
      %2282 = vmatpush1.msra.mxu0 %v224
      %2283 = vmatprep.subr.mxu0 0.0
      %2284 = vmatpush1.msra.mxu0 %v225
      %2285 = vmatprep.subr.mxu0 0.0
      %2286 = vmatpush1.msra.mxu0 %v226
      %2287 = vmatprep.subr.mxu0 0.0
      %2288 = vmatpush1.msra.mxu0 %v227
      %2289 = vmatprep.subr.mxu0 0.0
      %2290 = vmatpush1.msra.mxu0 %v228
      %2291 = vmatprep.subr.mxu0 0.0
      %2292 = vmatpush1.msra.mxu0 %v229
      %2293 = vmatprep.mubr.f32.mxu0 %v2206
      %2294 = vmatmul.mubr.f32.gmra.mrb[0].mxu0 %v2205
      %v2295 = vpop.f32.mrb[0].mxu0
      %v2296 = vadd.f32 %v2227, %v2295
      %v2297 = vpop.f32.mrb[0].mxu0
      %2298 = vmatprep.mubr.f32.mxu0 %v2208
      %2299 = vmatmul.mubr.f32.gmra.mrb[0].mxu0 %v2207
      %v2300 = vpop.f32.mrb[0].mxu0
      %v2301 = vadd.f32 %v2227, %v2300
      %v2302 = vpop.f32.mrb[0].mxu0
      %2303 = vmatprep.mubr.f32.mxu0 %v2210
      %2304 = vmatmul.mubr.f32.gmra.mrb[0].mxu0 %v2209
      %v2305 = vpop.f32.mrb[0].mxu0
      %v2306 = vadd.f32 %v2227, %v2305
      %v2307 = vpop.f32.mrb[0].mxu0
      %2308 = vmatprep.mubr.f32.mxu0 %v2212
      %2309 = vmatmul.mubr.f32.gmra.mrb[0].mxu0 %v2211
      %v2310 = vpop.f32.mrb[0].mxu0
      %v2311 = vadd.f32 %v2227, %v2310
      %v2312 = vpop.f32.mrb[0].mxu0
      %2313 = vmatprep.mubr.f32.mxu0 %v2214
      %2314 = vmatmul.mubr.f32.gmra.mrb[0].mxu0 %v2213
      %v2315 = vpop.f32.mrb[0].mxu0
      %v2316 = vadd.f32 %v2227, %v2315
      %v2317 = vpop.f32.mrb[0].mxu0
      %2318 = vmatprep.mubr.f32.mxu0 %v2216
      %2319 = vmatmul.mubr.f32.gmra.mrb[0].mxu0 %v2215
      %v2320 = vpop.f32.mrb[0].mxu0
      %v2321 = vadd.f32 %v2227, %v2320
      %v2322 = vpop.f32.mrb[0].mxu0
      %2323 = vmatprep.mubr.f32.mxu0 %v2218
      %2324 = vmatmul.mubr.f32.gmra.mrb[0].mxu0 %v2217
      %v2325 = vpop.f32.mrb[0].mxu0
      %v2326 = vadd.f32 %v2227, %v2325
      %v2327 = vpop.f32.mrb[0].mxu0
      %2328 = vmatprep.mubr.f32.mxu0 %v2220
      %2329 = vmatmul.mubr.f32.gmra.mrb[0].mxu0 %v2219
      %v2330 = vpop.f32.mrb[0].mxu0
      %v2331 = vadd.f32 %v2227, %v2330
      %v2332 = vpop.f32.mrb[0].mxu0
      %2333 = vdwg.mxu0
      %s2334 = scalar_lea.vmem %s2, 768
      %v2335 = vld [vmem:[%s2334] sm:$0xff]
      %v2336 = vld [vmem:[%s2334 + $0x8] sm:$0xff]
      %v2337 = vld [vmem:[%s2334 + $0x10] sm:$0xff]
      %v2338 = vld [vmem:[%s2334 + $0x18] sm:$0xff]
      %v2339 = vld [vmem:[%s2334 + $0x20] sm:$0xff]
      %v2340 = vld [vmem:[%s2334 + $0x28] sm:$0xff]
      %v2341 = vld [vmem:[%s2334 + $0x30] sm:$0xff]
      %v2342 = vld [vmem:[%s2334 + $0x38] sm:$0xff]
      %2343 = vmatprep.subr.mxu0 0.0
      %2344 = vmatpush1.msra.mxu0 %v2335
      %2345 = vmatprep.subr.mxu0 0.0
      %2346 = vmatpush1.msra.mxu0 %v2336
      %2347 = vmatprep.subr.mxu0 0.0
      %2348 = vmatpush1.msra.mxu0 %v2337
      %2349 = vmatprep.subr.mxu0 0.0
      %2350 = vmatpush1.msra.mxu0 %v2338
      %2351 = vmatprep.subr.mxu0 0.0
      %2352 = vmatpush1.msra.mxu0 %v2339
      %2353 = vmatprep.subr.mxu0 0.0
      %2354 = vmatpush1.msra.mxu0 %v2340
      %2355 = vmatprep.subr.mxu0 0.0
      %2356 = vmatpush1.msra.mxu0 %v2341
      %2357 = vmatprep.subr.mxu0 0.0
      %2358 = vmatpush1.msra.mxu0 %v2342
      %2359 = vmatprep.subr.mxu0 0.0
      %2360 = vmatpush1.msra.mxu0 0.0
      %2361 = vmatprep.subr.mxu0 0.0
      %2362 = vmatpush1.msra.mxu0 0.0
      %2363 = vmatprep.subr.mxu0 0.0
      %2364 = vmatpush1.msra.mxu0 0.0
      %2365 = vmatprep.subr.mxu0 0.0
      %2366 = vmatpush1.msra.mxu0 0.0
      %2367 = vmatprep.subr.mxu0 0.0
      %2368 = vmatpush1.msra.mxu0 0.0
      %2369 = vmatprep.subr.mxu0 0.0
      %2370 = vmatpush1.msra.mxu0 0.0
      %2371 = vmatprep.subr.mxu0 0.0
      %2372 = vmatpush1.msra.mxu0 0.0
      %2373 = vmatprep.subr.mxu0 0.0
      %2374 = vmatpush1.msra.mxu0 0.0
      %2375 = vmatprep.subr.mxu0 0.0
      %2376 = vmatpush1.msra.mxu0 0.0
      %2377 = vmatprep.subr.mxu0 0.0
      %2378 = vmatpush1.msra.mxu0 0.0
      %2379 = vmatprep.subr.mxu0 0.0
      %2380 = vmatpush1.msra.mxu0 0.0
      %2381 = vmatprep.subr.mxu0 0.0
      %2382 = vmatpush1.msra.mxu0 0.0
      %2383 = vmatprep.subr.mxu0 0.0
      %2384 = vmatpush1.msra.mxu0 0.0
      %2385 = vmatprep.subr.mxu0 0.0
      %2386 = vmatpush1.msra.mxu0 0.0
      %2387 = vmatprep.subr.mxu0 0.0
      %2388 = vmatpush1.msra.mxu0 0.0
      %2389 = vmatprep.subr.mxu0 0.0
      %2390 = vmatpush1.msra.mxu0 0.0
      %2391 = vmatprep.subr.mxu0 0.0
      %2392 = vmatpush1.msra.mxu0 0.0
      %2393 = vmatprep.subr.mxu0 0.0
      %2394 = vmatpush1.msra.mxu0 0.0
      %2395 = vmatprep.subr.mxu0 0.0
      %2396 = vmatpush1.msra.mxu0 0.0
      %2397 = vmatprep.subr.mxu0 0.0
      %2398 = vmatpush1.msra.mxu0 0.0
      %2399 = vmatprep.subr.mxu0 0.0
      %2400 = vmatpush1.msra.mxu0 0.0
      %2401 = vmatprep.subr.mxu0 0.0
      %2402 = vmatpush1.msra.mxu0 0.0
      %2403 = vmatprep.subr.mxu0 0.0
      %2404 = vmatpush1.msra.mxu0 0.0
      %2405 = vmatprep.subr.mxu0 0.0
      %2406 = vmatpush1.msra.mxu0 0.0
      %2407 = vmatprep.mubr.f32.mxu0 0.0
      %2408 = vmatmul.mubr.f32.gmra.mrb[0].mxu0 %v368
      %v2409 = vpop.f32.mrb[0].mxu0
      %v2410 = vadd.f32 0.0, %v2409
      %v2411 = vpop.f32.mrb[0].mxu0
      %2412 = vmatprep.mubr.f32.mxu0 0.0
      %2413 = vmatmul.mubr.f32.gmra.mrb[0].mxu0 %v371
      %v2414 = vpop.f32.mrb[0].mxu0
      %v2415 = vadd.f32 0.0, %v2414
      %v2416 = vpop.f32.mrb[0].mxu0
      %2417 = vmatprep.mubr.f32.mxu0 0.0
      %2418 = vmatmul.mubr.f32.gmra.mrb[0].mxu0 %v374
      %v2419 = vpop.f32.mrb[0].mxu0
      %v2420 = vadd.f32 0.0, %v2419
      %v2421 = vpop.f32.mrb[0].mxu0
      %2422 = vmatprep.mubr.f32.mxu0 0.0
      %2423 = vmatmul.mubr.f32.gmra.mrb[0].mxu0 %v377
      %v2424 = vpop.f32.mrb[0].mxu0
      %v2425 = vadd.f32 0.0, %v2424
      %v2426 = vpop.f32.mrb[0].mxu0
      %2427 = vmatprep.mubr.f32.mxu0 0.0
      %2428 = vmatmul.mubr.f32.gmra.mrb[0].mxu0 %v380
      %v2429 = vpop.f32.mrb[0].mxu0
      %v2430 = vadd.f32 0.0, %v2429
      %v2431 = vpop.f32.mrb[0].mxu0
      %2432 = vmatprep.mubr.f32.mxu0 0.0
      %2433 = vmatmul.mubr.f32.gmra.mrb[0].mxu0 %v383
      %v2434 = vpop.f32.mrb[0].mxu0
      %v2435 = vadd.f32 0.0, %v2434
      %v2436 = vpop.f32.mrb[0].mxu0
      %2437 = vmatprep.mubr.f32.mxu0 0.0
      %2438 = vmatmul.mubr.f32.gmra.mrb[0].mxu0 %v386
      %v2439 = vpop.f32.mrb[0].mxu0
      %v2440 = vadd.f32 0.0, %v2439
      %v2441 = vpop.f32.mrb[0].mxu0
      %2442 = vmatprep.mubr.f32.mxu0 0.0
      %2443 = vmatmul.mubr.f32.gmra.mrb[0].mxu0 %v389
      %v2444 = vpop.f32.mrb[0].mxu0
      %v2445 = vadd.f32 0.0, %v2444
      %v2446 = vpop.f32.mrb[0].mxu0
      %2447 = vdwg.mxu0
      %v2448 = vadd.f32 %v2296, %v2410
      %v2449 = vadd.f32 %v2301, %v2415
      %v2450 = vadd.f32 %v2306, %v2420
      %v2451 = vadd.f32 %v2311, %v2425
      %v2452 = vadd.f32 %v2316, %v2430
      %v2453 = vadd.f32 %v2321, %v2435
      %v2454 = vadd.f32 %v2326, %v2440
      %v2455 = vadd.f32 %v2331, %v2445
      %s2456 = scalar_lea.vmem %s2, 832
      %v2457 = vld [vmem:[%s2456] sm:$0xff]
      %v2458 = vld [vmem:[%s2456 + $0x8] sm:$0xff]
      %v2459 = vld [vmem:[%s2456 + $0x10] sm:$0xff]
      %v2460 = vld [vmem:[%s2456 + $0x18] sm:$0xff]
      %v2461 = vld [vmem:[%s2456 + $0x20] sm:$0xff]
      %v2462 = vld [vmem:[%s2456 + $0x28] sm:$0xff]
      %v2463 = vld [vmem:[%s2456 + $0x30] sm:$0xff]
      %v2464 = vld [vmem:[%s2456 + $0x38] sm:$0xff]
      %2465 = vmatprep.subr.mxu0 0.0
      %2466 = vmatpush1.msra.mxu0 %v2457
      %2467 = vmatprep.subr.mxu0 0.0
      %2468 = vmatpush1.msra.mxu0 %v2458
      %2469 = vmatprep.subr.mxu0 0.0
      %2470 = vmatpush1.msra.mxu0 %v2459
      %2471 = vmatprep.subr.mxu0 0.0
      %2472 = vmatpush1.msra.mxu0 %v2460
      %2473 = vmatprep.subr.mxu0 0.0
      %2474 = vmatpush1.msra.mxu0 %v2461
      %2475 = vmatprep.subr.mxu0 0.0
      %2476 = vmatpush1.msra.mxu0 %v2462
      %2477 = vmatprep.subr.mxu0 0.0
      %2478 = vmatpush1.msra.mxu0 %v2463
      %2479 = vmatprep.subr.mxu0 0.0
      %2480 = vmatpush1.msra.mxu0 %v2464
      %2481 = vmatprep.subr.mxu0 0.0
      %2482 = vmatpush1.msra.mxu0 0.0
      %2483 = vmatprep.subr.mxu0 0.0
      %2484 = vmatpush1.msra.mxu0 0.0
      %2485 = vmatprep.subr.mxu0 0.0
      %2486 = vmatpush1.msra.mxu0 0.0
      %2487 = vmatprep.subr.mxu0 0.0
      %2488 = vmatpush1.msra.mxu0 0.0
      %2489 = vmatprep.subr.mxu0 0.0
      %2490 = vmatpush1.msra.mxu0 0.0
      %2491 = vmatprep.subr.mxu0 0.0
      %2492 = vmatpush1.msra.mxu0 0.0
      %2493 = vmatprep.subr.mxu0 0.0
      %2494 = vmatpush1.msra.mxu0 0.0
      %2495 = vmatprep.subr.mxu0 0.0
      %2496 = vmatpush1.msra.mxu0 0.0
      %2497 = vmatprep.subr.mxu0 0.0
      %2498 = vmatpush1.msra.mxu0 0.0
      %2499 = vmatprep.subr.mxu0 0.0
      %2500 = vmatpush1.msra.mxu0 0.0
      %2501 = vmatprep.subr.mxu0 0.0
      %2502 = vmatpush1.msra.mxu0 0.0
      %2503 = vmatprep.subr.mxu0 0.0
      %2504 = vmatpush1.msra.mxu0 0.0
      %2505 = vmatprep.subr.mxu0 0.0
      %2506 = vmatpush1.msra.mxu0 0.0
      %2507 = vmatprep.subr.mxu0 0.0
      %2508 = vmatpush1.msra.mxu0 0.0
      %2509 = vmatprep.subr.mxu0 0.0
      %2510 = vmatpush1.msra.mxu0 0.0
      %2511 = vmatprep.subr.mxu0 0.0
      %2512 = vmatpush1.msra.mxu0 0.0
      %2513 = vmatprep.subr.mxu0 0.0
      %2514 = vmatpush1.msra.mxu0 0.0
      %2515 = vmatprep.subr.mxu0 0.0
      %2516 = vmatpush1.msra.mxu0 0.0
      %2517 = vmatprep.subr.mxu0 0.0
      %2518 = vmatpush1.msra.mxu0 0.0
      %2519 = vmatprep.subr.mxu0 0.0
      %2520 = vmatpush1.msra.mxu0 0.0
      %2521 = vmatprep.subr.mxu0 0.0
      %2522 = vmatpush1.msra.mxu0 0.0
      %2523 = vmatprep.subr.mxu0 0.0
      %2524 = vmatpush1.msra.mxu0 0.0
      %2525 = vmatprep.subr.mxu0 0.0
      %2526 = vmatpush1.msra.mxu0 0.0
      %2527 = vmatprep.subr.mxu0 0.0
      %2528 = vmatpush1.msra.mxu0 0.0
      %2529 = vmatprep.mubr.f32.mxu0 0.0
      %2530 = vmatmul.mubr.f32.gmra.mrb[0].mxu0 %v514
      %v2531 = vpop.f32.mrb[0].mxu0
      %v2532 = vadd.f32 0.0, %v2531
      %v2533 = vpop.f32.mrb[0].mxu0
      %2534 = vmatprep.mubr.f32.mxu0 0.0
      %2535 = vmatmul.mubr.f32.gmra.mrb[0].mxu0 %v517
      %v2536 = vpop.f32.mrb[0].mxu0
      %v2537 = vadd.f32 0.0, %v2536
      %v2538 = vpop.f32.mrb[0].mxu0
      %2539 = vmatprep.mubr.f32.mxu0 0.0
      %2540 = vmatmul.mubr.f32.gmra.mrb[0].mxu0 %v520
      %v2541 = vpop.f32.mrb[0].mxu0
      %v2542 = vadd.f32 0.0, %v2541
      %v2543 = vpop.f32.mrb[0].mxu0
      %2544 = vmatprep.mubr.f32.mxu0 0.0
      %2545 = vmatmul.mubr.f32.gmra.mrb[0].mxu0 %v523
      %v2546 = vpop.f32.mrb[0].mxu0
      %v2547 = vadd.f32 0.0, %v2546
      %v2548 = vpop.f32.mrb[0].mxu0
      %2549 = vmatprep.mubr.f32.mxu0 0.0
      %2550 = vmatmul.mubr.f32.gmra.mrb[0].mxu0 %v526
      %v2551 = vpop.f32.mrb[0].mxu0
      %v2552 = vadd.f32 0.0, %v2551
      %v2553 = vpop.f32.mrb[0].mxu0
      %2554 = vmatprep.mubr.f32.mxu0 0.0
      %2555 = vmatmul.mubr.f32.gmra.mrb[0].mxu0 %v529
      %v2556 = vpop.f32.mrb[0].mxu0
      %v2557 = vadd.f32 0.0, %v2556
      %v2558 = vpop.f32.mrb[0].mxu0
      %2559 = vmatprep.mubr.f32.mxu0 0.0
      %2560 = vmatmul.mubr.f32.gmra.mrb[0].mxu0 %v532
      %v2561 = vpop.f32.mrb[0].mxu0
      %v2562 = vadd.f32 0.0, %v2561
      %v2563 = vpop.f32.mrb[0].mxu0
      %2564 = vmatprep.mubr.f32.mxu0 0.0
      %2565 = vmatmul.mubr.f32.gmra.mrb[0].mxu0 %v535
      %v2566 = vpop.f32.mrb[0].mxu0
      %v2567 = vadd.f32 0.0, %v2566
      %v2568 = vpop.f32.mrb[0].mxu0
      %2569 = vdwg.mxu0
      %v2570 = vadd.f32 %v2448, %v2532
      %v2571 = vadd.f32 %v2449, %v2537
      %v2572 = vadd.f32 %v2450, %v2542
      %v2573 = vadd.f32 %v2451, %v2547
      %v2574 = vadd.f32 %v2452, %v2552
      %v2575 = vadd.f32 %v2453, %v2557
      %v2576 = vadd.f32 %v2454, %v2562
      %v2577 = vadd.f32 %v2455, %v2567
      %s2578 = scalar_lea.vmem %s2, 896
      %v2579 = vld [vmem:[%s2578] sm:$0xff]
      %v2580 = vld [vmem:[%s2578 + $0x8] sm:$0xff]
      %v2581 = vld [vmem:[%s2578 + $0x10] sm:$0xff]
      %v2582 = vld [vmem:[%s2578 + $0x18] sm:$0xff]
      %v2583 = vld [vmem:[%s2578 + $0x20] sm:$0xff]
      %v2584 = vld [vmem:[%s2578 + $0x28] sm:$0xff]
      %v2585 = vld [vmem:[%s2578 + $0x30] sm:$0xff]
      %v2586 = vld [vmem:[%s2578 + $0x38] sm:$0xff]
      %2587 = vmatprep.subr.mxu0 0.0
      %2588 = vmatpush1.msra.mxu0 %v2579
      %2589 = vmatprep.subr.mxu0 0.0
      %2590 = vmatpush1.msra.mxu0 %v2580
      %2591 = vmatprep.subr.mxu0 0.0
      %2592 = vmatpush1.msra.mxu0 %v2581
      %2593 = vmatprep.subr.mxu0 0.0
      %2594 = vmatpush1.msra.mxu0 %v2582
      %2595 = vmatprep.subr.mxu0 0.0
      %2596 = vmatpush1.msra.mxu0 %v2583
      %2597 = vmatprep.subr.mxu0 0.0
      %2598 = vmatpush1.msra.mxu0 %v2584
      %2599 = vmatprep.subr.mxu0 0.0
      %2600 = vmatpush1.msra.mxu0 %v2585
      %2601 = vmatprep.subr.mxu0 0.0
      %2602 = vmatpush1.msra.mxu0 %v2586
      %2603 = vmatprep.subr.mxu0 0.0
      %2604 = vmatpush1.msra.mxu0 0.0
      %2605 = vmatprep.subr.mxu0 0.0
      %2606 = vmatpush1.msra.mxu0 0.0
      %2607 = vmatprep.subr.mxu0 0.0
      %2608 = vmatpush1.msra.mxu0 0.0
      %2609 = vmatprep.subr.mxu0 0.0
      %2610 = vmatpush1.msra.mxu0 0.0
      %2611 = vmatprep.subr.mxu0 0.0
      %2612 = vmatpush1.msra.mxu0 0.0
      %2613 = vmatprep.subr.mxu0 0.0
      %2614 = vmatpush1.msra.mxu0 0.0
      %2615 = vmatprep.subr.mxu0 0.0
      %2616 = vmatpush1.msra.mxu0 0.0
      %2617 = vmatprep.subr.mxu0 0.0
      %2618 = vmatpush1.msra.mxu0 0.0
      %2619 = vmatprep.subr.mxu0 0.0
      %2620 = vmatpush1.msra.mxu0 0.0
      %2621 = vmatprep.subr.mxu0 0.0
      %2622 = vmatpush1.msra.mxu0 0.0
      %2623 = vmatprep.subr.mxu0 0.0
      %2624 = vmatpush1.msra.mxu0 0.0
      %2625 = vmatprep.subr.mxu0 0.0
      %2626 = vmatpush1.msra.mxu0 0.0
      %2627 = vmatprep.subr.mxu0 0.0
      %2628 = vmatpush1.msra.mxu0 0.0
      %2629 = vmatprep.subr.mxu0 0.0
      %2630 = vmatpush1.msra.mxu0 0.0
      %2631 = vmatprep.subr.mxu0 0.0
      %2632 = vmatpush1.msra.mxu0 0.0
      %2633 = vmatprep.subr.mxu0 0.0
      %2634 = vmatpush1.msra.mxu0 0.0
      %2635 = vmatprep.subr.mxu0 0.0
      %2636 = vmatpush1.msra.mxu0 0.0
      %2637 = vmatprep.subr.mxu0 0.0
      %2638 = vmatpush1.msra.mxu0 0.0
      %2639 = vmatprep.subr.mxu0 0.0
      %2640 = vmatpush1.msra.mxu0 0.0
      %2641 = vmatprep.subr.mxu0 0.0
      %2642 = vmatpush1.msra.mxu0 0.0
      %2643 = vmatprep.subr.mxu0 0.0
      %2644 = vmatpush1.msra.mxu0 0.0
      %2645 = vmatprep.subr.mxu0 0.0
      %2646 = vmatpush1.msra.mxu0 0.0
      %2647 = vmatprep.subr.mxu0 0.0
      %2648 = vmatpush1.msra.mxu0 0.0
      %2649 = vmatprep.subr.mxu0 0.0
      %2650 = vmatpush1.msra.mxu0 0.0
      %2651 = vmatprep.mubr.f32.mxu0 0.0
      %2652 = vmatmul.mubr.f32.gmra.mrb[0].mxu0 %v660
      %v2653 = vpop.f32.mrb[0].mxu0
      %v2654 = vadd.f32 0.0, %v2653
      %v2655 = vpop.f32.mrb[0].mxu0
      %2656 = vmatprep.mubr.f32.mxu0 0.0
      %2657 = vmatmul.mubr.f32.gmra.mrb[0].mxu0 %v663
      %v2658 = vpop.f32.mrb[0].mxu0
      %v2659 = vadd.f32 0.0, %v2658
      %v2660 = vpop.f32.mrb[0].mxu0
      %2661 = vmatprep.mubr.f32.mxu0 0.0
      %2662 = vmatmul.mubr.f32.gmra.mrb[0].mxu0 %v666
      %v2663 = vpop.f32.mrb[0].mxu0
      %v2664 = vadd.f32 0.0, %v2663
      %v2665 = vpop.f32.mrb[0].mxu0
      %2666 = vmatprep.mubr.f32.mxu0 0.0
      %2667 = vmatmul.mubr.f32.gmra.mrb[0].mxu0 %v669
      %v2668 = vpop.f32.mrb[0].mxu0
      %v2669 = vadd.f32 0.0, %v2668
      %v2670 = vpop.f32.mrb[0].mxu0
      %2671 = vmatprep.mubr.f32.mxu0 0.0
      %2672 = vmatmul.mubr.f32.gmra.mrb[0].mxu0 %v672
      %v2673 = vpop.f32.mrb[0].mxu0
      %v2674 = vadd.f32 0.0, %v2673
      %v2675 = vpop.f32.mrb[0].mxu0
      %2676 = vmatprep.mubr.f32.mxu0 0.0
      %2677 = vmatmul.mubr.f32.gmra.mrb[0].mxu0 %v675
      %v2678 = vpop.f32.mrb[0].mxu0
      %v2679 = vadd.f32 0.0, %v2678
      %v2680 = vpop.f32.mrb[0].mxu0
      %2681 = vmatprep.mubr.f32.mxu0 0.0
      %2682 = vmatmul.mubr.f32.gmra.mrb[0].mxu0 %v678
      %v2683 = vpop.f32.mrb[0].mxu0
      %v2684 = vadd.f32 0.0, %v2683
      %v2685 = vpop.f32.mrb[0].mxu0
      %2686 = vmatprep.mubr.f32.mxu0 0.0
      %2687 = vmatmul.mubr.f32.gmra.mrb[0].mxu0 %v681
      %v2688 = vpop.f32.mrb[0].mxu0
      %v2689 = vadd.f32 0.0, %v2688
      %v2690 = vpop.f32.mrb[0].mxu0
      %2691 = vdwg.mxu0
      %v2692 = vadd.f32 %v2570, %v2654
      %v2693 = vadd.f32 %v2571, %v2659
      %v2694 = vadd.f32 %v2572, %v2664
      %v2695 = vadd.f32 %v2573, %v2669
      %v2696 = vadd.f32 %v2574, %v2674
      %v2697 = vadd.f32 %v2575, %v2679
      %v2698 = vadd.f32 %v2576, %v2684
      %v2699 = vadd.f32 %v2577, %v2689
      %s2700 = scalar_lea.vmem %s2, 960
      %v2701 = vld [vmem:[%s2700] sm:$0xff]
      %v2702 = vld [vmem:[%s2700 + $0x8] sm:$0xff]
      %v2703 = vld [vmem:[%s2700 + $0x10] sm:$0xff]
      %v2704 = vld [vmem:[%s2700 + $0x18] sm:$0xff]
      %v2705 = vld [vmem:[%s2700 + $0x20] sm:$0xff]
      %v2706 = vld [vmem:[%s2700 + $0x28] sm:$0xff]
      %v2707 = vld [vmem:[%s2700 + $0x30] sm:$0xff]
      %v2708 = vld [vmem:[%s2700 + $0x38] sm:$0xff]
      %2709 = vmatprep.subr.mxu0 0.0
      %2710 = vmatpush1.msra.mxu0 %v2701
      %2711 = vmatprep.subr.mxu0 0.0
      %2712 = vmatpush1.msra.mxu0 %v2702
      %2713 = vmatprep.subr.mxu0 0.0
      %2714 = vmatpush1.msra.mxu0 %v2703
      %2715 = vmatprep.subr.mxu0 0.0
      %2716 = vmatpush1.msra.mxu0 %v2704
      %2717 = vmatprep.subr.mxu0 0.0
      %2718 = vmatpush1.msra.mxu0 %v2705
      %2719 = vmatprep.subr.mxu0 0.0
      %2720 = vmatpush1.msra.mxu0 %v2706
      %2721 = vmatprep.subr.mxu0 0.0
      %2722 = vmatpush1.msra.mxu0 %v2707
      %2723 = vmatprep.subr.mxu0 0.0
      %2724 = vmatpush1.msra.mxu0 %v2708
      %2725 = vmatprep.subr.mxu0 0.0
      %2726 = vmatpush1.msra.mxu0 0.0
      %2727 = vmatprep.subr.mxu0 0.0
      %2728 = vmatpush1.msra.mxu0 0.0
      %2729 = vmatprep.subr.mxu0 0.0
      %2730 = vmatpush1.msra.mxu0 0.0
      %2731 = vmatprep.subr.mxu0 0.0
      %2732 = vmatpush1.msra.mxu0 0.0
      %2733 = vmatprep.subr.mxu0 0.0
      %2734 = vmatpush1.msra.mxu0 0.0
      %2735 = vmatprep.subr.mxu0 0.0
      %2736 = vmatpush1.msra.mxu0 0.0
      %2737 = vmatprep.subr.mxu0 0.0
      %2738 = vmatpush1.msra.mxu0 0.0
      %2739 = vmatprep.subr.mxu0 0.0
      %2740 = vmatpush1.msra.mxu0 0.0
      %2741 = vmatprep.subr.mxu0 0.0
      %2742 = vmatpush1.msra.mxu0 0.0
      %2743 = vmatprep.subr.mxu0 0.0
      %2744 = vmatpush1.msra.mxu0 0.0
      %2745 = vmatprep.subr.mxu0 0.0
      %2746 = vmatpush1.msra.mxu0 0.0
      %2747 = vmatprep.subr.mxu0 0.0
      %2748 = vmatpush1.msra.mxu0 0.0
      %2749 = vmatprep.subr.mxu0 0.0
      %2750 = vmatpush1.msra.mxu0 0.0
      %2751 = vmatprep.subr.mxu0 0.0
      %2752 = vmatpush1.msra.mxu0 0.0
      %2753 = vmatprep.subr.mxu0 0.0
      %2754 = vmatpush1.msra.mxu0 0.0
      %2755 = vmatprep.subr.mxu0 0.0
      %2756 = vmatpush1.msra.mxu0 0.0
      %2757 = vmatprep.subr.mxu0 0.0
      %2758 = vmatpush1.msra.mxu0 0.0
      %2759 = vmatprep.subr.mxu0 0.0
      %2760 = vmatpush1.msra.mxu0 0.0
      %2761 = vmatprep.subr.mxu0 0.0
      %2762 = vmatpush1.msra.mxu0 0.0
      %2763 = vmatprep.subr.mxu0 0.0
      %2764 = vmatpush1.msra.mxu0 0.0
      %2765 = vmatprep.subr.mxu0 0.0
      %2766 = vmatpush1.msra.mxu0 0.0
      %2767 = vmatprep.subr.mxu0 0.0
      %2768 = vmatpush1.msra.mxu0 0.0
      %2769 = vmatprep.subr.mxu0 0.0
      %2770 = vmatpush1.msra.mxu0 0.0
      %2771 = vmatprep.subr.mxu0 0.0
      %2772 = vmatpush1.msra.mxu0 0.0
      %2773 = vmatprep.mubr.f32.mxu0 0.0
      %2774 = vmatmul.mubr.f32.gmra.mrb[0].mxu0 %v806
      %v2775 = vpop.f32.mrb[0].mxu0
      %v2776 = vadd.f32 0.0, %v2775
      %v2777 = vpop.f32.mrb[0].mxu0
      %2778 = vmatprep.mubr.f32.mxu0 0.0
      %2779 = vmatmul.mubr.f32.gmra.mrb[0].mxu0 %v809
      %v2780 = vpop.f32.mrb[0].mxu0
      %v2781 = vadd.f32 0.0, %v2780
      %v2782 = vpop.f32.mrb[0].mxu0
      %2783 = vmatprep.mubr.f32.mxu0 0.0
      %2784 = vmatmul.mubr.f32.gmra.mrb[0].mxu0 %v812
      %v2785 = vpop.f32.mrb[0].mxu0
      %v2786 = vadd.f32 0.0, %v2785
      %v2787 = vpop.f32.mrb[0].mxu0
      %2788 = vmatprep.mubr.f32.mxu0 0.0
      %2789 = vmatmul.mubr.f32.gmra.mrb[0].mxu0 %v815
      %v2790 = vpop.f32.mrb[0].mxu0
      %v2791 = vadd.f32 0.0, %v2790
      %v2792 = vpop.f32.mrb[0].mxu0
      %2793 = vmatprep.mubr.f32.mxu0 0.0
      %2794 = vmatmul.mubr.f32.gmra.mrb[0].mxu0 %v818
      %v2795 = vpop.f32.mrb[0].mxu0
      %v2796 = vadd.f32 0.0, %v2795
      %v2797 = vpop.f32.mrb[0].mxu0
      %2798 = vmatprep.mubr.f32.mxu0 0.0
      %2799 = vmatmul.mubr.f32.gmra.mrb[0].mxu0 %v821
      %v2800 = vpop.f32.mrb[0].mxu0
      %v2801 = vadd.f32 0.0, %v2800
      %v2802 = vpop.f32.mrb[0].mxu0
      %2803 = vmatprep.mubr.f32.mxu0 0.0
      %2804 = vmatmul.mubr.f32.gmra.mrb[0].mxu0 %v824
      %v2805 = vpop.f32.mrb[0].mxu0
      %v2806 = vadd.f32 0.0, %v2805
      %v2807 = vpop.f32.mrb[0].mxu0
      %2808 = vmatprep.mubr.f32.mxu0 0.0
      %2809 = vmatmul.mubr.f32.gmra.mrb[0].mxu0 %v827
      %v2810 = vpop.f32.mrb[0].mxu0
      %v2811 = vadd.f32 0.0, %v2810
      %v2812 = vpop.f32.mrb[0].mxu0
      %2813 = vdwg.mxu0
      %v2814 = vadd.f32 %v2692, %v2776
      %v2815 = vadd.f32 %v2693, %v2781
      %v2816 = vadd.f32 %v2694, %v2786
      %v2817 = vadd.f32 %v2695, %v2791
      %v2818 = vadd.f32 %v2696, %v2796
      %v2819 = vadd.f32 %v2697, %v2801
      %v2820 = vadd.f32 %v2698, %v2806
      %v2821 = vadd.f32 %v2699, %v2811
      %s2822 = scalar_lea.vmem %s197, 192
      %2823 = vst.msk [vmem:[%s2822] sm:$0xff] %vm366, %v2814
      %2824 = vst.msk [vmem:[%s2822 + $0x8] sm:$0xff] %vm366, %v2815
      %2825 = vst.msk [vmem:[%s2822 + $0x10] sm:$0xff] %vm366, %v2816
      %2826 = vst.msk [vmem:[%s2822 + $0x18] sm:$0xff] %vm366, %v2817
      %2827 = vst.msk [vmem:[%s2822 + $0x20] sm:$0xff] %vm366, %v2818
      %2828 = vst.msk [vmem:[%s2822 + $0x28] sm:$0xff] %vm366, %v2819
      %2829 = vst.msk [vmem:[%s2822 + $0x30] sm:$0xff] %vm366, %v2820
      %2830 = vst.msk [vmem:[%s2822 + $0x38] sm:$0xff] %vm366, %v2821
      %p2831 = scmp.lt.s32.totalorder %s15, 1
      %s2832 = scalar_select %p2831, %s15, 1
      %s2833 = smul.addr %s2832, 32
      %s2834 = smul.addr %s2833, 8
      %s2835 = scalar_lea.vmem %s4, %s2834
      // Predicated region
      $region37: #{center_pivot_conv4d.1} parent=35 // pred_check
        %p2836 = pneg %p122
      $region38: #{center_pivot_conv4d.1} parent=35 // pred_check_branch
        %2838 = sbr.rel (%p2836) target = $region40
      $region39: #{center_pivot_conv4d.1} parent=35 // pred_region
        _
      $region40: #{center_pivot_conv4d.1} parent=35 // pred_fallthru
        _
    $region36: #{center_pivot_conv4d.1} parent=5 // pred_fallthru
      _
    %p2839 = scmp.le.s32.totalorder 2, %s10
    // Predicated region
    $region41: #{center_pivot_conv4d.1} parent=5 // pred_check
      %p2840 = pneg %p2839
    $region42: #{center_pivot_conv4d.1} parent=5 // pred_check_branch
      %2842 = sbr.rel (%p2840) target = $region44
    $region43: #{center_pivot_conv4d.1} parent=5 // pred_region
      %s2843 = ssub.s32 %s10, 2
      // Predicated region
      $region45: #{center_pivot_conv4d.1} parent=43 // pred_check
        %p2844 = pneg %p128
      $region46: #{center_pivot_conv4d.1} parent=43 // pred_check_branch
        %2846 = sbr.rel (%p2844) target = $region48
      $region47: #{center_pivot_conv4d.1} parent=43 // pred_region
        %p2847 = scmp.lt.s32.totalorder %s16, 1
        %s2848 = scalar_select %p2847, %s16, 1
        %s2849 = smul.addr %s2848, 32
        %s2850 = smul.addr %s2849, 8
        %s2851 = scalar_lea.vmem %s4, %s2850
      $region48: #{center_pivot_conv4d.1} parent=43 // pred_fallthru
        _
    $region44: #{center_pivot_conv4d.1} parent=5 // pred_fallthru
      _
  $region6: #{center_pivot_conv4d.1} parent=0 // loop_footer
    %s14 = sadd.s32 1, %s10
  $region7: #{center_pivot_conv4d.1} parent=0 // loop_footer_branch
    %9 = sbr.rel target = $region3
  $region8: #{center_pivot_conv4d.1} parent=0 // loop_exit
    _

</llo_original>
